<compile_context>
chip_gen: v7x
topology: tpu7x:2x2x1
jax: 0.10.0
libtpu: 0.0.40
codegen_flags: <defaults>
</compile_context>

<pallas_src>
import functools
import math

import jax
import jax.numpy as jnp
from jax.experimental import pallas as pl
from jax.experimental.pallas import tpu as pltpu


def _attention_kernel(*refs, heads, scale, rows, with_scores):
    """One block of `rows` batch rows: fused QKV + ReLU + softmax attention."""
    x_ref, wq_ref, bq_ref, wk_ref, bk_ref, wv_ref, bv_ref = refs[:7]
    if with_scores:
        out_ref, scores_ref, acc_ref = refs[7:]
    else:
        out_ref, acc_ref = refs[7:]
        scores_ref = None

    _, seq, embed = x_ref.shape
    d = embed // heads

    # All rows of the block as one (R*S, E) matrix -> one MXU pass per
    # projection instead of R small ones.  Native dtype in, f32 accumulation.
    x = x_ref[...].reshape(rows * seq, embed)

    # ReLU (the module's default activation) on the VPU.  The 1/sqrt(D) score
    # scale is folded into q here (positive scale commutes with ReLU), so the
    # (S, S) score matrices are never rescaled.
    q = jnp.maximum(
        jnp.dot(x, wq_ref[...], preferred_element_type=jnp.float32)
        + bq_ref[...], 0.0) * scale
    k = jnp.maximum(
        jnp.dot(x, wk_ref[...], preferred_element_type=jnp.float32)
        + bk_ref[...], 0.0)
    v = jnp.maximum(
        jnp.dot(x, wv_ref[...], preferred_element_type=jnp.float32)
        + bv_ref[...], 0.0)

    for r in range(rows):                    # static unrolled loop over rows
        q_r = q[r * seq:(r + 1) * seq]
        k_r = k[r * seq:(r + 1) * seq]
        v_r = v[r * seq:(r + 1) * seq]

        head_probs = []
        for h in range(heads):               # static unrolled loop over heads
            q_h = q_r[:, h * d:(h + 1) * d]  # (S, D) static lane slices
            k_h = k_r[:, h * d:(h + 1) * d]
            v_h = v_r[:, h * d:(h + 1) * d]

            # q_h @ k_h^T  (contraction on the last dims, MXU; q pre-scaled).
            s = jax.lax.dot_general(
                q_h, k_h, (((1,), (1,)), ((), ())),
                preferred_element_type=jnp.float32)

            # Numerically stable softmax over the key axis: exp and the
            # approximate reciprocal both go to the EUP slot.
            s = s - jnp.max(s, axis=-1, keepdims=True)
            e = jnp.exp(s)
            p = e * pl.reciprocal(jnp.sum(e, axis=-1, keepdims=True),
                                  approx=True)

            if with_scores:
                head_probs.append(p)

            # TODO(synk): training-mode dropout on the attention probs would
            # use pltpu.prng_seed + pltpu.stateful_bernoulli; eval = identity.

            # Write this head's output straight into the f32 scratch
            # accumulator (no late concatenate, no long live ranges).
            acc_ref[r, :, h * d:(h + 1) * d] = jnp.dot(
                p, v_h, preferred_element_type=jnp.float32)

        if with_scores:
            # One stacked (H, S, S) store per row instead of H narrow stores.
            scores_ref[r] = jnp.stack(head_probs, axis=0).astype(
                scores_ref.dtype)

    # Single full-width, lane-dense store of the merged heads.
    out_ref[...] = acc_ref[...].astype(out_ref.dtype)


def attention(x, wq, bq, wk, bk, wv, bv, *, heads, rows_per_step=None,
              return_scores=True, scores_dtype=None):
    """x: (B, S, E); w*: (E, E) (in, out layout); b*: (E,).

    Returns (out (B, S, E), scores (B*H, S, S)) when return_scores=True,
    otherwise just out.  At real ViT sizes the scores tensor dominates HBM
    traffic — drop it or store it in bf16 via scores_dtype.
    """
    batch, seq, embed = x.shape
    assert embed % heads == 0
    d = embed // heads
    scale = 1.0 / math.sqrt(d)

    if rows_per_step is None:
        # More rows per step -> fewer, larger pipeline steps.  Re-budget
        # against VMEM (32/64 MiB) at production sizes.
        rows_per_step = min(batch, 8)
    rows = max(1, min(rows_per_step, batch))
    grid = (pl.cdiv(batch, rows),)

    if scores_dtype is None:
        scores_dtype = x.dtype

    kernel = functools.partial(_attention_kernel, heads=heads, scale=scale,
                               rows=rows, with_scores=return_scores)

    # Weights / biases: constant index_map -> DMA'd once, VMEM-resident.
    weight_spec = pl.BlockSpec((embed, embed), lambda b: (0, 0))
    bias_spec = pl.BlockSpec((1, embed), lambda b: (0, 0))

    x_spec = pl.BlockSpec((rows, seq, embed), lambda b: (b, 0, 0))
    out_spec = pl.BlockSpec((rows, seq, embed), lambda b: (b, 0, 0))

    if return_scores:
        out_shape = (
            jax.ShapeDtypeStruct((batch, seq, embed), x.dtype),
            jax.ShapeDtypeStruct((batch, heads, seq, seq), scores_dtype),
        )
        out_specs = (
            out_spec,
            pl.BlockSpec((rows, heads, seq, seq), lambda b: (b, 0, 0, 0)),
        )
    else:
        out_shape = jax.ShapeDtypeStruct((batch, seq, embed), x.dtype)
        out_specs = out_spec

    result = pl.pallas_call(
        kernel,
        out_shape=out_shape,
        grid=grid,
        in_specs=[
            x_spec,                           # x (streamed, double-buffered)
            weight_spec, bias_spec,           # Wq, bq (resident)
            weight_spec, bias_spec,           # Wk, bk (resident)
            weight_spec, bias_spec,           # Wv, bv (resident)
        ],
        out_specs=out_specs,
        scratch_shapes=[pltpu.VMEM((rows, seq, embed), jnp.float32)],
        compiler_params=pltpu.CompilerParams(
            dimension_semantics=("parallel",),
            vmem_limit_bytes=32 * 1024 * 1024),
    )(x, wq, bq.reshape(1, embed), wk, bk.reshape(1, embed),
      wv, bv.reshape(1, embed))

    if return_scores:
        out, scores = result
        # Match the PyTorch return layout: (batch * heads, seq, seq).
        return out, scores.reshape(batch * heads, seq, seq)
    return out_shape and result


def init_params(key, embed_dim, dtype=jnp.float32):
    """Deterministic init mimicking torch.nn.Linear (uniform +/- 1/sqrt(fan_in))."""
    bound = 1.0 / math.sqrt(embed_dim)
    keys = jax.random.split(key, 6)
    wq = jax.random.uniform(keys[0], (embed_dim, embed_dim), dtype, -bound, bound)
    bq = jax.random.uniform(keys[1], (embed_dim,), dtype, -bound, bound)
    wk = jax.random.uniform(keys[2], (embed_dim, embed_dim), dtype, -bound, bound)
    bk = jax.random.uniform(keys[3], (embed_dim,), dtype, -bound, bound)
    wv = jax.random.uniform(keys[4], (embed_dim, embed_dim), dtype, -bound, bound)
    bv = jax.random.uniform(keys[5], (embed_dim,), dtype, -bound, bound)
    return wq, bq, wk, bk, wv, bv


def reference_attention(x, wq, bq, wk, bk, wv, bv, *, heads):
    """Pure-JAX replica of the PyTorch forward (eval mode)."""
    batch, seq, embed = x.shape
    d = embed // heads

    q = jax.nn.relu(x @ wq + bq)
    k = jax.nn.relu(x @ wk + bk)
    v = jax.nn.relu(x @ wv + bv)

    def split_heads(t):
        return t.reshape(batch, seq, heads, d).transpose(0, 2, 1, 3).reshape(
            batch * heads, seq, d)

    q, k, v = split_heads(q), split_heads(k), split_heads(v)
    scores = jax.nn.softmax(
        jnp.einsum("bqd,bkd->bqk", q, k) / math.sqrt(d), axis=-1)
    out = jnp.einsum("bqk,bkd->bqd", scores, v)
    out = out.reshape(batch, heads, seq, d).transpose(0, 2, 1, 3).reshape(
        batch, seq, embed)
    return out, scores


if __name__ == "__main__":
    batch, seq, embed_dim, heads = 2, 8, 32, 8   # reduced per-head dim D = 4

    key = jax.random.PRNGKey(0)
    k_x, k_p = jax.random.split(key)
    x = jax.random.normal(k_x, (batch, seq, embed_dim), jnp.float32)
    params = init_params(k_p, embed_dim)

    out, scores = attention(x, *params, heads=heads)
    out = jax.block_until_ready(out)
    scores = jax.block_until_ready(scores)

    # Scores-free variant (the real-size roofline win: no (B,H,S,S) writeback).
    out_only = jax.block_until_ready(
        attention(x, *params, heads=heads, return_scores=False))

    ref_out, ref_scores = reference_attention(x, *params, heads=heads)

    assert out.shape == (batch, seq, embed_dim)
    assert scores.shape == (batch * heads, seq, seq)
    # Tolerance relaxed slightly (1e-5 -> rtol 5e-3) because the softmax
    # denominator uses the EUP's approximate reciprocal (pl.reciprocal).
    assert jnp.allclose(out, ref_out, rtol=5e-3, atol=1e-4)
    assert jnp.allclose(scores, ref_scores, rtol=5e-3, atol=1e-4)
    assert jnp.allclose(out_only, ref_out, rtol=5e-3, atol=1e-4)

    print("KERNEL_OK")
</pallas_src>

<mosaic_0001>
module attributes {stable_mosaic.version = 11 : i64} {
  func.func @_attention_kernel(%arg0: i32, %arg1: memref<2x8x32xf32, #tpu.memory_space<vmem>>, %arg2: memref<32x32xf32, #tpu.memory_space<vmem>>, %arg3: memref<1x32xf32, #tpu.memory_space<vmem>>, %arg4: memref<32x32xf32, #tpu.memory_space<vmem>>, %arg5: memref<1x32xf32, #tpu.memory_space<vmem>>, %arg6: memref<32x32xf32, #tpu.memory_space<vmem>>, %arg7: memref<1x32xf32, #tpu.memory_space<vmem>>, %arg8: memref<2x8x32xf32, #tpu.memory_space<vmem>>, %arg9: memref<2x8x8x8xf32, #tpu.memory_space<vmem>>, %arg10: memref<2x8x32xf32, #tpu.memory_space<vmem>>) attributes {dimension_semantics = [#tpu.dimension_semantics<parallel>], iteration_bounds = array<i64: 1>, scalar_prefetch = 0 : i64, scratch_operands = 1 : i64, tpu.core_type = #tpu.core_type<tc>, window_params = [{transform_indices = @transform_0, window_bounds = array<i64: 2, 8, 32>}, {pipeline_mode = #tpu.pipeline_mode<synchronous>, transform_indices = @transform_1, window_bounds = array<i64: 32, 32>}, {pipeline_mode = #tpu.pipeline_mode<synchronous>, transform_indices = @transform_2, window_bounds = array<i64: 1, 32>}, {pipeline_mode = #tpu.pipeline_mode<synchronous>, transform_indices = @transform_3, window_bounds = array<i64: 32, 32>}, {pipeline_mode = #tpu.pipeline_mode<synchronous>, transform_indices = @transform_4, window_bounds = array<i64: 1, 32>}, {pipeline_mode = #tpu.pipeline_mode<synchronous>, transform_indices = @transform_5, window_bounds = array<i64: 32, 32>}, {pipeline_mode = #tpu.pipeline_mode<synchronous>, transform_indices = @transform_6, window_bounds = array<i64: 1, 32>}, {transform_indices = @transform_7, window_bounds = array<i64: 2, 8, 32>}, {transform_indices = @transform_8, window_bounds = array<i64: 2, 8, 8, 8>}]} {
    %c0 = arith.constant 0 : index
    %c0_0 = arith.constant 0 : index
    %c0_1 = arith.constant 0 : index
    %0 = vector.load %arg1[%c0, %c0_0, %c0_1] : memref<2x8x32xf32, #tpu.memory_space<vmem>>, vector<2x8x32xf32>
    %1 = vector.shape_cast %0 : vector<2x8x32xf32> to vector<16x32xf32>
    %c0_2 = arith.constant 0 : index
    %c0_3 = arith.constant 0 : index
    %2 = vector.load %arg2[%c0_2, %c0_3] : memref<32x32xf32, #tpu.memory_space<vmem>>, vector<32x32xf32>
    %cst = arith.constant dense<0.000000e+00> : vector<16x32xf32>
    %3 = tpu.matmul %1, %2, %cst {dimension_numbers = #tpu.dot_dimension_numbers<[1], [0], [0], [1], [0, 0, 1, 1], [], []>} : vector<16x32xf32>, vector<32x32xf32>, vector<16x32xf32> -> vector<16x32xf32>
    %c0_4 = arith.constant 0 : index
    %c0_5 = arith.constant 0 : index
    %4 = vector.load %arg3[%c0_4, %c0_5] : memref<1x32xf32, #tpu.memory_space<vmem>>, vector<1x32xf32>
    %5 = vector.broadcast %4 : vector<1x32xf32> to vector<16x32xf32>
    %6 = arith.addf %3, %5 : vector<16x32xf32>
    %cst_6 = arith.constant 0.000000e+00 : f32
    %7 = vector.broadcast %cst_6 : f32 to vector<16x32xf32>
    %8 = arith.maximumf %6, %7 : vector<16x32xf32>
    %cst_7 = arith.constant 5.000000e-01 : f32
    %9 = vector.broadcast %cst_7 : f32 to vector<16x32xf32>
    %10 = arith.mulf %8, %9 : vector<16x32xf32>
    %c0_8 = arith.constant 0 : index
    %c0_9 = arith.constant 0 : index
    %11 = vector.load %arg4[%c0_8, %c0_9] : memref<32x32xf32, #tpu.memory_space<vmem>>, vector<32x32xf32>
    %cst_10 = arith.constant dense<0.000000e+00> : vector<16x32xf32>
    %12 = tpu.matmul %1, %11, %cst_10 {dimension_numbers = #tpu.dot_dimension_numbers<[1], [0], [0], [1], [0, 0, 1, 1], [], []>} : vector<16x32xf32>, vector<32x32xf32>, vector<16x32xf32> -> vector<16x32xf32>
    %c0_11 = arith.constant 0 : index
    %c0_12 = arith.constant 0 : index
    %13 = vector.load %arg5[%c0_11, %c0_12] : memref<1x32xf32, #tpu.memory_space<vmem>>, vector<1x32xf32>
    %14 = vector.broadcast %13 : vector<1x32xf32> to vector<16x32xf32>
    %15 = arith.addf %12, %14 : vector<16x32xf32>
    %cst_13 = arith.constant 0.000000e+00 : f32
    %16 = vector.broadcast %cst_13 : f32 to vector<16x32xf32>
    %17 = arith.maximumf %15, %16 : vector<16x32xf32>
    %c0_14 = arith.constant 0 : index
    %c0_15 = arith.constant 0 : index
    %18 = vector.load %arg6[%c0_14, %c0_15] : memref<32x32xf32, #tpu.memory_space<vmem>>, vector<32x32xf32>
    %cst_16 = arith.constant dense<0.000000e+00> : vector<16x32xf32>
    %19 = tpu.matmul %1, %18, %cst_16 {dimension_numbers = #tpu.dot_dimension_numbers<[1], [0], [0], [1], [0, 0, 1, 1], [], []>} : vector<16x32xf32>, vector<32x32xf32>, vector<16x32xf32> -> vector<16x32xf32>
    %c0_17 = arith.constant 0 : index
    %c0_18 = arith.constant 0 : index
    %20 = vector.load %arg7[%c0_17, %c0_18] : memref<1x32xf32, #tpu.memory_space<vmem>>, vector<1x32xf32>
    %21 = vector.broadcast %20 : vector<1x32xf32> to vector<16x32xf32>
    %22 = arith.addf %19, %21 : vector<16x32xf32>
    %cst_19 = arith.constant 0.000000e+00 : f32
    %23 = vector.broadcast %cst_19 : f32 to vector<16x32xf32>
    %24 = arith.maximumf %22, %23 : vector<16x32xf32>
    %25 = vector.extract_strided_slice %10 {offsets = [0, 0], sizes = [8, 32], strides = [1, 1]} : vector<16x32xf32> to vector<8x32xf32>
    %26 = vector.extract_strided_slice %17 {offsets = [0, 0], sizes = [8, 32], strides = [1, 1]} : vector<16x32xf32> to vector<8x32xf32>
    %27 = vector.extract_strided_slice %24 {offsets = [0, 0], sizes = [8, 32], strides = [1, 1]} : vector<16x32xf32> to vector<8x32xf32>
    %28 = vector.extract_strided_slice %25 {offsets = [0, 0], sizes = [8, 4], strides = [1, 1]} : vector<8x32xf32> to vector<8x4xf32>
    %29 = vector.extract_strided_slice %26 {offsets = [0, 0], sizes = [8, 4], strides = [1, 1]} : vector<8x32xf32> to vector<8x4xf32>
    %30 = vector.extract_strided_slice %27 {offsets = [0, 0], sizes = [8, 4], strides = [1, 1]} : vector<8x32xf32> to vector<8x4xf32>
    %cst_20 = arith.constant dense<0.000000e+00> : vector<8x8xf32>
    %31 = tpu.matmul %28, %29, %cst_20 {dimension_numbers = #tpu.dot_dimension_numbers<[1], [1], [0], [0], [0, 0, 1, 0], [], []>} : vector<8x4xf32>, vector<8x4xf32>, vector<8x8xf32> -> vector<8x8xf32>
    %cst_21 = arith.constant dense<0xFF800000> : vector<8xf32>
    %32 = vector.multi_reduction <maximumf>, %31, %cst_21 [1] : vector<8x8xf32> to vector<8xf32>
    %33 = vector.shape_cast %32 : vector<8xf32> to vector<8x1xf32>
    %34 = vector.broadcast %33 : vector<8x1xf32> to vector<8x8xf32>
    %35 = arith.subf %31, %34 : vector<8x8xf32>
    %36 = math.exp %35 : vector<8x8xf32>
    %cst_22 = arith.constant dense<0.000000e+00> : vector<8xf32>
    %37 = vector.multi_reduction <add>, %36, %cst_22 [1] : vector<8x8xf32> to vector<8xf32>
    %38 = vector.shape_cast %37 : vector<8xf32> to vector<8x1xf32>
    %39 = tpu.reciprocal %38 {approx = true} : vector<8x1xf32> -> vector<8x1xf32>
    %40 = vector.broadcast %39 : vector<8x1xf32> to vector<8x8xf32>
    %41 = arith.mulf %36, %40 : vector<8x8xf32>
    %cst_23 = arith.constant dense<0.000000e+00> : vector<8x4xf32>
    %42 = tpu.matmul %41, %30, %cst_23 {dimension_numbers = #tpu.dot_dimension_numbers<[1], [0], [0], [1], [0, 0, 1, 1], [], []>} : vector<8x8xf32>, vector<8x4xf32>, vector<8x4xf32> -> vector<8x4xf32>
    %c0_24 = arith.constant 0 : index
    %c0_25 = arith.constant 0 : index
    %c0_26 = arith.constant 0 : index
    %43 = vector.load %arg10[%c0_24, %c0_25, %c0_26] : memref<2x8x32xf32, #tpu.memory_space<vmem>>, vector<1x8x4xf32>
    %44 = vector.shape_cast %43 : vector<1x8x4xf32> to vector<8x4xf32>
    %45 = vector.shape_cast %42 : vector<8x4xf32> to vector<1x8x4xf32>
    tpu.vector_store %arg10[%c0_24, %c0_25, %c0_26], %45 {strides = array<i32>} : memref<2x8x32xf32, #tpu.memory_space<vmem>>, vector<1x8x4xf32>,
    %46 = vector.extract_strided_slice %25 {offsets = [0, 4], sizes = [8, 4], strides = [1, 1]} : vector<8x32xf32> to vector<8x4xf32>
    %47 = vector.extract_strided_slice %26 {offsets = [0, 4], sizes = [8, 4], strides = [1, 1]} : vector<8x32xf32> to vector<8x4xf32>
    %48 = vector.extract_strided_slice %27 {offsets = [0, 4], sizes = [8, 4], strides = [1, 1]} : vector<8x32xf32> to vector<8x4xf32>
    %cst_27 = arith.constant dense<0.000000e+00> : vector<8x8xf32>
    %49 = tpu.matmul %46, %47, %cst_27 {dimension_numbers = #tpu.dot_dimension_numbers<[1], [1], [0], [0], [0, 0, 1, 0], [], []>} : vector<8x4xf32>, vector<8x4xf32>, vector<8x8xf32> -> vector<8x8xf32>
    %cst_28 = arith.constant dense<0xFF800000> : vector<8xf32>
    %50 = vector.multi_reduction <maximumf>, %49, %cst_28 [1] : vector<8x8xf32> to vector<8xf32>
    %51 = vector.shape_cast %50 : vector<8xf32> to vector<8x1xf32>
    %52 = vector.broadcast %51 : vector<8x1xf32> to vector<8x8xf32>
    %53 = arith.subf %49, %52 : vector<8x8xf32>
    %54 = math.exp %53 : vector<8x8xf32>
    %cst_29 = arith.constant dense<0.000000e+00> : vector<8xf32>
    %55 = vector.multi_reduction <add>, %54, %cst_29 [1] : vector<8x8xf32> to vector<8xf32>
    %56 = vector.shape_cast %55 : vector<8xf32> to vector<8x1xf32>
    %57 = tpu.reciprocal %56 {approx = true} : vector<8x1xf32> -> vector<8x1xf32>
    %58 = vector.broadcast %57 : vector<8x1xf32> to vector<8x8xf32>
    %59 = arith.mulf %54, %58 : vector<8x8xf32>
    %cst_30 = arith.constant dense<0.000000e+00> : vector<8x4xf32>
    %60 = tpu.matmul %59, %48, %cst_30 {dimension_numbers = #tpu.dot_dimension_numbers<[1], [0], [0], [1], [0, 0, 1, 1], [], []>} : vector<8x8xf32>, vector<8x4xf32>, vector<8x4xf32> -> vector<8x4xf32>
    %c0_31 = arith.constant 0 : index
    %c0_32 = arith.constant 0 : index
    %c4 = arith.constant 4 : index
    %61 = vector.load %arg10[%c0_31, %c0_32, %c4] : memref<2x8x32xf32, #tpu.memory_space<vmem>>, vector<1x8x4xf32>
    %62 = vector.shape_cast %61 : vector<1x8x4xf32> to vector<8x4xf32>
    %63 = vector.shape_cast %60 : vector<8x4xf32> to vector<1x8x4xf32>
    tpu.vector_store %arg10[%c0_31, %c0_32, %c4], %63 {strides = array<i32>} : memref<2x8x32xf32, #tpu.memory_space<vmem>>, vector<1x8x4xf32>,
    %64 = vector.extract_strided_slice %25 {offsets = [0, 8], sizes = [8, 4], strides = [1, 1]} : vector<8x32xf32> to vector<8x4xf32>
    %65 = vector.extract_strided_slice %26 {offsets = [0, 8], sizes = [8, 4], strides = [1, 1]} : vector<8x32xf32> to vector<8x4xf32>
    %66 = vector.extract_strided_slice %27 {offsets = [0, 8], sizes = [8, 4], strides = [1, 1]} : vector<8x32xf32> to vector<8x4xf32>
    %cst_33 = arith.constant dense<0.000000e+00> : vector<8x8xf32>
    %67 = tpu.matmul %64, %65, %cst_33 {dimension_numbers = #tpu.dot_dimension_numbers<[1], [1], [0], [0], [0, 0, 1, 0], [], []>} : vector<8x4xf32>, vector<8x4xf32>, vector<8x8xf32> -> vector<8x8xf32>
    %cst_34 = arith.constant dense<0xFF800000> : vector<8xf32>
    %68 = vector.multi_reduction <maximumf>, %67, %cst_34 [1] : vector<8x8xf32> to vector<8xf32>
    %69 = vector.shape_cast %68 : vector<8xf32> to vector<8x1xf32>
    %70 = vector.broadcast %69 : vector<8x1xf32> to vector<8x8xf32>
    %71 = arith.subf %67, %70 : vector<8x8xf32>
    %72 = math.exp %71 : vector<8x8xf32>
    %cst_35 = arith.constant dense<0.000000e+00> : vector<8xf32>
    %73 = vector.multi_reduction <add>, %72, %cst_35 [1] : vector<8x8xf32> to vector<8xf32>
    %74 = vector.shape_cast %73 : vector<8xf32> to vector<8x1xf32>
    %75 = tpu.reciprocal %74 {approx = true} : vector<8x1xf32> -> vector<8x1xf32>
    %76 = vector.broadcast %75 : vector<8x1xf32> to vector<8x8xf32>
    %77 = arith.mulf %72, %76 : vector<8x8xf32>
    %cst_36 = arith.constant dense<0.000000e+00> : vector<8x4xf32>
    %78 = tpu.matmul %77, %66, %cst_36 {dimension_numbers = #tpu.dot_dimension_numbers<[1], [0], [0], [1], [0, 0, 1, 1], [], []>} : vector<8x8xf32>, vector<8x4xf32>, vector<8x4xf32> -> vector<8x4xf32>
    %c0_37 = arith.constant 0 : index
    %c0_38 = arith.constant 0 : index
    %c8 = arith.constant 8 : index
    %79 = vector.load %arg10[%c0_37, %c0_38, %c8] : memref<2x8x32xf32, #tpu.memory_space<vmem>>, vector<1x8x4xf32>
    %80 = vector.shape_cast %79 : vector<1x8x4xf32> to vector<8x4xf32>
    %81 = vector.shape_cast %78 : vector<8x4xf32> to vector<1x8x4xf32>
    tpu.vector_store %arg10[%c0_37, %c0_38, %c8], %81 {strides = array<i32>} : memref<2x8x32xf32, #tpu.memory_space<vmem>>, vector<1x8x4xf32>,
    %82 = vector.extract_strided_slice %25 {offsets = [0, 12], sizes = [8, 4], strides = [1, 1]} : vector<8x32xf32> to vector<8x4xf32>
    %83 = vector.extract_strided_slice %26 {offsets = [0, 12], sizes = [8, 4], strides = [1, 1]} : vector<8x32xf32> to vector<8x4xf32>
    %84 = vector.extract_strided_slice %27 {offsets = [0, 12], sizes = [8, 4], strides = [1, 1]} : vector<8x32xf32> to vector<8x4xf32>
    %cst_39 = arith.constant dense<0.000000e+00> : vector<8x8xf32>
    %85 = tpu.matmul %82, %83, %cst_39 {dimension_numbers = #tpu.dot_dimension_numbers<[1], [1], [0], [0], [0, 0, 1, 0], [], []>} : vector<8x4xf32>, vector<8x4xf32>, vector<8x8xf32> -> vector<8x8xf32>
    %cst_40 = arith.constant dense<0xFF800000> : vector<8xf32>
    %86 = vector.multi_reduction <maximumf>, %85, %cst_40 [1] : vector<8x8xf32> to vector<8xf32>
    %87 = vector.shape_cast %86 : vector<8xf32> to vector<8x1xf32>
    %88 = vector.broadcast %87 : vector<8x1xf32> to vector<8x8xf32>
    %89 = arith.subf %85, %88 : vector<8x8xf32>
    %90 = math.exp %89 : vector<8x8xf32>
    %cst_41 = arith.constant dense<0.000000e+00> : vector<8xf32>
    %91 = vector.multi_reduction <add>, %90, %cst_41 [1] : vector<8x8xf32> to vector<8xf32>
    %92 = vector.shape_cast %91 : vector<8xf32> to vector<8x1xf32>
    %93 = tpu.reciprocal %92 {approx = true} : vector<8x1xf32> -> vector<8x1xf32>
    %94 = vector.broadcast %93 : vector<8x1xf32> to vector<8x8xf32>
    %95 = arith.mulf %90, %94 : vector<8x8xf32>
    %cst_42 = arith.constant dense<0.000000e+00> : vector<8x4xf32>
    %96 = tpu.matmul %95, %84, %cst_42 {dimension_numbers = #tpu.dot_dimension_numbers<[1], [0], [0], [1], [0, 0, 1, 1], [], []>} : vector<8x8xf32>, vector<8x4xf32>, vector<8x4xf32> -> vector<8x4xf32>
    %c0_43 = arith.constant 0 : index
    %c0_44 = arith.constant 0 : index
    %c12 = arith.constant 12 : index
    %97 = vector.load %arg10[%c0_43, %c0_44, %c12] : memref<2x8x32xf32, #tpu.memory_space<vmem>>, vector<1x8x4xf32>
    %98 = vector.shape_cast %97 : vector<1x8x4xf32> to vector<8x4xf32>
    %99 = vector.shape_cast %96 : vector<8x4xf32> to vector<1x8x4xf32>
    tpu.vector_store %arg10[%c0_43, %c0_44, %c12], %99 {strides = array<i32>} : memref<2x8x32xf32, #tpu.memory_space<vmem>>, vector<1x8x4xf32>,
    %100 = vector.extract_strided_slice %25 {offsets = [0, 16], sizes = [8, 4], strides = [1, 1]} : vector<8x32xf32> to vector<8x4xf32>
    %101 = vector.extract_strided_slice %26 {offsets = [0, 16], sizes = [8, 4], strides = [1, 1]} : vector<8x32xf32> to vector<8x4xf32>
    %102 = vector.extract_strided_slice %27 {offsets = [0, 16], sizes = [8, 4], strides = [1, 1]} : vector<8x32xf32> to vector<8x4xf32>
    %cst_45 = arith.constant dense<0.000000e+00> : vector<8x8xf32>
    %103 = tpu.matmul %100, %101, %cst_45 {dimension_numbers = #tpu.dot_dimension_numbers<[1], [1], [0], [0], [0, 0, 1, 0], [], []>} : vector<8x4xf32>, vector<8x4xf32>, vector<8x8xf32> -> vector<8x8xf32>
    %cst_46 = arith.constant dense<0xFF800000> : vector<8xf32>
    %104 = vector.multi_reduction <maximumf>, %103, %cst_46 [1] : vector<8x8xf32> to vector<8xf32>
    %105 = vector.shape_cast %104 : vector<8xf32> to vector<8x1xf32>
    %106 = vector.broadcast %105 : vector<8x1xf32> to vector<8x8xf32>
    %107 = arith.subf %103, %106 : vector<8x8xf32>
    %108 = math.exp %107 : vector<8x8xf32>
    %cst_47 = arith.constant dense<0.000000e+00> : vector<8xf32>
    %109 = vector.multi_reduction <add>, %108, %cst_47 [1] : vector<8x8xf32> to vector<8xf32>
    %110 = vector.shape_cast %109 : vector<8xf32> to vector<8x1xf32>
    %111 = tpu.reciprocal %110 {approx = true} : vector<8x1xf32> -> vector<8x1xf32>
    %112 = vector.broadcast %111 : vector<8x1xf32> to vector<8x8xf32>
    %113 = arith.mulf %108, %112 : vector<8x8xf32>
    %cst_48 = arith.constant dense<0.000000e+00> : vector<8x4xf32>
    %114 = tpu.matmul %113, %102, %cst_48 {dimension_numbers = #tpu.dot_dimension_numbers<[1], [0], [0], [1], [0, 0, 1, 1], [], []>} : vector<8x8xf32>, vector<8x4xf32>, vector<8x4xf32> -> vector<8x4xf32>
    %c0_49 = arith.constant 0 : index
    %c0_50 = arith.constant 0 : index
    %c16 = arith.constant 16 : index
    %115 = vector.load %arg10[%c0_49, %c0_50, %c16] : memref<2x8x32xf32, #tpu.memory_space<vmem>>, vector<1x8x4xf32>
    %116 = vector.shape_cast %115 : vector<1x8x4xf32> to vector<8x4xf32>
    %117 = vector.shape_cast %114 : vector<8x4xf32> to vector<1x8x4xf32>
    tpu.vector_store %arg10[%c0_49, %c0_50, %c16], %117 {strides = array<i32>} : memref<2x8x32xf32, #tpu.memory_space<vmem>>, vector<1x8x4xf32>,
    %118 = vector.extract_strided_slice %25 {offsets = [0, 20], sizes = [8, 4], strides = [1, 1]} : vector<8x32xf32> to vector<8x4xf32>
    %119 = vector.extract_strided_slice %26 {offsets = [0, 20], sizes = [8, 4], strides = [1, 1]} : vector<8x32xf32> to vector<8x4xf32>
    %120 = vector.extract_strided_slice %27 {offsets = [0, 20], sizes = [8, 4], strides = [1, 1]} : vector<8x32xf32> to vector<8x4xf32>
    %cst_51 = arith.constant dense<0.000000e+00> : vector<8x8xf32>
    %121 = tpu.matmul %118, %119, %cst_51 {dimension_numbers = #tpu.dot_dimension_numbers<[1], [1], [0], [0], [0, 0, 1, 0], [], []>} : vector<8x4xf32>, vector<8x4xf32>, vector<8x8xf32> -> vector<8x8xf32>
    %cst_52 = arith.constant dense<0xFF800000> : vector<8xf32>
    %122 = vector.multi_reduction <maximumf>, %121, %cst_52 [1] : vector<8x8xf32> to vector<8xf32>
    %123 = vector.shape_cast %122 : vector<8xf32> to vector<8x1xf32>
    %124 = vector.broadcast %123 : vector<8x1xf32> to vector<8x8xf32>
    %125 = arith.subf %121, %124 : vector<8x8xf32>
    %126 = math.exp %125 : vector<8x8xf32>
    %cst_53 = arith.constant dense<0.000000e+00> : vector<8xf32>
    %127 = vector.multi_reduction <add>, %126, %cst_53 [1] : vector<8x8xf32> to vector<8xf32>
    %128 = vector.shape_cast %127 : vector<8xf32> to vector<8x1xf32>
    %129 = tpu.reciprocal %128 {approx = true} : vector<8x1xf32> -> vector<8x1xf32>
    %130 = vector.broadcast %129 : vector<8x1xf32> to vector<8x8xf32>
    %131 = arith.mulf %126, %130 : vector<8x8xf32>
    %cst_54 = arith.constant dense<0.000000e+00> : vector<8x4xf32>
    %132 = tpu.matmul %131, %120, %cst_54 {dimension_numbers = #tpu.dot_dimension_numbers<[1], [0], [0], [1], [0, 0, 1, 1], [], []>} : vector<8x8xf32>, vector<8x4xf32>, vector<8x4xf32> -> vector<8x4xf32>
    %c0_55 = arith.constant 0 : index
    %c0_56 = arith.constant 0 : index
    %c20 = arith.constant 20 : index
    %133 = vector.load %arg10[%c0_55, %c0_56, %c20] : memref<2x8x32xf32, #tpu.memory_space<vmem>>, vector<1x8x4xf32>
    %134 = vector.shape_cast %133 : vector<1x8x4xf32> to vector<8x4xf32>
    %135 = vector.shape_cast %132 : vector<8x4xf32> to vector<1x8x4xf32>
    tpu.vector_store %arg10[%c0_55, %c0_56, %c20], %135 {strides = array<i32>} : memref<2x8x32xf32, #tpu.memory_space<vmem>>, vector<1x8x4xf32>,
    %136 = vector.extract_strided_slice %25 {offsets = [0, 24], sizes = [8, 4], strides = [1, 1]} : vector<8x32xf32> to vector<8x4xf32>
    %137 = vector.extract_strided_slice %26 {offsets = [0, 24], sizes = [8, 4], strides = [1, 1]} : vector<8x32xf32> to vector<8x4xf32>
    %138 = vector.extract_strided_slice %27 {offsets = [0, 24], sizes = [8, 4], strides = [1, 1]} : vector<8x32xf32> to vector<8x4xf32>
    %cst_57 = arith.constant dense<0.000000e+00> : vector<8x8xf32>
    %139 = tpu.matmul %136, %137, %cst_57 {dimension_numbers = #tpu.dot_dimension_numbers<[1], [1], [0], [0], [0, 0, 1, 0], [], []>} : vector<8x4xf32>, vector<8x4xf32>, vector<8x8xf32> -> vector<8x8xf32>
    %cst_58 = arith.constant dense<0xFF800000> : vector<8xf32>
    %140 = vector.multi_reduction <maximumf>, %139, %cst_58 [1] : vector<8x8xf32> to vector<8xf32>
    %141 = vector.shape_cast %140 : vector<8xf32> to vector<8x1xf32>
    %142 = vector.broadcast %141 : vector<8x1xf32> to vector<8x8xf32>
    %143 = arith.subf %139, %142 : vector<8x8xf32>
    %144 = math.exp %143 : vector<8x8xf32>
    %cst_59 = arith.constant dense<0.000000e+00> : vector<8xf32>
    %145 = vector.multi_reduction <add>, %144, %cst_59 [1] : vector<8x8xf32> to vector<8xf32>
    %146 = vector.shape_cast %145 : vector<8xf32> to vector<8x1xf32>
    %147 = tpu.reciprocal %146 {approx = true} : vector<8x1xf32> -> vector<8x1xf32>
    %148 = vector.broadcast %147 : vector<8x1xf32> to vector<8x8xf32>
    %149 = arith.mulf %144, %148 : vector<8x8xf32>
    %cst_60 = arith.constant dense<0.000000e+00> : vector<8x4xf32>
    %150 = tpu.matmul %149, %138, %cst_60 {dimension_numbers = #tpu.dot_dimension_numbers<[1], [0], [0], [1], [0, 0, 1, 1], [], []>} : vector<8x8xf32>, vector<8x4xf32>, vector<8x4xf32> -> vector<8x4xf32>
    %c0_61 = arith.constant 0 : index
    %c0_62 = arith.constant 0 : index
    %c24 = arith.constant 24 : index
    %151 = vector.load %arg10[%c0_61, %c0_62, %c24] : memref<2x8x32xf32, #tpu.memory_space<vmem>>, vector<1x8x4xf32>
    %152 = vector.shape_cast %151 : vector<1x8x4xf32> to vector<8x4xf32>
    %153 = vector.shape_cast %150 : vector<8x4xf32> to vector<1x8x4xf32>
    tpu.vector_store %arg10[%c0_61, %c0_62, %c24], %153 {strides = array<i32>} : memref<2x8x32xf32, #tpu.memory_space<vmem>>, vector<1x8x4xf32>,
    %154 = vector.extract_strided_slice %25 {offsets = [0, 28], sizes = [8, 4], strides = [1, 1]} : vector<8x32xf32> to vector<8x4xf32>
    %155 = vector.extract_strided_slice %26 {offsets = [0, 28], sizes = [8, 4], strides = [1, 1]} : vector<8x32xf32> to vector<8x4xf32>
    %156 = vector.extract_strided_slice %27 {offsets = [0, 28], sizes = [8, 4], strides = [1, 1]} : vector<8x32xf32> to vector<8x4xf32>
    %cst_63 = arith.constant dense<0.000000e+00> : vector<8x8xf32>
    %157 = tpu.matmul %154, %155, %cst_63 {dimension_numbers = #tpu.dot_dimension_numbers<[1], [1], [0], [0], [0, 0, 1, 0], [], []>} : vector<8x4xf32>, vector<8x4xf32>, vector<8x8xf32> -> vector<8x8xf32>
    %cst_64 = arith.constant dense<0xFF800000> : vector<8xf32>
    %158 = vector.multi_reduction <maximumf>, %157, %cst_64 [1] : vector<8x8xf32> to vector<8xf32>
    %159 = vector.shape_cast %158 : vector<8xf32> to vector<8x1xf32>
    %160 = vector.broadcast %159 : vector<8x1xf32> to vector<8x8xf32>
    %161 = arith.subf %157, %160 : vector<8x8xf32>
    %162 = math.exp %161 : vector<8x8xf32>
    %cst_65 = arith.constant dense<0.000000e+00> : vector<8xf32>
    %163 = vector.multi_reduction <add>, %162, %cst_65 [1] : vector<8x8xf32> to vector<8xf32>
    %164 = vector.shape_cast %163 : vector<8xf32> to vector<8x1xf32>
    %165 = tpu.reciprocal %164 {approx = true} : vector<8x1xf32> -> vector<8x1xf32>
    %166 = vector.broadcast %165 : vector<8x1xf32> to vector<8x8xf32>
    %167 = arith.mulf %162, %166 : vector<8x8xf32>
    %cst_66 = arith.constant dense<0.000000e+00> : vector<8x4xf32>
    %168 = tpu.matmul %167, %156, %cst_66 {dimension_numbers = #tpu.dot_dimension_numbers<[1], [0], [0], [1], [0, 0, 1, 1], [], []>} : vector<8x8xf32>, vector<8x4xf32>, vector<8x4xf32> -> vector<8x4xf32>
    %c0_67 = arith.constant 0 : index
    %c0_68 = arith.constant 0 : index
    %c28 = arith.constant 28 : index
    %169 = vector.load %arg10[%c0_67, %c0_68, %c28] : memref<2x8x32xf32, #tpu.memory_space<vmem>>, vector<1x8x4xf32>
    %170 = vector.shape_cast %169 : vector<1x8x4xf32> to vector<8x4xf32>
    %171 = vector.shape_cast %168 : vector<8x4xf32> to vector<1x8x4xf32>
    tpu.vector_store %arg10[%c0_67, %c0_68, %c28], %171 {strides = array<i32>} : memref<2x8x32xf32, #tpu.memory_space<vmem>>, vector<1x8x4xf32>,
    %172 = vector.shape_cast %41 : vector<8x8xf32> to vector<1x8x8xf32>
    %173 = vector.shape_cast %59 : vector<8x8xf32> to vector<1x8x8xf32>
    %174 = vector.shape_cast %77 : vector<8x8xf32> to vector<1x8x8xf32>
    %175 = vector.shape_cast %95 : vector<8x8xf32> to vector<1x8x8xf32>
    %176 = vector.shape_cast %113 : vector<8x8xf32> to vector<1x8x8xf32>
    %177 = vector.shape_cast %131 : vector<8x8xf32> to vector<1x8x8xf32>
    %178 = vector.shape_cast %149 : vector<8x8xf32> to vector<1x8x8xf32>
    %179 = vector.shape_cast %167 : vector<8x8xf32> to vector<1x8x8xf32>
    %180 = tpu.concatenate %172, %173, %174, %175, %176, %177, %178, %179 in 0 : vector<1x8x8xf32>, vector<1x8x8xf32>, vector<1x8x8xf32>, vector<1x8x8xf32>, vector<1x8x8xf32>, vector<1x8x8xf32>, vector<1x8x8xf32>, vector<1x8x8xf32> -> vector<8x8x8xf32>
    %c0_69 = arith.constant 0 : index
    %c0_70 = arith.constant 0 : index
    %c0_71 = arith.constant 0 : index
    %c0_72 = arith.constant 0 : index
    %181 = vector.load %arg9[%c0_69, %c0_70, %c0_71, %c0_72] : memref<2x8x8x8xf32, #tpu.memory_space<vmem>>, vector<1x8x8x8xf32>
    %182 = vector.shape_cast %181 : vector<1x8x8x8xf32> to vector<8x8x8xf32>
    %183 = vector.shape_cast %180 : vector<8x8x8xf32> to vector<1x8x8x8xf32>
    tpu.vector_store %arg9[%c0_69, %c0_70, %c0_71, %c0_72], %183 {strides = array<i32>} : memref<2x8x8x8xf32, #tpu.memory_space<vmem>>, vector<1x8x8x8xf32>,
    %184 = vector.extract_strided_slice %10 {offsets = [8, 0], sizes = [8, 32], strides = [1, 1]} : vector<16x32xf32> to vector<8x32xf32>
    %185 = vector.extract_strided_slice %17 {offsets = [8, 0], sizes = [8, 32], strides = [1, 1]} : vector<16x32xf32> to vector<8x32xf32>
    %186 = vector.extract_strided_slice %24 {offsets = [8, 0], sizes = [8, 32], strides = [1, 1]} : vector<16x32xf32> to vector<8x32xf32>
    %187 = vector.extract_strided_slice %184 {offsets = [0, 0], sizes = [8, 4], strides = [1, 1]} : vector<8x32xf32> to vector<8x4xf32>
    %188 = vector.extract_strided_slice %185 {offsets = [0, 0], sizes = [8, 4], strides = [1, 1]} : vector<8x32xf32> to vector<8x4xf32>
    %189 = vector.extract_strided_slice %186 {offsets = [0, 0], sizes = [8, 4], strides = [1, 1]} : vector<8x32xf32> to vector<8x4xf32>
    %cst_73 = arith.constant dense<0.000000e+00> : vector<8x8xf32>
    %190 = tpu.matmul %187, %188, %cst_73 {dimension_numbers = #tpu.dot_dimension_numbers<[1], [1], [0], [0], [0, 0, 1, 0], [], []>} : vector<8x4xf32>, vector<8x4xf32>, vector<8x8xf32> -> vector<8x8xf32>
    %cst_74 = arith.constant dense<0xFF800000> : vector<8xf32>
    %191 = vector.multi_reduction <maximumf>, %190, %cst_74 [1] : vector<8x8xf32> to vector<8xf32>
    %192 = vector.shape_cast %191 : vector<8xf32> to vector<8x1xf32>
    %193 = vector.broadcast %192 : vector<8x1xf32> to vector<8x8xf32>
    %194 = arith.subf %190, %193 : vector<8x8xf32>
    %195 = math.exp %194 : vector<8x8xf32>
    %cst_75 = arith.constant dense<0.000000e+00> : vector<8xf32>
    %196 = vector.multi_reduction <add>, %195, %cst_75 [1] : vector<8x8xf32> to vector<8xf32>
    %197 = vector.shape_cast %196 : vector<8xf32> to vector<8x1xf32>
    %198 = tpu.reciprocal %197 {approx = true} : vector<8x1xf32> -> vector<8x1xf32>
    %199 = vector.broadcast %198 : vector<8x1xf32> to vector<8x8xf32>
    %200 = arith.mulf %195, %199 : vector<8x8xf32>
    %cst_76 = arith.constant dense<0.000000e+00> : vector<8x4xf32>
    %201 = tpu.matmul %200, %189, %cst_76 {dimension_numbers = #tpu.dot_dimension_numbers<[1], [0], [0], [1], [0, 0, 1, 1], [], []>} : vector<8x8xf32>, vector<8x4xf32>, vector<8x4xf32> -> vector<8x4xf32>
    %c1 = arith.constant 1 : index
    %c0_77 = arith.constant 0 : index
    %c0_78 = arith.constant 0 : index
    %202 = vector.load %arg10[%c1, %c0_77, %c0_78] : memref<2x8x32xf32, #tpu.memory_space<vmem>>, vector<1x8x4xf32>
    %203 = vector.shape_cast %202 : vector<1x8x4xf32> to vector<8x4xf32>
    %204 = vector.shape_cast %201 : vector<8x4xf32> to vector<1x8x4xf32>
    tpu.vector_store %arg10[%c1, %c0_77, %c0_78], %204 {strides = array<i32>} : memref<2x8x32xf32, #tpu.memory_space<vmem>>, vector<1x8x4xf32>,
    %205 = vector.extract_strided_slice %184 {offsets = [0, 4], sizes = [8, 4], strides = [1, 1]} : vector<8x32xf32> to vector<8x4xf32>
    %206 = vector.extract_strided_slice %185 {offsets = [0, 4], sizes = [8, 4], strides = [1, 1]} : vector<8x32xf32> to vector<8x4xf32>
    %207 = vector.extract_strided_slice %186 {offsets = [0, 4], sizes = [8, 4], strides = [1, 1]} : vector<8x32xf32> to vector<8x4xf32>
    %cst_79 = arith.constant dense<0.000000e+00> : vector<8x8xf32>
    %208 = tpu.matmul %205, %206, %cst_79 {dimension_numbers = #tpu.dot_dimension_numbers<[1], [1], [0], [0], [0, 0, 1, 0], [], []>} : vector<8x4xf32>, vector<8x4xf32>, vector<8x8xf32> -> vector<8x8xf32>
    %cst_80 = arith.constant dense<0xFF800000> : vector<8xf32>
    %209 = vector.multi_reduction <maximumf>, %208, %cst_80 [1] : vector<8x8xf32> to vector<8xf32>
    %210 = vector.shape_cast %209 : vector<8xf32> to vector<8x1xf32>
    %211 = vector.broadcast %210 : vector<8x1xf32> to vector<8x8xf32>
    %212 = arith.subf %208, %211 : vector<8x8xf32>
    %213 = math.exp %212 : vector<8x8xf32>
    %cst_81 = arith.constant dense<0.000000e+00> : vector<8xf32>
    %214 = vector.multi_reduction <add>, %213, %cst_81 [1] : vector<8x8xf32> to vector<8xf32>
    %215 = vector.shape_cast %214 : vector<8xf32> to vector<8x1xf32>
    %216 = tpu.reciprocal %215 {approx = true} : vector<8x1xf32> -> vector<8x1xf32>
    %217 = vector.broadcast %216 : vector<8x1xf32> to vector<8x8xf32>
    %218 = arith.mulf %213, %217 : vector<8x8xf32>
    %cst_82 = arith.constant dense<0.000000e+00> : vector<8x4xf32>
    %219 = tpu.matmul %218, %207, %cst_82 {dimension_numbers = #tpu.dot_dimension_numbers<[1], [0], [0], [1], [0, 0, 1, 1], [], []>} : vector<8x8xf32>, vector<8x4xf32>, vector<8x4xf32> -> vector<8x4xf32>
    %c1_83 = arith.constant 1 : index
    %c0_84 = arith.constant 0 : index
    %c4_85 = arith.constant 4 : index
    %220 = vector.load %arg10[%c1_83, %c0_84, %c4_85] : memref<2x8x32xf32, #tpu.memory_space<vmem>>, vector<1x8x4xf32>
    %221 = vector.shape_cast %220 : vector<1x8x4xf32> to vector<8x4xf32>
    %222 = vector.shape_cast %219 : vector<8x4xf32> to vector<1x8x4xf32>
    tpu.vector_store %arg10[%c1_83, %c0_84, %c4_85], %222 {strides = array<i32>} : memref<2x8x32xf32, #tpu.memory_space<vmem>>, vector<1x8x4xf32>,
    %223 = vector.extract_strided_slice %184 {offsets = [0, 8], sizes = [8, 4], strides = [1, 1]} : vector<8x32xf32> to vector<8x4xf32>
    %224 = vector.extract_strided_slice %185 {offsets = [0, 8], sizes = [8, 4], strides = [1, 1]} : vector<8x32xf32> to vector<8x4xf32>
    %225 = vector.extract_strided_slice %186 {offsets = [0, 8], sizes = [8, 4], strides = [1, 1]} : vector<8x32xf32> to vector<8x4xf32>
    %cst_86 = arith.constant dense<0.000000e+00> : vector<8x8xf32>
    %226 = tpu.matmul %223, %224, %cst_86 {dimension_numbers = #tpu.dot_dimension_numbers<[1], [1], [0], [0], [0, 0, 1, 0], [], []>} : vector<8x4xf32>, vector<8x4xf32>, vector<8x8xf32> -> vector<8x8xf32>
    %cst_87 = arith.constant dense<0xFF800000> : vector<8xf32>
    %227 = vector.multi_reduction <maximumf>, %226, %cst_87 [1] : vector<8x8xf32> to vector<8xf32>
    %228 = vector.shape_cast %227 : vector<8xf32> to vector<8x1xf32>
    %229 = vector.broadcast %228 : vector<8x1xf32> to vector<8x8xf32>
    %230 = arith.subf %226, %229 : vector<8x8xf32>
    %231 = math.exp %230 : vector<8x8xf32>
    %cst_88 = arith.constant dense<0.000000e+00> : vector<8xf32>
    %232 = vector.multi_reduction <add>, %231, %cst_88 [1] : vector<8x8xf32> to vector<8xf32>
    %233 = vector.shape_cast %232 : vector<8xf32> to vector<8x1xf32>
    %234 = tpu.reciprocal %233 {approx = true} : vector<8x1xf32> -> vector<8x1xf32>
    %235 = vector.broadcast %234 : vector<8x1xf32> to vector<8x8xf32>
    %236 = arith.mulf %231, %235 : vector<8x8xf32>
    %cst_89 = arith.constant dense<0.000000e+00> : vector<8x4xf32>
    %237 = tpu.matmul %236, %225, %cst_89 {dimension_numbers = #tpu.dot_dimension_numbers<[1], [0], [0], [1], [0, 0, 1, 1], [], []>} : vector<8x8xf32>, vector<8x4xf32>, vector<8x4xf32> -> vector<8x4xf32>
    %c1_90 = arith.constant 1 : index
    %c0_91 = arith.constant 0 : index
    %c8_92 = arith.constant 8 : index
    %238 = vector.load %arg10[%c1_90, %c0_91, %c8_92] : memref<2x8x32xf32, #tpu.memory_space<vmem>>, vector<1x8x4xf32>
    %239 = vector.shape_cast %238 : vector<1x8x4xf32> to vector<8x4xf32>
    %240 = vector.shape_cast %237 : vector<8x4xf32> to vector<1x8x4xf32>
    tpu.vector_store %arg10[%c1_90, %c0_91, %c8_92], %240 {strides = array<i32>} : memref<2x8x32xf32, #tpu.memory_space<vmem>>, vector<1x8x4xf32>,
    %241 = vector.extract_strided_slice %184 {offsets = [0, 12], sizes = [8, 4], strides = [1, 1]} : vector<8x32xf32> to vector<8x4xf32>
    %242 = vector.extract_strided_slice %185 {offsets = [0, 12], sizes = [8, 4], strides = [1, 1]} : vector<8x32xf32> to vector<8x4xf32>
    %243 = vector.extract_strided_slice %186 {offsets = [0, 12], sizes = [8, 4], strides = [1, 1]} : vector<8x32xf32> to vector<8x4xf32>
    %cst_93 = arith.constant dense<0.000000e+00> : vector<8x8xf32>
    %244 = tpu.matmul %241, %242, %cst_93 {dimension_numbers = #tpu.dot_dimension_numbers<[1], [1], [0], [0], [0, 0, 1, 0], [], []>} : vector<8x4xf32>, vector<8x4xf32>, vector<8x8xf32> -> vector<8x8xf32>
    %cst_94 = arith.constant dense<0xFF800000> : vector<8xf32>
    %245 = vector.multi_reduction <maximumf>, %244, %cst_94 [1] : vector<8x8xf32> to vector<8xf32>
    %246 = vector.shape_cast %245 : vector<8xf32> to vector<8x1xf32>
    %247 = vector.broadcast %246 : vector<8x1xf32> to vector<8x8xf32>
    %248 = arith.subf %244, %247 : vector<8x8xf32>
    %249 = math.exp %248 : vector<8x8xf32>
    %cst_95 = arith.constant dense<0.000000e+00> : vector<8xf32>
    %250 = vector.multi_reduction <add>, %249, %cst_95 [1] : vector<8x8xf32> to vector<8xf32>
    %251 = vector.shape_cast %250 : vector<8xf32> to vector<8x1xf32>
    %252 = tpu.reciprocal %251 {approx = true} : vector<8x1xf32> -> vector<8x1xf32>
    %253 = vector.broadcast %252 : vector<8x1xf32> to vector<8x8xf32>
    %254 = arith.mulf %249, %253 : vector<8x8xf32>
    %cst_96 = arith.constant dense<0.000000e+00> : vector<8x4xf32>
    %255 = tpu.matmul %254, %243, %cst_96 {dimension_numbers = #tpu.dot_dimension_numbers<[1], [0], [0], [1], [0, 0, 1, 1], [], []>} : vector<8x8xf32>, vector<8x4xf32>, vector<8x4xf32> -> vector<8x4xf32>
    %c1_97 = arith.constant 1 : index
    %c0_98 = arith.constant 0 : index
    %c12_99 = arith.constant 12 : index
    %256 = vector.load %arg10[%c1_97, %c0_98, %c12_99] : memref<2x8x32xf32, #tpu.memory_space<vmem>>, vector<1x8x4xf32>
    %257 = vector.shape_cast %256 : vector<1x8x4xf32> to vector<8x4xf32>
    %258 = vector.shape_cast %255 : vector<8x4xf32> to vector<1x8x4xf32>
    tpu.vector_store %arg10[%c1_97, %c0_98, %c12_99], %258 {strides = array<i32>} : memref<2x8x32xf32, #tpu.memory_space<vmem>>, vector<1x8x4xf32>,
    %259 = vector.extract_strided_slice %184 {offsets = [0, 16], sizes = [8, 4], strides = [1, 1]} : vector<8x32xf32> to vector<8x4xf32>
    %260 = vector.extract_strided_slice %185 {offsets = [0, 16], sizes = [8, 4], strides = [1, 1]} : vector<8x32xf32> to vector<8x4xf32>
    %261 = vector.extract_strided_slice %186 {offsets = [0, 16], sizes = [8, 4], strides = [1, 1]} : vector<8x32xf32> to vector<8x4xf32>
    %cst_100 = arith.constant dense<0.000000e+00> : vector<8x8xf32>
    %262 = tpu.matmul %259, %260, %cst_100 {dimension_numbers = #tpu.dot_dimension_numbers<[1], [1], [0], [0], [0, 0, 1, 0], [], []>} : vector<8x4xf32>, vector<8x4xf32>, vector<8x8xf32> -> vector<8x8xf32>
    %cst_101 = arith.constant dense<0xFF800000> : vector<8xf32>
    %263 = vector.multi_reduction <maximumf>, %262, %cst_101 [1] : vector<8x8xf32> to vector<8xf32>
    %264 = vector.shape_cast %263 : vector<8xf32> to vector<8x1xf32>
    %265 = vector.broadcast %264 : vector<8x1xf32> to vector<8x8xf32>
    %266 = arith.subf %262, %265 : vector<8x8xf32>
    %267 = math.exp %266 : vector<8x8xf32>
    %cst_102 = arith.constant dense<0.000000e+00> : vector<8xf32>
    %268 = vector.multi_reduction <add>, %267, %cst_102 [1] : vector<8x8xf32> to vector<8xf32>
    %269 = vector.shape_cast %268 : vector<8xf32> to vector<8x1xf32>
    %270 = tpu.reciprocal %269 {approx = true} : vector<8x1xf32> -> vector<8x1xf32>
    %271 = vector.broadcast %270 : vector<8x1xf32> to vector<8x8xf32>
    %272 = arith.mulf %267, %271 : vector<8x8xf32>
    %cst_103 = arith.constant dense<0.000000e+00> : vector<8x4xf32>
    %273 = tpu.matmul %272, %261, %cst_103 {dimension_numbers = #tpu.dot_dimension_numbers<[1], [0], [0], [1], [0, 0, 1, 1], [], []>} : vector<8x8xf32>, vector<8x4xf32>, vector<8x4xf32> -> vector<8x4xf32>
    %c1_104 = arith.constant 1 : index
    %c0_105 = arith.constant 0 : index
    %c16_106 = arith.constant 16 : index
    %274 = vector.load %arg10[%c1_104, %c0_105, %c16_106] : memref<2x8x32xf32, #tpu.memory_space<vmem>>, vector<1x8x4xf32>
    %275 = vector.shape_cast %274 : vector<1x8x4xf32> to vector<8x4xf32>
    %276 = vector.shape_cast %273 : vector<8x4xf32> to vector<1x8x4xf32>
    tpu.vector_store %arg10[%c1_104, %c0_105, %c16_106], %276 {strides = array<i32>} : memref<2x8x32xf32, #tpu.memory_space<vmem>>, vector<1x8x4xf32>,
    %277 = vector.extract_strided_slice %184 {offsets = [0, 20], sizes = [8, 4], strides = [1, 1]} : vector<8x32xf32> to vector<8x4xf32>
    %278 = vector.extract_strided_slice %185 {offsets = [0, 20], sizes = [8, 4], strides = [1, 1]} : vector<8x32xf32> to vector<8x4xf32>
    %279 = vector.extract_strided_slice %186 {offsets = [0, 20], sizes = [8, 4], strides = [1, 1]} : vector<8x32xf32> to vector<8x4xf32>
    %cst_107 = arith.constant dense<0.000000e+00> : vector<8x8xf32>
    %280 = tpu.matmul %277, %278, %cst_107 {dimension_numbers = #tpu.dot_dimension_numbers<[1], [1], [0], [0], [0, 0, 1, 0], [], []>} : vector<8x4xf32>, vector<8x4xf32>, vector<8x8xf32> -> vector<8x8xf32>
    %cst_108 = arith.constant dense<0xFF800000> : vector<8xf32>
    %281 = vector.multi_reduction <maximumf>, %280, %cst_108 [1] : vector<8x8xf32> to vector<8xf32>
    %282 = vector.shape_cast %281 : vector<8xf32> to vector<8x1xf32>
    %283 = vector.broadcast %282 : vector<8x1xf32> to vector<8x8xf32>
    %284 = arith.subf %280, %283 : vector<8x8xf32>
    %285 = math.exp %284 : vector<8x8xf32>
    %cst_109 = arith.constant dense<0.000000e+00> : vector<8xf32>
    %286 = vector.multi_reduction <add>, %285, %cst_109 [1] : vector<8x8xf32> to vector<8xf32>
    %287 = vector.shape_cast %286 : vector<8xf32> to vector<8x1xf32>
    %288 = tpu.reciprocal %287 {approx = true} : vector<8x1xf32> -> vector<8x1xf32>
    %289 = vector.broadcast %288 : vector<8x1xf32> to vector<8x8xf32>
    %290 = arith.mulf %285, %289 : vector<8x8xf32>
    %cst_110 = arith.constant dense<0.000000e+00> : vector<8x4xf32>
    %291 = tpu.matmul %290, %279, %cst_110 {dimension_numbers = #tpu.dot_dimension_numbers<[1], [0], [0], [1], [0, 0, 1, 1], [], []>} : vector<8x8xf32>, vector<8x4xf32>, vector<8x4xf32> -> vector<8x4xf32>
    %c1_111 = arith.constant 1 : index
    %c0_112 = arith.constant 0 : index
    %c20_113 = arith.constant 20 : index
    %292 = vector.load %arg10[%c1_111, %c0_112, %c20_113] : memref<2x8x32xf32, #tpu.memory_space<vmem>>, vector<1x8x4xf32>
    %293 = vector.shape_cast %292 : vector<1x8x4xf32> to vector<8x4xf32>
    %294 = vector.shape_cast %291 : vector<8x4xf32> to vector<1x8x4xf32>
    tpu.vector_store %arg10[%c1_111, %c0_112, %c20_113], %294 {strides = array<i32>} : memref<2x8x32xf32, #tpu.memory_space<vmem>>, vector<1x8x4xf32>,
    %295 = vector.extract_strided_slice %184 {offsets = [0, 24], sizes = [8, 4], strides = [1, 1]} : vector<8x32xf32> to vector<8x4xf32>
    %296 = vector.extract_strided_slice %185 {offsets = [0, 24], sizes = [8, 4], strides = [1, 1]} : vector<8x32xf32> to vector<8x4xf32>
    %297 = vector.extract_strided_slice %186 {offsets = [0, 24], sizes = [8, 4], strides = [1, 1]} : vector<8x32xf32> to vector<8x4xf32>
    %cst_114 = arith.constant dense<0.000000e+00> : vector<8x8xf32>
    %298 = tpu.matmul %295, %296, %cst_114 {dimension_numbers = #tpu.dot_dimension_numbers<[1], [1], [0], [0], [0, 0, 1, 0], [], []>} : vector<8x4xf32>, vector<8x4xf32>, vector<8x8xf32> -> vector<8x8xf32>
    %cst_115 = arith.constant dense<0xFF800000> : vector<8xf32>
    %299 = vector.multi_reduction <maximumf>, %298, %cst_115 [1] : vector<8x8xf32> to vector<8xf32>
    %300 = vector.shape_cast %299 : vector<8xf32> to vector<8x1xf32>
    %301 = vector.broadcast %300 : vector<8x1xf32> to vector<8x8xf32>
    %302 = arith.subf %298, %301 : vector<8x8xf32>
    %303 = math.exp %302 : vector<8x8xf32>
    %cst_116 = arith.constant dense<0.000000e+00> : vector<8xf32>
    %304 = vector.multi_reduction <add>, %303, %cst_116 [1] : vector<8x8xf32> to vector<8xf32>
    %305 = vector.shape_cast %304 : vector<8xf32> to vector<8x1xf32>
    %306 = tpu.reciprocal %305 {approx = true} : vector<8x1xf32> -> vector<8x1xf32>
    %307 = vector.broadcast %306 : vector<8x1xf32> to vector<8x8xf32>
    %308 = arith.mulf %303, %307 : vector<8x8xf32>
    %cst_117 = arith.constant dense<0.000000e+00> : vector<8x4xf32>
    %309 = tpu.matmul %308, %297, %cst_117 {dimension_numbers = #tpu.dot_dimension_numbers<[1], [0], [0], [1], [0, 0, 1, 1], [], []>} : vector<8x8xf32>, vector<8x4xf32>, vector<8x4xf32> -> vector<8x4xf32>
    %c1_118 = arith.constant 1 : index
    %c0_119 = arith.constant 0 : index
    %c24_120 = arith.constant 24 : index
    %310 = vector.load %arg10[%c1_118, %c0_119, %c24_120] : memref<2x8x32xf32, #tpu.memory_space<vmem>>, vector<1x8x4xf32>
    %311 = vector.shape_cast %310 : vector<1x8x4xf32> to vector<8x4xf32>
    %312 = vector.shape_cast %309 : vector<8x4xf32> to vector<1x8x4xf32>
    tpu.vector_store %arg10[%c1_118, %c0_119, %c24_120], %312 {strides = array<i32>} : memref<2x8x32xf32, #tpu.memory_space<vmem>>, vector<1x8x4xf32>,
    %313 = vector.extract_strided_slice %184 {offsets = [0, 28], sizes = [8, 4], strides = [1, 1]} : vector<8x32xf32> to vector<8x4xf32>
    %314 = vector.extract_strided_slice %185 {offsets = [0, 28], sizes = [8, 4], strides = [1, 1]} : vector<8x32xf32> to vector<8x4xf32>
    %315 = vector.extract_strided_slice %186 {offsets = [0, 28], sizes = [8, 4], strides = [1, 1]} : vector<8x32xf32> to vector<8x4xf32>
    %cst_121 = arith.constant dense<0.000000e+00> : vector<8x8xf32>
    %316 = tpu.matmul %313, %314, %cst_121 {dimension_numbers = #tpu.dot_dimension_numbers<[1], [1], [0], [0], [0, 0, 1, 0], [], []>} : vector<8x4xf32>, vector<8x4xf32>, vector<8x8xf32> -> vector<8x8xf32>
    %cst_122 = arith.constant dense<0xFF800000> : vector<8xf32>
    %317 = vector.multi_reduction <maximumf>, %316, %cst_122 [1] : vector<8x8xf32> to vector<8xf32>
    %318 = vector.shape_cast %317 : vector<8xf32> to vector<8x1xf32>
    %319 = vector.broadcast %318 : vector<8x1xf32> to vector<8x8xf32>
    %320 = arith.subf %316, %319 : vector<8x8xf32>
    %321 = math.exp %320 : vector<8x8xf32>
    %cst_123 = arith.constant dense<0.000000e+00> : vector<8xf32>
    %322 = vector.multi_reduction <add>, %321, %cst_123 [1] : vector<8x8xf32> to vector<8xf32>
    %323 = vector.shape_cast %322 : vector<8xf32> to vector<8x1xf32>
    %324 = tpu.reciprocal %323 {approx = true} : vector<8x1xf32> -> vector<8x1xf32>
    %325 = vector.broadcast %324 : vector<8x1xf32> to vector<8x8xf32>
    %326 = arith.mulf %321, %325 : vector<8x8xf32>
    %cst_124 = arith.constant dense<0.000000e+00> : vector<8x4xf32>
    %327 = tpu.matmul %326, %315, %cst_124 {dimension_numbers = #tpu.dot_dimension_numbers<[1], [0], [0], [1], [0, 0, 1, 1], [], []>} : vector<8x8xf32>, vector<8x4xf32>, vector<8x4xf32> -> vector<8x4xf32>
    %c1_125 = arith.constant 1 : index
    %c0_126 = arith.constant 0 : index
    %c28_127 = arith.constant 28 : index
    %328 = vector.load %arg10[%c1_125, %c0_126, %c28_127] : memref<2x8x32xf32, #tpu.memory_space<vmem>>, vector<1x8x4xf32>
    %329 = vector.shape_cast %328 : vector<1x8x4xf32> to vector<8x4xf32>
    %330 = vector.shape_cast %327 : vector<8x4xf32> to vector<1x8x4xf32>
    tpu.vector_store %arg10[%c1_125, %c0_126, %c28_127], %330 {strides = array<i32>} : memref<2x8x32xf32, #tpu.memory_space<vmem>>, vector<1x8x4xf32>,
    %331 = vector.shape_cast %200 : vector<8x8xf32> to vector<1x8x8xf32>
    %332 = vector.shape_cast %218 : vector<8x8xf32> to vector<1x8x8xf32>
    %333 = vector.shape_cast %236 : vector<8x8xf32> to vector<1x8x8xf32>
    %334 = vector.shape_cast %254 : vector<8x8xf32> to vector<1x8x8xf32>
    %335 = vector.shape_cast %272 : vector<8x8xf32> to vector<1x8x8xf32>
    %336 = vector.shape_cast %290 : vector<8x8xf32> to vector<1x8x8xf32>
    %337 = vector.shape_cast %308 : vector<8x8xf32> to vector<1x8x8xf32>
    %338 = vector.shape_cast %326 : vector<8x8xf32> to vector<1x8x8xf32>
    %339 = tpu.concatenate %331, %332, %333, %334, %335, %336, %337, %338 in 0 : vector<1x8x8xf32>, vector<1x8x8xf32>, vector<1x8x8xf32>, vector<1x8x8xf32>, vector<1x8x8xf32>, vector<1x8x8xf32>, vector<1x8x8xf32>, vector<1x8x8xf32> -> vector<8x8x8xf32>
    %c1_128 = arith.constant 1 : index
    %c0_129 = arith.constant 0 : index
    %c0_130 = arith.constant 0 : index
    %c0_131 = arith.constant 0 : index
    %340 = vector.load %arg9[%c1_128, %c0_129, %c0_130, %c0_131] : memref<2x8x8x8xf32, #tpu.memory_space<vmem>>, vector<1x8x8x8xf32>
    %341 = vector.shape_cast %340 : vector<1x8x8x8xf32> to vector<8x8x8xf32>
    %342 = vector.shape_cast %339 : vector<8x8x8xf32> to vector<1x8x8x8xf32>
    tpu.vector_store %arg9[%c1_128, %c0_129, %c0_130, %c0_131], %342 {strides = array<i32>} : memref<2x8x8x8xf32, #tpu.memory_space<vmem>>, vector<1x8x8x8xf32>,
    %c0_132 = arith.constant 0 : index
    %c0_133 = arith.constant 0 : index
    %c0_134 = arith.constant 0 : index
    %343 = vector.load %arg10[%c0_132, %c0_133, %c0_134] : memref<2x8x32xf32, #tpu.memory_space<vmem>>, vector<2x8x32xf32>
    %c0_135 = arith.constant 0 : index
    %c0_136 = arith.constant 0 : index
    %c0_137 = arith.constant 0 : index
    %344 = vector.load %arg8[%c0_135, %c0_136, %c0_137] : memref<2x8x32xf32, #tpu.memory_space<vmem>>, vector<2x8x32xf32>
    tpu.vector_store %arg8[%c0_135, %c0_136, %c0_137], %343 {strides = array<i32>} : memref<2x8x32xf32, #tpu.memory_space<vmem>>, vector<2x8x32xf32>,
    return
  }
  func.func @transform_0(%arg0: i32) -> (i32, i32, i32) {
    %c0_i32 = arith.constant 0 : i32
    %c0_i32_0 = arith.constant 0 : i32
    %c0_i32_1 = arith.constant 0 : i32
    return %arg0, %c0_i32, %c0_i32_0 : i32, i32, i32
  }
  func.func @transform_1(%arg0: i32) -> (i32, i32) {
    %c0_i32 = arith.constant 0 : i32
    %c0_i32_0 = arith.constant 0 : i32
    %c0_i32_1 = arith.constant 0 : i32
    return %c0_i32, %c0_i32_0 : i32, i32
  }
  func.func @transform_2(%arg0: i32) -> (i32, i32) {
    %c0_i32 = arith.constant 0 : i32
    %c0_i32_0 = arith.constant 0 : i32
    %c0_i32_1 = arith.constant 0 : i32
    return %c0_i32, %c0_i32_0 : i32, i32
  }
  func.func @transform_3(%arg0: i32) -> (i32, i32) {
    %c0_i32 = arith.constant 0 : i32
    %c0_i32_0 = arith.constant 0 : i32
    %c0_i32_1 = arith.constant 0 : i32
    return %c0_i32, %c0_i32_0 : i32, i32
  }
  func.func @transform_4(%arg0: i32) -> (i32, i32) {
    %c0_i32 = arith.constant 0 : i32
    %c0_i32_0 = arith.constant 0 : i32
    %c0_i32_1 = arith.constant 0 : i32
    return %c0_i32, %c0_i32_0 : i32, i32
  }
  func.func @transform_5(%arg0: i32) -> (i32, i32) {
    %c0_i32 = arith.constant 0 : i32
    %c0_i32_0 = arith.constant 0 : i32
    %c0_i32_1 = arith.constant 0 : i32
    return %c0_i32, %c0_i32_0 : i32, i32
  }
  func.func @transform_6(%arg0: i32) -> (i32, i32) {
    %c0_i32 = arith.constant 0 : i32
    %c0_i32_0 = arith.constant 0 : i32
    %c0_i32_1 = arith.constant 0 : i32
    return %c0_i32, %c0_i32_0 : i32, i32
  }
  func.func @transform_7(%arg0: i32) -> (i32, i32, i32) {
    %c0_i32 = arith.constant 0 : i32
    %c0_i32_0 = arith.constant 0 : i32
    %c0_i32_1 = arith.constant 0 : i32
    return %arg0, %c0_i32, %c0_i32_0 : i32, i32, i32
  }
  func.func @transform_8(%arg0: i32) -> (i32, i32, i32, i32) {
    %c0_i32 = arith.constant 0 : i32
    %c0_i32_0 = arith.constant 0 : i32
    %c0_i32_1 = arith.constant 0 : i32
    %c0_i32_2 = arith.constant 0 : i32
    return %arg0, %c0_i32, %c0_i32_0, %c0_i32_1 : i32, i32, i32, i32
  }
}

</mosaic_0001>

<llo_original>
// kernel: tpu_custom_call.1
$region0: #{tpu_custom_call.1}
  #allocation0 [shape = 'u32[]', space=smem, size = 0x4, offset = 0x4, fixed_abs, tag = 'smem constant byte address 0x4 - core index']
  #allocation1 [shape = 'u32[144,128]{1,0:T(1,128)}', space=vmem, size = 0x12000, scoped, tag = 'internal scratch']
  #allocation2 [shape = 'f32[2,8,32]{2,1,0:T(8,128)}', space=vmem, size = 0x2000, scoped, tag = 'scratch operand']
  %s0 = inlined_call_operand.hbm [shape: f32[2,8,32], index: 0, kind: input, shape index: {}]
  %s1 = inlined_call_operand.hbm [shape: f32[32,32], index: 1, kind: input, shape index: {}]
  %s2 = inlined_call_operand.vmem [shape: f32[1,32], index: 2, kind: input, shape index: {}]
  %s3 = inlined_call_operand.hbm [shape: f32[32,32], index: 3, kind: input, shape index: {}]
  %s4 = inlined_call_operand.vmem [shape: f32[1,32], index: 4, kind: input, shape index: {}]
  %s5 = inlined_call_operand.hbm [shape: f32[32,32], index: 5, kind: input, shape index: {}]
  %s6 = inlined_call_operand.vmem [shape: f32[1,32], index: 6, kind: input, shape index: {}]
  %s7 = inlined_call_operand.hbm [shape: f32[2,8,32], index: 7, kind: output, shape index: {0}]
  %s8 = inlined_call_operand.hbm [shape: f32[2,8,8,8], index: 8, kind: output, shape index: {1}]
  %9 = xla_tuple %s7, %s8
  %s10 = sld [smem:[#allocation0]]
  $region62: #{tpu_custom_call.1} parent=0
    _
  %s12 = ssub.s32 1, %s10
  %s13 = scalar_select 0, %s12, %s10
  $region1: #{tpu_custom_call.1} parent=0
    #allocation3 [shape = 'u8[8192]{0}', space=vmem, size = 0x2000, scoped, tag = 'input window, operand 0, single buffered']
    #allocation4 [shape = 's32[1]{0}', space=sflag, size = 0x4, scoped, tag = 'scoped memory for tpu_custom_call.1']
    #allocation5 [shape = 's32[1]{0}', space=sflag, size = 0x4, scoped, tag = 'scoped memory for tpu_custom_call.1']
    #allocation6 [shape = 'u8[16384]{0}', space=vmem, size = 0x4000, scoped, tag = 'input window, operand 1, single buffered']
    #allocation7 [shape = 's32[1]{0}', space=sflag, size = 0x4, scoped, tag = 'scoped memory for tpu_custom_call.1']
    #allocation8 [shape = 'u8[16384]{0}', space=vmem, size = 0x4000, scoped, tag = 'input window, operand 3, single buffered']
    #allocation9 [shape = 'u8[16384]{0}', space=vmem, size = 0x4000, scoped, tag = 'input window, operand 5, single buffered']
    #allocation10 [shape = 's32[1]{0}', space=sflag, size = 0x4, scoped, tag = 'scoped memory for tpu_custom_call.1']
    #allocation11 [shape = 'u8[8192]{0}', space=vmem, size = 0x2000, scoped, tag = 'output window, operand 0, single buffered']
    #allocation12 [shape = 'u8[65536]{0}', space=vmem, size = 0x10000, scoped, tag = 'output window, operand 1, single buffered']
    #allocation13 [shape = 's32[1]{0}', space=sflag, size = 0x4, scoped, tag = 'scoped memory for tpu_custom_call.1']
    %14 = vsyncpa [#allocation4], 0
    %15 = vsyncpa [#allocation7], 0
    %16 = vsyncpa [#allocation10], 0
    %17 = vsyncpa [#allocation5], 0
    %18 = vsyncpa [#allocation13], 0
    // Predicated region
    $region2: #{tpu_custom_call.1} parent=1 // pred_check
      _
    $region3: #{tpu_custom_call.1} parent=1 // pred_check_branch
      %20 = sbr.rel (0) target = $region5
    $region4: #{tpu_custom_call.1} parent=1 // pred_region
      %s22 = ssub.s32 256, 256
      %23 = vsyncadd [#allocation4], %s22
      %s24 = sshll.u32 [#allocation3], 4
      %s25 = int_to_ptr.vmem [resolvable:$true] %s24
      %30 = dma.hbm_to_vmem [thread:$0]  %s0, 256, %s25, [#allocation4], 128, 128, 8
    $region5: #{tpu_custom_call.1} parent=1 // pred_fallthru
      _
    // Predicated region
    $region6: #{tpu_custom_call.1} parent=1 // pred_check
      _
    $region7: #{tpu_custom_call.1} parent=1 // pred_check_branch
      %32 = sbr.rel (0) target = $region9
    $region8: #{tpu_custom_call.1} parent=1 // pred_region
      %s34 = ssub.s32 512, 512
      %35 = vsyncadd [#allocation7], %s34
      %s36 = sshll.u32 [#allocation6], 4
      %s37 = int_to_ptr.vmem [resolvable:$true] %s36
      %42 = dma.hbm_to_vmem [thread:$0]  %s1, 512, %s37, [#allocation7], 128, 128, 8
    $region9: #{tpu_custom_call.1} parent=1 // pred_fallthru
      _
    // Predicated region
    $region10: #{tpu_custom_call.1} parent=1 // pred_check
      _
    $region11: #{tpu_custom_call.1} parent=1 // pred_check_branch
      %44 = sbr.rel (0) target = $region13
    $region12: #{tpu_custom_call.1} parent=1 // pred_region
      _
    $region13: #{tpu_custom_call.1} parent=1 // pred_fallthru
      _
    // Predicated region
    $region14: #{tpu_custom_call.1} parent=1 // pred_check
      _
    $region15: #{tpu_custom_call.1} parent=1 // pred_check_branch
      %46 = sbr.rel (0) target = $region17
    $region16: #{tpu_custom_call.1} parent=1 // pred_region
      %s48 = ssub.s32 512, 512
      %49 = vsyncadd [#allocation7], %s48
      %s50 = sshll.u32 [#allocation8], 4
      %s51 = int_to_ptr.vmem [resolvable:$true] %s50
      %56 = dma.hbm_to_vmem [thread:$0]  %s3, 512, %s51, [#allocation7], 128, 128, 8
    $region17: #{tpu_custom_call.1} parent=1 // pred_fallthru
      _
    // Predicated region
    $region18: #{tpu_custom_call.1} parent=1 // pred_check
      _
    $region19: #{tpu_custom_call.1} parent=1 // pred_check_branch
      %58 = sbr.rel (0) target = $region21
    $region20: #{tpu_custom_call.1} parent=1 // pred_region
      _
    $region21: #{tpu_custom_call.1} parent=1 // pred_fallthru
      _
    // Predicated region
    $region22: #{tpu_custom_call.1} parent=1 // pred_check
      _
    $region23: #{tpu_custom_call.1} parent=1 // pred_check_branch
      %60 = sbr.rel (0) target = $region25
    $region24: #{tpu_custom_call.1} parent=1 // pred_region
      %s62 = ssub.s32 512, 512
      %63 = vsyncadd [#allocation10], %s62
      %s64 = sshll.u32 [#allocation9], 4
      %s65 = int_to_ptr.vmem [resolvable:$true] %s64
      %70 = dma.hbm_to_vmem [thread:$0]  %s5, 512, %s65, [#allocation10], 128, 128, 8
    $region25: #{tpu_custom_call.1} parent=1 // pred_fallthru
      _
    // Predicated region
    $region26: #{tpu_custom_call.1} parent=1 // pred_check
      _
    $region27: #{tpu_custom_call.1} parent=1 // pred_check_branch
      %72 = sbr.rel (0) target = $region29
    $region28: #{tpu_custom_call.1} parent=1 // pred_region
      _
    $region29: #{tpu_custom_call.1} parent=1 // pred_fallthru
      _
    // Predicated region
    $region30: #{tpu_custom_call.1} parent=1 // pred_check
      _
    $region31: #{tpu_custom_call.1} parent=1 // pred_check_branch
      %74 = sbr.rel (0) target = $region33
    $region32: #{tpu_custom_call.1} parent=1 // pred_region
      %75 = dma.done [#allocation4], 256
    $region33: #{tpu_custom_call.1} parent=1 // pred_fallthru
      _
    // Predicated region
    $region34: #{tpu_custom_call.1} parent=1 // pred_check
      _
    $region35: #{tpu_custom_call.1} parent=1 // pred_check_branch
      %77 = sbr.rel (0) target = $region37
    $region36: #{tpu_custom_call.1} parent=1 // pred_region
      %78 = dma.done [#allocation7], 512
    $region37: #{tpu_custom_call.1} parent=1 // pred_fallthru
      _
    // Predicated region
    $region38: #{tpu_custom_call.1} parent=1 // pred_check
      _
    $region39: #{tpu_custom_call.1} parent=1 // pred_check_branch
      %80 = sbr.rel (0) target = $region41
    $region40: #{tpu_custom_call.1} parent=1 // pred_region
      %81 = dma.done [#allocation7], 512
    $region41: #{tpu_custom_call.1} parent=1 // pred_fallthru
      _
    // Predicated region
    $region42: #{tpu_custom_call.1} parent=1 // pred_check
      _
    $region43: #{tpu_custom_call.1} parent=1 // pred_check_branch
      %83 = sbr.rel (0) target = $region45
    $region44: #{tpu_custom_call.1} parent=1 // pred_region
      %84 = dma.done [#allocation10], 512
    $region45: #{tpu_custom_call.1} parent=1 // pred_fallthru
      _
    %v85 = vld [vmem:[#allocation3] sm:$0xff]
    %v86 = vld [vmem:[#allocation3 + $0x8] sm:$0xff]
    %v87 = vld [vmem:[#allocation6] sm:$0xff]
    %v88 = vld [vmem:[#allocation6 + $0x8] sm:$0xff]
    %v89 = vld [vmem:[#allocation6 + $0x10] sm:$0xff]
    %v90 = vld [vmem:[#allocation6 + $0x18] sm:$0xff]
    %v91 = vld [vmem:[%s2] sm:$0x1]
    %v93 = vlaneseq
    %v94 = vshrl.u32 %v93, 7
    %v95 = vsub.s32 0, %v94
    %v96 = vrot.slane %v91, %v95
    %vm98 = vcmask 261120
    %v100 = vsel %vm98, %v85, 0
    %v103 = vsel %vm98, %v86, 0
    %105 = vmatprep.subr.mxu0 0.0
    %106 = vmatpush1.msra.mxu0 %v87
    %107 = vmatprep.subr.mxu0 0.0
    %108 = vmatpush1.msra.mxu0 %v88
    %109 = vmatprep.subr.mxu0 0.0
    %110 = vmatpush1.msra.mxu0 %v89
    %111 = vmatprep.subr.mxu0 0.0
    %112 = vmatpush1.msra.mxu0 %v90
    %113 = vmatprep.subr.mxu0 0.0
    %114 = vmatpush1.msra.mxu0 0.0
    %115 = vmatprep.subr.mxu0 0.0
    %116 = vmatpush1.msra.mxu0 0.0
    %117 = vmatprep.subr.mxu0 0.0
    %118 = vmatpush1.msra.mxu0 0.0
    %119 = vmatprep.subr.mxu0 0.0
    %120 = vmatpush1.msra.mxu0 0.0
    %121 = vmatprep.subr.mxu0 0.0
    %122 = vmatpush1.msra.mxu0 0.0
    %123 = vmatprep.subr.mxu0 0.0
    %124 = vmatpush1.msra.mxu0 0.0
    %125 = vmatprep.subr.mxu0 0.0
    %126 = vmatpush1.msra.mxu0 0.0
    %127 = vmatprep.subr.mxu0 0.0
    %128 = vmatpush1.msra.mxu0 0.0
    %129 = vmatprep.subr.mxu0 0.0
    %130 = vmatpush1.msra.mxu0 0.0
    %131 = vmatprep.subr.mxu0 0.0
    %132 = vmatpush1.msra.mxu0 0.0
    %133 = vmatprep.subr.mxu0 0.0
    %134 = vmatpush1.msra.mxu0 0.0
    %135 = vmatprep.subr.mxu0 0.0
    %136 = vmatpush1.msra.mxu0 0.0
    %137 = vmatprep.subr.mxu0 0.0
    %138 = vmatpush1.msra.mxu0 0.0
    %139 = vmatprep.subr.mxu0 0.0
    %140 = vmatpush1.msra.mxu0 0.0
    %141 = vmatprep.subr.mxu0 0.0
    %142 = vmatpush1.msra.mxu0 0.0
    %143 = vmatprep.subr.mxu0 0.0
    %144 = vmatpush1.msra.mxu0 0.0
    %145 = vmatprep.subr.mxu0 0.0
    %146 = vmatpush1.msra.mxu0 0.0
    %147 = vmatprep.subr.mxu0 0.0
    %148 = vmatpush1.msra.mxu0 0.0
    %149 = vmatprep.subr.mxu0 0.0
    %150 = vmatpush1.msra.mxu0 0.0
    %151 = vmatprep.subr.mxu0 0.0
    %152 = vmatpush1.msra.mxu0 0.0
    %153 = vmatprep.subr.mxu0 0.0
    %154 = vmatpush1.msra.mxu0 0.0
    %155 = vmatprep.subr.mxu0 0.0
    %156 = vmatpush1.msra.mxu0 0.0
    %157 = vmatprep.subr.mxu0 0.0
    %158 = vmatpush1.msra.mxu0 0.0
    %159 = vmatprep.subr.mxu0 0.0
    %160 = vmatpush1.msra.mxu0 0.0
    %161 = vmatprep.subr.mxu0 0.0
    %162 = vmatpush1.msra.mxu0 0.0
    %163 = vmatprep.subr.mxu0 0.0
    %164 = vmatpush1.msra.mxu0 0.0
    %165 = vmatprep.subr.mxu0 0.0
    %166 = vmatpush1.msra.mxu0 0.0
    %167 = vmatprep.subr.mxu0 0.0
    %168 = vmatpush1.msra.mxu0 0.0
    %169 = vmatprep.mubr.f32.mxu0 0.0
    %170 = vmatmul.mubr.f32.gmra.mrb[0].mxu0 %v100
    %v171 = vpop.f32.mrb[0].mxu0
    %v172 = vadd.f32 %v96, %v171
    %v173 = vpop.f32.mrb[0].mxu0
    %174 = vmatprep.mubr.f32.mxu0 0.0
    %175 = vmatmul.mubr.f32.gmra.mrb[0].mxu0 %v103
    %v176 = vpop.f32.mrb[0].mxu0
    %v177 = vadd.f32 %v96, %v176
    %v178 = vpop.f32.mrb[0].mxu0
    %179 = vdwg.mxu0
    %v180 = vmax.f32 %v172, 0.0
    %v181 = vmax.f32 %v177, 0.0
    %v182 = vmul.f32 %v180, 0.5
    %v183 = vmul.f32 %v181, 0.5
    %v184 = vld [vmem:[#allocation8] sm:$0xff]
    %v185 = vld [vmem:[#allocation8 + $0x8] sm:$0xff]
    %v186 = vld [vmem:[#allocation8 + $0x10] sm:$0xff]
    %v187 = vld [vmem:[#allocation8 + $0x18] sm:$0xff]
    %v188 = vld [vmem:[%s4] sm:$0x1]
    %v190 = vlaneseq
    %v191 = vshrl.u32 %v190, 7
    %v192 = vsub.s32 0, %v191
    %v193 = vrot.slane %v188, %v192
    %195 = vmatprep.subr.mxu0 0.0
    %196 = vmatpush1.msra.mxu0 %v184
    %197 = vmatprep.subr.mxu0 0.0
    %198 = vmatpush1.msra.mxu0 %v185
    %199 = vmatprep.subr.mxu0 0.0
    %200 = vmatpush1.msra.mxu0 %v186
    %201 = vmatprep.subr.mxu0 0.0
    %202 = vmatpush1.msra.mxu0 %v187
    %203 = vmatprep.subr.mxu0 0.0
    %204 = vmatpush1.msra.mxu0 0.0
    %205 = vmatprep.subr.mxu0 0.0
    %206 = vmatpush1.msra.mxu0 0.0
    %207 = vmatprep.subr.mxu0 0.0
    %208 = vmatpush1.msra.mxu0 0.0
    %209 = vmatprep.subr.mxu0 0.0
    %210 = vmatpush1.msra.mxu0 0.0
    %211 = vmatprep.subr.mxu0 0.0
    %212 = vmatpush1.msra.mxu0 0.0
    %213 = vmatprep.subr.mxu0 0.0
    %214 = vmatpush1.msra.mxu0 0.0
    %215 = vmatprep.subr.mxu0 0.0
    %216 = vmatpush1.msra.mxu0 0.0
    %217 = vmatprep.subr.mxu0 0.0
    %218 = vmatpush1.msra.mxu0 0.0
    %219 = vmatprep.subr.mxu0 0.0
    %220 = vmatpush1.msra.mxu0 0.0
    %221 = vmatprep.subr.mxu0 0.0
    %222 = vmatpush1.msra.mxu0 0.0
    %223 = vmatprep.subr.mxu0 0.0
    %224 = vmatpush1.msra.mxu0 0.0
    %225 = vmatprep.subr.mxu0 0.0
    %226 = vmatpush1.msra.mxu0 0.0
    %227 = vmatprep.subr.mxu0 0.0
    %228 = vmatpush1.msra.mxu0 0.0
    %229 = vmatprep.subr.mxu0 0.0
    %230 = vmatpush1.msra.mxu0 0.0
    %231 = vmatprep.subr.mxu0 0.0
    %232 = vmatpush1.msra.mxu0 0.0
    %233 = vmatprep.subr.mxu0 0.0
    %234 = vmatpush1.msra.mxu0 0.0
    %235 = vmatprep.subr.mxu0 0.0
    %236 = vmatpush1.msra.mxu0 0.0
    %237 = vmatprep.subr.mxu0 0.0
    %238 = vmatpush1.msra.mxu0 0.0
    %239 = vmatprep.subr.mxu0 0.0
    %240 = vmatpush1.msra.mxu0 0.0
    %241 = vmatprep.subr.mxu0 0.0
    %242 = vmatpush1.msra.mxu0 0.0
    %243 = vmatprep.subr.mxu0 0.0
    %244 = vmatpush1.msra.mxu0 0.0
    %245 = vmatprep.subr.mxu0 0.0
    %246 = vmatpush1.msra.mxu0 0.0
    %247 = vmatprep.subr.mxu0 0.0
    %248 = vmatpush1.msra.mxu0 0.0
    %249 = vmatprep.subr.mxu0 0.0
    %250 = vmatpush1.msra.mxu0 0.0
    %251 = vmatprep.subr.mxu0 0.0
    %252 = vmatpush1.msra.mxu0 0.0
    %253 = vmatprep.subr.mxu0 0.0
    %254 = vmatpush1.msra.mxu0 0.0
    %255 = vmatprep.subr.mxu0 0.0
    %256 = vmatpush1.msra.mxu0 0.0
    %257 = vmatprep.subr.mxu0 0.0
    %258 = vmatpush1.msra.mxu0 0.0
    %259 = vmatprep.mubr.f32.mxu0 0.0
    %260 = vmatmul.mubr.f32.gmra.mrb[0].mxu0 %v100
    %v261 = vpop.f32.mrb[0].mxu0
    %v262 = vadd.f32 %v193, %v261
    %v263 = vpop.f32.mrb[0].mxu0
    %264 = vmatprep.mubr.f32.mxu0 0.0
    %265 = vmatmul.mubr.f32.gmra.mrb[0].mxu0 %v103
    %v266 = vpop.f32.mrb[0].mxu0
    %v267 = vadd.f32 %v193, %v266
    %v268 = vpop.f32.mrb[0].mxu0
    %269 = vdwg.mxu0
    %v270 = vmax.f32 %v262, 0.0
    %v271 = vmax.f32 %v267, 0.0
    %v272 = vld [vmem:[#allocation9] sm:$0xff]
    %v273 = vld [vmem:[#allocation9 + $0x8] sm:$0xff]
    %v274 = vld [vmem:[#allocation9 + $0x10] sm:$0xff]
    %v275 = vld [vmem:[#allocation9 + $0x18] sm:$0xff]
    %v276 = vld [vmem:[%s6] sm:$0x1]
    %v278 = vlaneseq
    %v279 = vshrl.u32 %v278, 7
    %v280 = vsub.s32 0, %v279
    %v281 = vrot.slane %v276, %v280
    %283 = vmatprep.subr.mxu0 0.0
    %284 = vmatpush1.msra.mxu0 %v272
    %285 = vmatprep.subr.mxu0 0.0
    %286 = vmatpush1.msra.mxu0 %v273
    %287 = vmatprep.subr.mxu0 0.0
    %288 = vmatpush1.msra.mxu0 %v274
    %289 = vmatprep.subr.mxu0 0.0
    %290 = vmatpush1.msra.mxu0 %v275
    %291 = vmatprep.subr.mxu0 0.0
    %292 = vmatpush1.msra.mxu0 0.0
    %293 = vmatprep.subr.mxu0 0.0
    %294 = vmatpush1.msra.mxu0 0.0
    %295 = vmatprep.subr.mxu0 0.0
    %296 = vmatpush1.msra.mxu0 0.0
    %297 = vmatprep.subr.mxu0 0.0
    %298 = vmatpush1.msra.mxu0 0.0
    %299 = vmatprep.subr.mxu0 0.0
    %300 = vmatpush1.msra.mxu0 0.0
    %301 = vmatprep.subr.mxu0 0.0
    %302 = vmatpush1.msra.mxu0 0.0
    %303 = vmatprep.subr.mxu0 0.0
    %304 = vmatpush1.msra.mxu0 0.0
    %305 = vmatprep.subr.mxu0 0.0
    %306 = vmatpush1.msra.mxu0 0.0
    %307 = vmatprep.subr.mxu0 0.0
    %308 = vmatpush1.msra.mxu0 0.0
    %309 = vmatprep.subr.mxu0 0.0
    %310 = vmatpush1.msra.mxu0 0.0
    %311 = vmatprep.subr.mxu0 0.0
    %312 = vmatpush1.msra.mxu0 0.0
    %313 = vmatprep.subr.mxu0 0.0
    %314 = vmatpush1.msra.mxu0 0.0
    %315 = vmatprep.subr.mxu0 0.0
    %316 = vmatpush1.msra.mxu0 0.0
    %317 = vmatprep.subr.mxu0 0.0
    %318 = vmatpush1.msra.mxu0 0.0
    %319 = vmatprep.subr.mxu0 0.0
    %320 = vmatpush1.msra.mxu0 0.0
    %321 = vmatprep.subr.mxu0 0.0
    %322 = vmatpush1.msra.mxu0 0.0
    %323 = vmatprep.subr.mxu0 0.0
    %324 = vmatpush1.msra.mxu0 0.0
    %325 = vmatprep.subr.mxu0 0.0
    %326 = vmatpush1.msra.mxu0 0.0
    %327 = vmatprep.subr.mxu0 0.0
    %328 = vmatpush1.msra.mxu0 0.0
    %329 = vmatprep.subr.mxu0 0.0
    %330 = vmatpush1.msra.mxu0 0.0
    %331 = vmatprep.subr.mxu0 0.0
    %332 = vmatpush1.msra.mxu0 0.0
    %333 = vmatprep.subr.mxu0 0.0
    %334 = vmatpush1.msra.mxu0 0.0
    %335 = vmatprep.subr.mxu0 0.0
    %336 = vmatpush1.msra.mxu0 0.0
    %337 = vmatprep.subr.mxu0 0.0
    %338 = vmatpush1.msra.mxu0 0.0
    %339 = vmatprep.subr.mxu0 0.0
    %340 = vmatpush1.msra.mxu0 0.0
    %341 = vmatprep.subr.mxu0 0.0
    %342 = vmatpush1.msra.mxu0 0.0
    %343 = vmatprep.subr.mxu0 0.0
    %344 = vmatpush1.msra.mxu0 0.0
    %345 = vmatprep.subr.mxu0 0.0
    %346 = vmatpush1.msra.mxu0 0.0
    %347 = vmatprep.mubr.f32.mxu0 0.0
    %348 = vmatmul.mubr.f32.gmra.mrb[0].mxu0 %v100
    %v349 = vpop.f32.mrb[0].mxu0
    %v350 = vadd.f32 %v281, %v349
    %v351 = vpop.f32.mrb[0].mxu0
    %352 = vmatprep.mubr.f32.mxu0 0.0
    %353 = vmatmul.mubr.f32.gmra.mrb[0].mxu0 %v103
    %v354 = vpop.f32.mrb[0].mxu0
    %v355 = vadd.f32 %v281, %v354
    %v356 = vpop.f32.mrb[0].mxu0
    %357 = vdwg.mxu0
    %v358 = vmax.f32 %v350, 0.0
    %v359 = vmax.f32 %v355, 0.0
    %vm360 = vcmask 31744
    %v362 = vsel %vm360, %v182, 0
    %v365 = vsel %vm360, %v270, 0
    %367 = vmatprep.subr.mxu0 0.0
    %368 = vmatpush1.xpose.msra.mxu0 %v365
    %369 = vmatprep.subr.mxu0 0.0
    %370 = vmatpush1.xpose.msra.mxu0 0.0
    %371 = vmatprep.subr.mxu0 0.0
    %372 = vmatpush1.xpose.msra.mxu0 0.0
    %373 = vmatprep.subr.mxu0 0.0
    %374 = vmatpush1.xpose.msra.mxu0 0.0
    %375 = vmatprep.subr.mxu0 0.0
    %376 = vmatpush1.xpose.msra.mxu0 0.0
    %377 = vmatprep.subr.mxu0 0.0
    %378 = vmatpush1.xpose.msra.mxu0 0.0
    %379 = vmatprep.subr.mxu0 0.0
    %380 = vmatpush1.xpose.msra.mxu0 0.0
    %381 = vmatprep.subr.mxu0 0.0
    %382 = vmatpush1.xpose.msra.mxu0 0.0
    %383 = vmatprep.subr.mxu0 0.0
    %384 = vmatpush1.xpose.msra.mxu0 0.0
    %385 = vmatprep.subr.mxu0 0.0
    %386 = vmatpush1.xpose.msra.mxu0 0.0
    %387 = vmatprep.subr.mxu0 0.0
    %388 = vmatpush1.xpose.msra.mxu0 0.0
    %389 = vmatprep.subr.mxu0 0.0
    %390 = vmatpush1.xpose.msra.mxu0 0.0
    %391 = vmatprep.subr.mxu0 0.0
    %392 = vmatpush1.xpose.msra.mxu0 0.0
    %393 = vmatprep.subr.mxu0 0.0
    %394 = vmatpush1.xpose.msra.mxu0 0.0
    %395 = vmatprep.subr.mxu0 0.0
    %396 = vmatpush1.xpose.msra.mxu0 0.0
    %397 = vmatprep.subr.mxu0 0.0
    %398 = vmatpush1.xpose.msra.mxu0 0.0
    %399 = vmatprep.subr.mxu0 0.0
    %400 = vmatpush1.xpose.msra.mxu0 0.0
    %401 = vmatprep.subr.mxu0 0.0
    %402 = vmatpush1.xpose.msra.mxu0 0.0
    %403 = vmatprep.subr.mxu0 0.0
    %404 = vmatpush1.xpose.msra.mxu0 0.0
    %405 = vmatprep.subr.mxu0 0.0
    %406 = vmatpush1.xpose.msra.mxu0 0.0
    %407 = vmatprep.subr.mxu0 0.0
    %408 = vmatpush1.xpose.msra.mxu0 0.0
    %409 = vmatprep.subr.mxu0 0.0
    %410 = vmatpush1.xpose.msra.mxu0 0.0
    %411 = vmatprep.subr.mxu0 0.0
    %412 = vmatpush1.xpose.msra.mxu0 0.0
    %413 = vmatprep.subr.mxu0 0.0
    %414 = vmatpush1.xpose.msra.mxu0 0.0
    %415 = vmatprep.subr.mxu0 0.0
    %416 = vmatpush1.xpose.msra.mxu0 0.0
    %417 = vmatprep.subr.mxu0 0.0
    %418 = vmatpush1.xpose.msra.mxu0 0.0
    %419 = vmatprep.subr.mxu0 0.0
    %420 = vmatpush1.xpose.msra.mxu0 0.0
    %421 = vmatprep.subr.mxu0 0.0
    %422 = vmatpush1.xpose.msra.mxu0 0.0
    %423 = vmatprep.subr.mxu0 0.0
    %424 = vmatpush1.xpose.msra.mxu0 0.0
    %425 = vmatprep.subr.mxu0 0.0
    %426 = vmatpush1.xpose.msra.mxu0 0.0
    %427 = vmatprep.subr.mxu0 0.0
    %428 = vmatpush1.xpose.msra.mxu0 0.0
    %429 = vmatprep.subr.mxu0 0.0
    %430 = vmatpush1.xpose.msra.mxu0 0.0
    %431 = vmatprep.mubr.f32.mxu0 0.0
    %432 = vmatmul.mubr.f32.gmra.mrb[0].mxu0 %v362
    %v433 = vpop.f32.mrb[0].mxu0
    %v434 = vadd.f32 0.0, %v433
    %v435 = vpop.f32.mrb[0].mxu0
    %436 = vdwg.mxu0
    %vm437 = vcmask 64512
    %v438 = vsel %vm437, %v434, -inf
    %439 = vmax.xlane.f32.xlu0 %v438
    %v440 = vpop.xlane.xlu0 %439
    %v441 = vsub.f32 %v434, %v440
    %v442 = vmul.f32 %v441, 1.442695
    %v443 = vpow.pop %v442
    %v444 = vsel %vm437, %v443, 0.0
    %445 = vadd.xlane.f32.xlu0 %v444
    %v446 = vpop.xlane.xlu0 %445
    %v447 = vrcp.pop %v446
    %v448 = vmul.f32 %v443, %v447
    %v450 = vsel %vm437, %v448, 0
    %452 = vmatprep.subr.mxu0 0.0
    %453 = vmatpush1.msra.mxu0 %v358
    %454 = vmatprep.subr.mxu0 0.0
    %455 = vmatpush1.msra.mxu0 0.0
    %456 = vmatprep.subr.mxu0 0.0
    %457 = vmatpush1.msra.mxu0 0.0
    %458 = vmatprep.subr.mxu0 0.0
    %459 = vmatpush1.msra.mxu0 0.0
    %460 = vmatprep.subr.mxu0 0.0
    %461 = vmatpush1.msra.mxu0 0.0
    %462 = vmatprep.subr.mxu0 0.0
    %463 = vmatpush1.msra.mxu0 0.0
    %464 = vmatprep.subr.mxu0 0.0
    %465 = vmatpush1.msra.mxu0 0.0
    %466 = vmatprep.subr.mxu0 0.0
    %467 = vmatpush1.msra.mxu0 0.0
    %468 = vmatprep.subr.mxu0 0.0
    %469 = vmatpush1.msra.mxu0 0.0
    %470 = vmatprep.subr.mxu0 0.0
    %471 = vmatpush1.msra.mxu0 0.0
    %472 = vmatprep.subr.mxu0 0.0
    %473 = vmatpush1.msra.mxu0 0.0
    %474 = vmatprep.subr.mxu0 0.0
    %475 = vmatpush1.msra.mxu0 0.0
    %476 = vmatprep.subr.mxu0 0.0
    %477 = vmatpush1.msra.mxu0 0.0
    %478 = vmatprep.subr.mxu0 0.0
    %479 = vmatpush1.msra.mxu0 0.0
    %480 = vmatprep.subr.mxu0 0.0
    %481 = vmatpush1.msra.mxu0 0.0
    %482 = vmatprep.subr.mxu0 0.0
    %483 = vmatpush1.msra.mxu0 0.0
    %484 = vmatprep.subr.mxu0 0.0
    %485 = vmatpush1.msra.mxu0 0.0
    %486 = vmatprep.subr.mxu0 0.0
    %487 = vmatpush1.msra.mxu0 0.0
    %488 = vmatprep.subr.mxu0 0.0
    %489 = vmatpush1.msra.mxu0 0.0
    %490 = vmatprep.subr.mxu0 0.0
    %491 = vmatpush1.msra.mxu0 0.0
    %492 = vmatprep.subr.mxu0 0.0
    %493 = vmatpush1.msra.mxu0 0.0
    %494 = vmatprep.subr.mxu0 0.0
    %495 = vmatpush1.msra.mxu0 0.0
    %496 = vmatprep.subr.mxu0 0.0
    %497 = vmatpush1.msra.mxu0 0.0
    %498 = vmatprep.subr.mxu0 0.0
    %499 = vmatpush1.msra.mxu0 0.0
    %500 = vmatprep.subr.mxu0 0.0
    %501 = vmatpush1.msra.mxu0 0.0
    %502 = vmatprep.subr.mxu0 0.0
    %503 = vmatpush1.msra.mxu0 0.0
    %504 = vmatprep.subr.mxu0 0.0
    %505 = vmatpush1.msra.mxu0 0.0
    %506 = vmatprep.subr.mxu0 0.0
    %507 = vmatpush1.msra.mxu0 0.0
    %508 = vmatprep.subr.mxu0 0.0
    %509 = vmatpush1.msra.mxu0 0.0
    %510 = vmatprep.subr.mxu0 0.0
    %511 = vmatpush1.msra.mxu0 0.0
    %512 = vmatprep.subr.mxu0 0.0
    %513 = vmatpush1.msra.mxu0 0.0
    %514 = vmatprep.subr.mxu0 0.0
    %515 = vmatpush1.msra.mxu0 0.0
    %516 = vmatprep.mubr.f32.mxu0 0.0
    %517 = vmatmul.mubr.f32.gmra.mrb[0].mxu0 %v450
    %v518 = vpop.f32.mrb[0].mxu0
    %v519 = vadd.f32 0.0, %v518
    %v520 = vpop.f32.mrb[0].mxu0
    %521 = vdwg.mxu0
    %522 = vst.msk [vmem:[#allocation2] sm:$0xff] %vm360, %v519
    %523 = vrot.lane.b32.xlu0 %v182, 124
    %v524 = vpop.permute.xlu0 %523
    %525 = vrot.lane.b32.xlu0 %v270, 124
    %v526 = vpop.permute.xlu0 %525
    %v527 = vsel %vm360, %v524, 0
    %v529 = vsel %vm360, %v526, 0
    %531 = vmatprep.subr.mxu0 0.0
    %532 = vmatpush1.xpose.msra.mxu0 %v529
    %533 = vmatprep.subr.mxu0 0.0
    %534 = vmatpush1.xpose.msra.mxu0 0.0
    %535 = vmatprep.subr.mxu0 0.0
    %536 = vmatpush1.xpose.msra.mxu0 0.0
    %537 = vmatprep.subr.mxu0 0.0
    %538 = vmatpush1.xpose.msra.mxu0 0.0
    %539 = vmatprep.subr.mxu0 0.0
    %540 = vmatpush1.xpose.msra.mxu0 0.0
    %541 = vmatprep.subr.mxu0 0.0
    %542 = vmatpush1.xpose.msra.mxu0 0.0
    %543 = vmatprep.subr.mxu0 0.0
    %544 = vmatpush1.xpose.msra.mxu0 0.0
    %545 = vmatprep.subr.mxu0 0.0
    %546 = vmatpush1.xpose.msra.mxu0 0.0
    %547 = vmatprep.subr.mxu0 0.0
    %548 = vmatpush1.xpose.msra.mxu0 0.0
    %549 = vmatprep.subr.mxu0 0.0
    %550 = vmatpush1.xpose.msra.mxu0 0.0
    %551 = vmatprep.subr.mxu0 0.0
    %552 = vmatpush1.xpose.msra.mxu0 0.0
    %553 = vmatprep.subr.mxu0 0.0
    %554 = vmatpush1.xpose.msra.mxu0 0.0
    %555 = vmatprep.subr.mxu0 0.0
    %556 = vmatpush1.xpose.msra.mxu0 0.0
    %557 = vmatprep.subr.mxu0 0.0
    %558 = vmatpush1.xpose.msra.mxu0 0.0
    %559 = vmatprep.subr.mxu0 0.0
    %560 = vmatpush1.xpose.msra.mxu0 0.0
    %561 = vmatprep.subr.mxu0 0.0
    %562 = vmatpush1.xpose.msra.mxu0 0.0
    %563 = vmatprep.subr.mxu0 0.0
    %564 = vmatpush1.xpose.msra.mxu0 0.0
    %565 = vmatprep.subr.mxu0 0.0
    %566 = vmatpush1.xpose.msra.mxu0 0.0
    %567 = vmatprep.subr.mxu0 0.0
    %568 = vmatpush1.xpose.msra.mxu0 0.0
    %569 = vmatprep.subr.mxu0 0.0
    %570 = vmatpush1.xpose.msra.mxu0 0.0
    %571 = vmatprep.subr.mxu0 0.0
    %572 = vmatpush1.xpose.msra.mxu0 0.0
    %573 = vmatprep.subr.mxu0 0.0
    %574 = vmatpush1.xpose.msra.mxu0 0.0
    %575 = vmatprep.subr.mxu0 0.0
    %576 = vmatpush1.xpose.msra.mxu0 0.0
    %577 = vmatprep.subr.mxu0 0.0
    %578 = vmatpush1.xpose.msra.mxu0 0.0
    %579 = vmatprep.subr.mxu0 0.0
    %580 = vmatpush1.xpose.msra.mxu0 0.0
    %581 = vmatprep.subr.mxu0 0.0
    %582 = vmatpush1.xpose.msra.mxu0 0.0
    %583 = vmatprep.subr.mxu0 0.0
    %584 = vmatpush1.xpose.msra.mxu0 0.0
    %585 = vmatprep.subr.mxu0 0.0
    %586 = vmatpush1.xpose.msra.mxu0 0.0
    %587 = vmatprep.subr.mxu0 0.0
    %588 = vmatpush1.xpose.msra.mxu0 0.0
    %589 = vmatprep.subr.mxu0 0.0
    %590 = vmatpush1.xpose.msra.mxu0 0.0
    %591 = vmatprep.subr.mxu0 0.0
    %592 = vmatpush1.xpose.msra.mxu0 0.0
    %593 = vmatprep.subr.mxu0 0.0
    %594 = vmatpush1.xpose.msra.mxu0 0.0
    %595 = vmatprep.mubr.f32.mxu0 0.0
    %596 = vmatmul.mubr.f32.gmra.mrb[0].mxu0 %v527
    %v597 = vpop.f32.mrb[0].mxu0
    %v598 = vadd.f32 0.0, %v597
    %v599 = vpop.f32.mrb[0].mxu0
    %600 = vdwg.mxu0
    %v601 = vsel %vm437, %v598, -inf
    %602 = vmax.xlane.f32.xlu0 %v601
    %v603 = vpop.xlane.xlu0 %602
    %v604 = vsub.f32 %v598, %v603
    %v605 = vmul.f32 %v604, 1.442695
    %v606 = vpow.pop %v605
    %v607 = vsel %vm437, %v606, 0.0
    %608 = vadd.xlane.f32.xlu0 %v607
    %v609 = vpop.xlane.xlu0 %608
    %v610 = vrcp.pop %v609
    %v611 = vmul.f32 %v606, %v610
    %613 = vrot.lane.b32.xlu0 %v358, 124
    %v614 = vpop.permute.xlu0 %613
    %v617 = vsel %vm437, %v611, 0
    %619 = vmatprep.subr.mxu0 0.0
    %620 = vmatpush1.msra.mxu0 %v614
    %621 = vmatprep.subr.mxu0 0.0
    %622 = vmatpush1.msra.mxu0 0.0
    %623 = vmatprep.subr.mxu0 0.0
    %624 = vmatpush1.msra.mxu0 0.0
    %625 = vmatprep.subr.mxu0 0.0
    %626 = vmatpush1.msra.mxu0 0.0
    %627 = vmatprep.subr.mxu0 0.0
    %628 = vmatpush1.msra.mxu0 0.0
    %629 = vmatprep.subr.mxu0 0.0
    %630 = vmatpush1.msra.mxu0 0.0
    %631 = vmatprep.subr.mxu0 0.0
    %632 = vmatpush1.msra.mxu0 0.0
    %633 = vmatprep.subr.mxu0 0.0
    %634 = vmatpush1.msra.mxu0 0.0
    %635 = vmatprep.subr.mxu0 0.0
    %636 = vmatpush1.msra.mxu0 0.0
    %637 = vmatprep.subr.mxu0 0.0
    %638 = vmatpush1.msra.mxu0 0.0
    %639 = vmatprep.subr.mxu0 0.0
    %640 = vmatpush1.msra.mxu0 0.0
    %641 = vmatprep.subr.mxu0 0.0
    %642 = vmatpush1.msra.mxu0 0.0
    %643 = vmatprep.subr.mxu0 0.0
    %644 = vmatpush1.msra.mxu0 0.0
    %645 = vmatprep.subr.mxu0 0.0
    %646 = vmatpush1.msra.mxu0 0.0
    %647 = vmatprep.subr.mxu0 0.0
    %648 = vmatpush1.msra.mxu0 0.0
    %649 = vmatprep.subr.mxu0 0.0
    %650 = vmatpush1.msra.mxu0 0.0
    %651 = vmatprep.subr.mxu0 0.0
    %652 = vmatpush1.msra.mxu0 0.0
    %653 = vmatprep.subr.mxu0 0.0
    %654 = vmatpush1.msra.mxu0 0.0
    %655 = vmatprep.subr.mxu0 0.0
    %656 = vmatpush1.msra.mxu0 0.0
    %657 = vmatprep.subr.mxu0 0.0
    %658 = vmatpush1.msra.mxu0 0.0
    %659 = vmatprep.subr.mxu0 0.0
    %660 = vmatpush1.msra.mxu0 0.0
    %661 = vmatprep.subr.mxu0 0.0
    %662 = vmatpush1.msra.mxu0 0.0
    %663 = vmatprep.subr.mxu0 0.0
    %664 = vmatpush1.msra.mxu0 0.0
    %665 = vmatprep.subr.mxu0 0.0
    %666 = vmatpush1.msra.mxu0 0.0
    %667 = vmatprep.subr.mxu0 0.0
    %668 = vmatpush1.msra.mxu0 0.0
    %669 = vmatprep.subr.mxu0 0.0
    %670 = vmatpush1.msra.mxu0 0.0
    %671 = vmatprep.subr.mxu0 0.0
    %672 = vmatpush1.msra.mxu0 0.0
    %673 = vmatprep.subr.mxu0 0.0
    %674 = vmatpush1.msra.mxu0 0.0
    %675 = vmatprep.subr.mxu0 0.0
    %676 = vmatpush1.msra.mxu0 0.0
    %677 = vmatprep.subr.mxu0 0.0
    %678 = vmatpush1.msra.mxu0 0.0
    %679 = vmatprep.subr.mxu0 0.0
    %680 = vmatpush1.msra.mxu0 0.0
    %681 = vmatprep.subr.mxu0 0.0
    %682 = vmatpush1.msra.mxu0 0.0
    %683 = vmatprep.mubr.f32.mxu0 0.0
    %684 = vmatmul.mubr.f32.gmra.mrb[0].mxu0 %v617
    %v685 = vpop.f32.mrb[0].mxu0
    %v686 = vadd.f32 0.0, %v685
    %v687 = vpop.f32.mrb[0].mxu0
    %688 = vdwg.mxu0
    %690 = vrot.lane.b32.xlu0 %v686, 4
    %v691 = vpop.permute.xlu0 %690
    %vm693 = vcmask 64544
    %694 = vst.msk [vmem:[#allocation2] sm:$0xff] %vm693, %v691
    %695 = vrot.lane.b32.xlu0 %v182, 120
    %v696 = vpop.permute.xlu0 %695
    %697 = vrot.lane.b32.xlu0 %v270, 120
    %v698 = vpop.permute.xlu0 %697
    %v699 = vsel %vm360, %v696, 0
    %v701 = vsel %vm360, %v698, 0
    %703 = vmatprep.subr.mxu0 0.0
    %704 = vmatpush1.xpose.msra.mxu0 %v701
    %705 = vmatprep.subr.mxu0 0.0
    %706 = vmatpush1.xpose.msra.mxu0 0.0
    %707 = vmatprep.subr.mxu0 0.0
    %708 = vmatpush1.xpose.msra.mxu0 0.0
    %709 = vmatprep.subr.mxu0 0.0
    %710 = vmatpush1.xpose.msra.mxu0 0.0
    %711 = vmatprep.subr.mxu0 0.0
    %712 = vmatpush1.xpose.msra.mxu0 0.0
    %713 = vmatprep.subr.mxu0 0.0
    %714 = vmatpush1.xpose.msra.mxu0 0.0
    %715 = vmatprep.subr.mxu0 0.0
    %716 = vmatpush1.xpose.msra.mxu0 0.0
    %717 = vmatprep.subr.mxu0 0.0
    %718 = vmatpush1.xpose.msra.mxu0 0.0
    %719 = vmatprep.subr.mxu0 0.0
    %720 = vmatpush1.xpose.msra.mxu0 0.0
    %721 = vmatprep.subr.mxu0 0.0
    %722 = vmatpush1.xpose.msra.mxu0 0.0
    %723 = vmatprep.subr.mxu0 0.0
    %724 = vmatpush1.xpose.msra.mxu0 0.0
    %725 = vmatprep.subr.mxu0 0.0
    %726 = vmatpush1.xpose.msra.mxu0 0.0
    %727 = vmatprep.subr.mxu0 0.0
    %728 = vmatpush1.xpose.msra.mxu0 0.0
    %729 = vmatprep.subr.mxu0 0.0
    %730 = vmatpush1.xpose.msra.mxu0 0.0
    %731 = vmatprep.subr.mxu0 0.0
    %732 = vmatpush1.xpose.msra.mxu0 0.0
    %733 = vmatprep.subr.mxu0 0.0
    %734 = vmatpush1.xpose.msra.mxu0 0.0
    %735 = vmatprep.subr.mxu0 0.0
    %736 = vmatpush1.xpose.msra.mxu0 0.0
    %737 = vmatprep.subr.mxu0 0.0
    %738 = vmatpush1.xpose.msra.mxu0 0.0
    %739 = vmatprep.subr.mxu0 0.0
    %740 = vmatpush1.xpose.msra.mxu0 0.0
    %741 = vmatprep.subr.mxu0 0.0
    %742 = vmatpush1.xpose.msra.mxu0 0.0
    %743 = vmatprep.subr.mxu0 0.0
    %744 = vmatpush1.xpose.msra.mxu0 0.0
    %745 = vmatprep.subr.mxu0 0.0
    %746 = vmatpush1.xpose.msra.mxu0 0.0
    %747 = vmatprep.subr.mxu0 0.0
    %748 = vmatpush1.xpose.msra.mxu0 0.0
    %749 = vmatprep.subr.mxu0 0.0
    %750 = vmatpush1.xpose.msra.mxu0 0.0
    %751 = vmatprep.subr.mxu0 0.0
    %752 = vmatpush1.xpose.msra.mxu0 0.0
    %753 = vmatprep.subr.mxu0 0.0
    %754 = vmatpush1.xpose.msra.mxu0 0.0
    %755 = vmatprep.subr.mxu0 0.0
    %756 = vmatpush1.xpose.msra.mxu0 0.0
    %757 = vmatprep.subr.mxu0 0.0
    %758 = vmatpush1.xpose.msra.mxu0 0.0
    %759 = vmatprep.subr.mxu0 0.0
    %760 = vmatpush1.xpose.msra.mxu0 0.0
    %761 = vmatprep.subr.mxu0 0.0
    %762 = vmatpush1.xpose.msra.mxu0 0.0
    %763 = vmatprep.subr.mxu0 0.0
    %764 = vmatpush1.xpose.msra.mxu0 0.0
    %765 = vmatprep.subr.mxu0 0.0
    %766 = vmatpush1.xpose.msra.mxu0 0.0
    %767 = vmatprep.mubr.f32.mxu0 0.0
    %768 = vmatmul.mubr.f32.gmra.mrb[0].mxu0 %v699
    %v769 = vpop.f32.mrb[0].mxu0
    %v770 = vadd.f32 0.0, %v769
    %v771 = vpop.f32.mrb[0].mxu0
    %772 = vdwg.mxu0
    %v773 = vsel %vm437, %v770, -inf
    %774 = vmax.xlane.f32.xlu0 %v773
    %v775 = vpop.xlane.xlu0 %774
    %v776 = vsub.f32 %v770, %v775
    %v777 = vmul.f32 %v776, 1.442695
    %v778 = vpow.pop %v777
    %v779 = vsel %vm437, %v778, 0.0
    %780 = vadd.xlane.f32.xlu0 %v779
    %v781 = vpop.xlane.xlu0 %780
    %v782 = vrcp.pop %v781
    %v783 = vmul.f32 %v778, %v782
    %784 = vrot.lane.b32.xlu0 %v358, 120
    %v785 = vpop.permute.xlu0 %784
    %v788 = vsel %vm437, %v783, 0
    %790 = vmatprep.subr.mxu0 0.0
    %791 = vmatpush1.msra.mxu0 %v785
    %792 = vmatprep.subr.mxu0 0.0
    %793 = vmatpush1.msra.mxu0 0.0
    %794 = vmatprep.subr.mxu0 0.0
    %795 = vmatpush1.msra.mxu0 0.0
    %796 = vmatprep.subr.mxu0 0.0
    %797 = vmatpush1.msra.mxu0 0.0
    %798 = vmatprep.subr.mxu0 0.0
    %799 = vmatpush1.msra.mxu0 0.0
    %800 = vmatprep.subr.mxu0 0.0
    %801 = vmatpush1.msra.mxu0 0.0
    %802 = vmatprep.subr.mxu0 0.0
    %803 = vmatpush1.msra.mxu0 0.0
    %804 = vmatprep.subr.mxu0 0.0
    %805 = vmatpush1.msra.mxu0 0.0
    %806 = vmatprep.subr.mxu0 0.0
    %807 = vmatpush1.msra.mxu0 0.0
    %808 = vmatprep.subr.mxu0 0.0
    %809 = vmatpush1.msra.mxu0 0.0
    %810 = vmatprep.subr.mxu0 0.0
    %811 = vmatpush1.msra.mxu0 0.0
    %812 = vmatprep.subr.mxu0 0.0
    %813 = vmatpush1.msra.mxu0 0.0
    %814 = vmatprep.subr.mxu0 0.0
    %815 = vmatpush1.msra.mxu0 0.0
    %816 = vmatprep.subr.mxu0 0.0
    %817 = vmatpush1.msra.mxu0 0.0
    %818 = vmatprep.subr.mxu0 0.0
    %819 = vmatpush1.msra.mxu0 0.0
    %820 = vmatprep.subr.mxu0 0.0
    %821 = vmatpush1.msra.mxu0 0.0
    %822 = vmatprep.subr.mxu0 0.0
    %823 = vmatpush1.msra.mxu0 0.0
    %824 = vmatprep.subr.mxu0 0.0
    %825 = vmatpush1.msra.mxu0 0.0
    %826 = vmatprep.subr.mxu0 0.0
    %827 = vmatpush1.msra.mxu0 0.0
    %828 = vmatprep.subr.mxu0 0.0
    %829 = vmatpush1.msra.mxu0 0.0
    %830 = vmatprep.subr.mxu0 0.0
    %831 = vmatpush1.msra.mxu0 0.0
    %832 = vmatprep.subr.mxu0 0.0
    %833 = vmatpush1.msra.mxu0 0.0
    %834 = vmatprep.subr.mxu0 0.0
    %835 = vmatpush1.msra.mxu0 0.0
    %836 = vmatprep.subr.mxu0 0.0
    %837 = vmatpush1.msra.mxu0 0.0
    %838 = vmatprep.subr.mxu0 0.0
    %839 = vmatpush1.msra.mxu0 0.0
    %840 = vmatprep.subr.mxu0 0.0
    %841 = vmatpush1.msra.mxu0 0.0
    %842 = vmatprep.subr.mxu0 0.0
    %843 = vmatpush1.msra.mxu0 0.0
    %844 = vmatprep.subr.mxu0 0.0
    %845 = vmatpush1.msra.mxu0 0.0
    %846 = vmatprep.subr.mxu0 0.0
    %847 = vmatpush1.msra.mxu0 0.0
    %848 = vmatprep.subr.mxu0 0.0
    %849 = vmatpush1.msra.mxu0 0.0
    %850 = vmatprep.subr.mxu0 0.0
    %851 = vmatpush1.msra.mxu0 0.0
    %852 = vmatprep.subr.mxu0 0.0
    %853 = vmatpush1.msra.mxu0 0.0
    %854 = vmatprep.mubr.f32.mxu0 0.0
    %855 = vmatmul.mubr.f32.gmra.mrb[0].mxu0 %v788
    %v856 = vpop.f32.mrb[0].mxu0
    %v857 = vadd.f32 0.0, %v856
    %v858 = vpop.f32.mrb[0].mxu0
    %859 = vdwg.mxu0
    %861 = vrot.lane.b32.xlu0 %v857, 8
    %v862 = vpop.permute.xlu0 %861
    %vm864 = vcmask 97344
    %865 = vst.msk [vmem:[#allocation2] sm:$0xff] %vm864, %v862
    %866 = vrot.lane.b32.xlu0 %v182, 116
    %v867 = vpop.permute.xlu0 %866
    %868 = vrot.lane.b32.xlu0 %v270, 116
    %v869 = vpop.permute.xlu0 %868
    %v870 = vsel %vm360, %v867, 0
    %v872 = vsel %vm360, %v869, 0
    %874 = vmatprep.subr.mxu0 0.0
    %875 = vmatpush1.xpose.msra.mxu0 %v872
    %876 = vmatprep.subr.mxu0 0.0
    %877 = vmatpush1.xpose.msra.mxu0 0.0
    %878 = vmatprep.subr.mxu0 0.0
    %879 = vmatpush1.xpose.msra.mxu0 0.0
    %880 = vmatprep.subr.mxu0 0.0
    %881 = vmatpush1.xpose.msra.mxu0 0.0
    %882 = vmatprep.subr.mxu0 0.0
    %883 = vmatpush1.xpose.msra.mxu0 0.0
    %884 = vmatprep.subr.mxu0 0.0
    %885 = vmatpush1.xpose.msra.mxu0 0.0
    %886 = vmatprep.subr.mxu0 0.0
    %887 = vmatpush1.xpose.msra.mxu0 0.0
    %888 = vmatprep.subr.mxu0 0.0
    %889 = vmatpush1.xpose.msra.mxu0 0.0
    %890 = vmatprep.subr.mxu0 0.0
    %891 = vmatpush1.xpose.msra.mxu0 0.0
    %892 = vmatprep.subr.mxu0 0.0
    %893 = vmatpush1.xpose.msra.mxu0 0.0
    %894 = vmatprep.subr.mxu0 0.0
    %895 = vmatpush1.xpose.msra.mxu0 0.0
    %896 = vmatprep.subr.mxu0 0.0
    %897 = vmatpush1.xpose.msra.mxu0 0.0
    %898 = vmatprep.subr.mxu0 0.0
    %899 = vmatpush1.xpose.msra.mxu0 0.0
    %900 = vmatprep.subr.mxu0 0.0
    %901 = vmatpush1.xpose.msra.mxu0 0.0
    %902 = vmatprep.subr.mxu0 0.0
    %903 = vmatpush1.xpose.msra.mxu0 0.0
    %904 = vmatprep.subr.mxu0 0.0
    %905 = vmatpush1.xpose.msra.mxu0 0.0
    %906 = vmatprep.subr.mxu0 0.0
    %907 = vmatpush1.xpose.msra.mxu0 0.0
    %908 = vmatprep.subr.mxu0 0.0
    %909 = vmatpush1.xpose.msra.mxu0 0.0
    %910 = vmatprep.subr.mxu0 0.0
    %911 = vmatpush1.xpose.msra.mxu0 0.0
    %912 = vmatprep.subr.mxu0 0.0
    %913 = vmatpush1.xpose.msra.mxu0 0.0
    %914 = vmatprep.subr.mxu0 0.0
    %915 = vmatpush1.xpose.msra.mxu0 0.0
    %916 = vmatprep.subr.mxu0 0.0
    %917 = vmatpush1.xpose.msra.mxu0 0.0
    %918 = vmatprep.subr.mxu0 0.0
    %919 = vmatpush1.xpose.msra.mxu0 0.0
    %920 = vmatprep.subr.mxu0 0.0
    %921 = vmatpush1.xpose.msra.mxu0 0.0
    %922 = vmatprep.subr.mxu0 0.0
    %923 = vmatpush1.xpose.msra.mxu0 0.0
    %924 = vmatprep.subr.mxu0 0.0
    %925 = vmatpush1.xpose.msra.mxu0 0.0
    %926 = vmatprep.subr.mxu0 0.0
    %927 = vmatpush1.xpose.msra.mxu0 0.0
    %928 = vmatprep.subr.mxu0 0.0
    %929 = vmatpush1.xpose.msra.mxu0 0.0
    %930 = vmatprep.subr.mxu0 0.0
    %931 = vmatpush1.xpose.msra.mxu0 0.0
    %932 = vmatprep.subr.mxu0 0.0
    %933 = vmatpush1.xpose.msra.mxu0 0.0
    %934 = vmatprep.subr.mxu0 0.0
    %935 = vmatpush1.xpose.msra.mxu0 0.0
    %936 = vmatprep.subr.mxu0 0.0
    %937 = vmatpush1.xpose.msra.mxu0 0.0
    %938 = vmatprep.mubr.f32.mxu0 0.0
    %939 = vmatmul.mubr.f32.gmra.mrb[0].mxu0 %v870
    %v940 = vpop.f32.mrb[0].mxu0
    %v941 = vadd.f32 0.0, %v940
    %v942 = vpop.f32.mrb[0].mxu0
    %943 = vdwg.mxu0
    %v944 = vsel %vm437, %v941, -inf
    %945 = vmax.xlane.f32.xlu0 %v944
    %v946 = vpop.xlane.xlu0 %945
    %v947 = vsub.f32 %v941, %v946
    %v948 = vmul.f32 %v947, 1.442695
    %v949 = vpow.pop %v948
    %v950 = vsel %vm437, %v949, 0.0
    %951 = vadd.xlane.f32.xlu0 %v950
    %v952 = vpop.xlane.xlu0 %951
    %v953 = vrcp.pop %v952
    %v954 = vmul.f32 %v949, %v953
    %955 = vrot.lane.b32.xlu0 %v358, 116
    %v956 = vpop.permute.xlu0 %955
    %v959 = vsel %vm437, %v954, 0
    %961 = vmatprep.subr.mxu0 0.0
    %962 = vmatpush1.msra.mxu0 %v956
    %963 = vmatprep.subr.mxu0 0.0
    %964 = vmatpush1.msra.mxu0 0.0
    %965 = vmatprep.subr.mxu0 0.0
    %966 = vmatpush1.msra.mxu0 0.0
    %967 = vmatprep.subr.mxu0 0.0
    %968 = vmatpush1.msra.mxu0 0.0
    %969 = vmatprep.subr.mxu0 0.0
    %970 = vmatpush1.msra.mxu0 0.0
    %971 = vmatprep.subr.mxu0 0.0
    %972 = vmatpush1.msra.mxu0 0.0
    %973 = vmatprep.subr.mxu0 0.0
    %974 = vmatpush1.msra.mxu0 0.0
    %975 = vmatprep.subr.mxu0 0.0
    %976 = vmatpush1.msra.mxu0 0.0
    %977 = vmatprep.subr.mxu0 0.0
    %978 = vmatpush1.msra.mxu0 0.0
    %979 = vmatprep.subr.mxu0 0.0
    %980 = vmatpush1.msra.mxu0 0.0
    %981 = vmatprep.subr.mxu0 0.0
    %982 = vmatpush1.msra.mxu0 0.0
    %983 = vmatprep.subr.mxu0 0.0
    %984 = vmatpush1.msra.mxu0 0.0
    %985 = vmatprep.subr.mxu0 0.0
    %986 = vmatpush1.msra.mxu0 0.0
    %987 = vmatprep.subr.mxu0 0.0
    %988 = vmatpush1.msra.mxu0 0.0
    %989 = vmatprep.subr.mxu0 0.0
    %990 = vmatpush1.msra.mxu0 0.0
    %991 = vmatprep.subr.mxu0 0.0
    %992 = vmatpush1.msra.mxu0 0.0
    %993 = vmatprep.subr.mxu0 0.0
    %994 = vmatpush1.msra.mxu0 0.0
    %995 = vmatprep.subr.mxu0 0.0
    %996 = vmatpush1.msra.mxu0 0.0
    %997 = vmatprep.subr.mxu0 0.0
    %998 = vmatpush1.msra.mxu0 0.0
    %999 = vmatprep.subr.mxu0 0.0
    %1000 = vmatpush1.msra.mxu0 0.0
    %1001 = vmatprep.subr.mxu0 0.0
    %1002 = vmatpush1.msra.mxu0 0.0
    %1003 = vmatprep.subr.mxu0 0.0
    %1004 = vmatpush1.msra.mxu0 0.0
    %1005 = vmatprep.subr.mxu0 0.0
    %1006 = vmatpush1.msra.mxu0 0.0
    %1007 = vmatprep.subr.mxu0 0.0
    %1008 = vmatpush1.msra.mxu0 0.0
    %1009 = vmatprep.subr.mxu0 0.0
    %1010 = vmatpush1.msra.mxu0 0.0
    %1011 = vmatprep.subr.mxu0 0.0
    %1012 = vmatpush1.msra.mxu0 0.0
    %1013 = vmatprep.subr.mxu0 0.0
    %1014 = vmatpush1.msra.mxu0 0.0
    %1015 = vmatprep.subr.mxu0 0.0
    %1016 = vmatpush1.msra.mxu0 0.0
    %1017 = vmatprep.subr.mxu0 0.0
    %1018 = vmatpush1.msra.mxu0 0.0
    %1019 = vmatprep.subr.mxu0 0.0
    %1020 = vmatpush1.msra.mxu0 0.0
    %1021 = vmatprep.subr.mxu0 0.0
    %1022 = vmatpush1.msra.mxu0 0.0
    %1023 = vmatprep.subr.mxu0 0.0
    %1024 = vmatpush1.msra.mxu0 0.0
    %1025 = vmatprep.mubr.f32.mxu0 0.0
    %1026 = vmatmul.mubr.f32.gmra.mrb[0].mxu0 %v959
    %v1027 = vpop.f32.mrb[0].mxu0
    %v1028 = vadd.f32 0.0, %v1027
    %v1029 = vpop.f32.mrb[0].mxu0
    %1030 = vdwg.mxu0
    %1032 = vrot.lane.b32.xlu0 %v1028, 12
    %v1033 = vpop.permute.xlu0 %1032
    %vm1035 = vcmask 130144
    %1036 = vst.msk [vmem:[#allocation2] sm:$0xff] %vm1035, %v1033
    %1037 = vrot.lane.b32.xlu0 %v182, 112
    %v1038 = vpop.permute.xlu0 %1037
    %1039 = vrot.lane.b32.xlu0 %v270, 112
    %v1040 = vpop.permute.xlu0 %1039
    %v1041 = vsel %vm360, %v1038, 0
    %v1043 = vsel %vm360, %v1040, 0
    %1045 = vmatprep.subr.mxu0 0.0
    %1046 = vmatpush1.xpose.msra.mxu0 %v1043
    %1047 = vmatprep.subr.mxu0 0.0
    %1048 = vmatpush1.xpose.msra.mxu0 0.0
    %1049 = vmatprep.subr.mxu0 0.0
    %1050 = vmatpush1.xpose.msra.mxu0 0.0
    %1051 = vmatprep.subr.mxu0 0.0
    %1052 = vmatpush1.xpose.msra.mxu0 0.0
    %1053 = vmatprep.subr.mxu0 0.0
    %1054 = vmatpush1.xpose.msra.mxu0 0.0
    %1055 = vmatprep.subr.mxu0 0.0
    %1056 = vmatpush1.xpose.msra.mxu0 0.0
    %1057 = vmatprep.subr.mxu0 0.0
    %1058 = vmatpush1.xpose.msra.mxu0 0.0
    %1059 = vmatprep.subr.mxu0 0.0
    %1060 = vmatpush1.xpose.msra.mxu0 0.0
    %1061 = vmatprep.subr.mxu0 0.0
    %1062 = vmatpush1.xpose.msra.mxu0 0.0
    %1063 = vmatprep.subr.mxu0 0.0
    %1064 = vmatpush1.xpose.msra.mxu0 0.0
    %1065 = vmatprep.subr.mxu0 0.0
    %1066 = vmatpush1.xpose.msra.mxu0 0.0
    %1067 = vmatprep.subr.mxu0 0.0
    %1068 = vmatpush1.xpose.msra.mxu0 0.0
    %1069 = vmatprep.subr.mxu0 0.0
    %1070 = vmatpush1.xpose.msra.mxu0 0.0
    %1071 = vmatprep.subr.mxu0 0.0
    %1072 = vmatpush1.xpose.msra.mxu0 0.0
    %1073 = vmatprep.subr.mxu0 0.0
    %1074 = vmatpush1.xpose.msra.mxu0 0.0
    %1075 = vmatprep.subr.mxu0 0.0
    %1076 = vmatpush1.xpose.msra.mxu0 0.0
    %1077 = vmatprep.subr.mxu0 0.0
    %1078 = vmatpush1.xpose.msra.mxu0 0.0
    %1079 = vmatprep.subr.mxu0 0.0
    %1080 = vmatpush1.xpose.msra.mxu0 0.0
    %1081 = vmatprep.subr.mxu0 0.0
    %1082 = vmatpush1.xpose.msra.mxu0 0.0
    %1083 = vmatprep.subr.mxu0 0.0
    %1084 = vmatpush1.xpose.msra.mxu0 0.0
    %1085 = vmatprep.subr.mxu0 0.0
    %1086 = vmatpush1.xpose.msra.mxu0 0.0
    %1087 = vmatprep.subr.mxu0 0.0
    %1088 = vmatpush1.xpose.msra.mxu0 0.0
    %1089 = vmatprep.subr.mxu0 0.0
    %1090 = vmatpush1.xpose.msra.mxu0 0.0
    %1091 = vmatprep.subr.mxu0 0.0
    %1092 = vmatpush1.xpose.msra.mxu0 0.0
    %1093 = vmatprep.subr.mxu0 0.0
    %1094 = vmatpush1.xpose.msra.mxu0 0.0
    %1095 = vmatprep.subr.mxu0 0.0
    %1096 = vmatpush1.xpose.msra.mxu0 0.0
    %1097 = vmatprep.subr.mxu0 0.0
    %1098 = vmatpush1.xpose.msra.mxu0 0.0
    %1099 = vmatprep.subr.mxu0 0.0
    %1100 = vmatpush1.xpose.msra.mxu0 0.0
    %1101 = vmatprep.subr.mxu0 0.0
    %1102 = vmatpush1.xpose.msra.mxu0 0.0
    %1103 = vmatprep.subr.mxu0 0.0
    %1104 = vmatpush1.xpose.msra.mxu0 0.0
    %1105 = vmatprep.subr.mxu0 0.0
    %1106 = vmatpush1.xpose.msra.mxu0 0.0
    %1107 = vmatprep.subr.mxu0 0.0
    %1108 = vmatpush1.xpose.msra.mxu0 0.0
    %1109 = vmatprep.mubr.f32.mxu0 0.0
    %1110 = vmatmul.mubr.f32.gmra.mrb[0].mxu0 %v1041
    %v1111 = vpop.f32.mrb[0].mxu0
    %v1112 = vadd.f32 0.0, %v1111
    %v1113 = vpop.f32.mrb[0].mxu0
    %1114 = vdwg.mxu0
    %v1115 = vsel %vm437, %v1112, -inf
    %1116 = vmax.xlane.f32.xlu0 %v1115
    %v1117 = vpop.xlane.xlu0 %1116
    %v1118 = vsub.f32 %v1112, %v1117
    %v1119 = vmul.f32 %v1118, 1.442695
    %v1120 = vpow.pop %v1119
    %v1121 = vsel %vm437, %v1120, 0.0
    %1122 = vadd.xlane.f32.xlu0 %v1121
    %v1123 = vpop.xlane.xlu0 %1122
    %v1124 = vrcp.pop %v1123
    %v1125 = vmul.f32 %v1120, %v1124
    %1126 = vrot.lane.b32.xlu0 %v358, 112
    %v1127 = vpop.permute.xlu0 %1126
    %v1130 = vsel %vm437, %v1125, 0
    %1132 = vmatprep.subr.mxu0 0.0
    %1133 = vmatpush1.msra.mxu0 %v1127
    %1134 = vmatprep.subr.mxu0 0.0
    %1135 = vmatpush1.msra.mxu0 0.0
    %1136 = vmatprep.subr.mxu0 0.0
    %1137 = vmatpush1.msra.mxu0 0.0
    %1138 = vmatprep.subr.mxu0 0.0
    %1139 = vmatpush1.msra.mxu0 0.0
    %1140 = vmatprep.subr.mxu0 0.0
    %1141 = vmatpush1.msra.mxu0 0.0
    %1142 = vmatprep.subr.mxu0 0.0
    %1143 = vmatpush1.msra.mxu0 0.0
    %1144 = vmatprep.subr.mxu0 0.0
    %1145 = vmatpush1.msra.mxu0 0.0
    %1146 = vmatprep.subr.mxu0 0.0
    %1147 = vmatpush1.msra.mxu0 0.0
    %1148 = vmatprep.subr.mxu0 0.0
    %1149 = vmatpush1.msra.mxu0 0.0
    %1150 = vmatprep.subr.mxu0 0.0
    %1151 = vmatpush1.msra.mxu0 0.0
    %1152 = vmatprep.subr.mxu0 0.0
    %1153 = vmatpush1.msra.mxu0 0.0
    %1154 = vmatprep.subr.mxu0 0.0
    %1155 = vmatpush1.msra.mxu0 0.0
    %1156 = vmatprep.subr.mxu0 0.0
    %1157 = vmatpush1.msra.mxu0 0.0
    %1158 = vmatprep.subr.mxu0 0.0
    %1159 = vmatpush1.msra.mxu0 0.0
    %1160 = vmatprep.subr.mxu0 0.0
    %1161 = vmatpush1.msra.mxu0 0.0
    %1162 = vmatprep.subr.mxu0 0.0
    %1163 = vmatpush1.msra.mxu0 0.0
    %1164 = vmatprep.subr.mxu0 0.0
    %1165 = vmatpush1.msra.mxu0 0.0
    %1166 = vmatprep.subr.mxu0 0.0
    %1167 = vmatpush1.msra.mxu0 0.0
    %1168 = vmatprep.subr.mxu0 0.0
    %1169 = vmatpush1.msra.mxu0 0.0
    %1170 = vmatprep.subr.mxu0 0.0
    %1171 = vmatpush1.msra.mxu0 0.0
    %1172 = vmatprep.subr.mxu0 0.0
    %1173 = vmatpush1.msra.mxu0 0.0
    %1174 = vmatprep.subr.mxu0 0.0
    %1175 = vmatpush1.msra.mxu0 0.0
    %1176 = vmatprep.subr.mxu0 0.0
    %1177 = vmatpush1.msra.mxu0 0.0
    %1178 = vmatprep.subr.mxu0 0.0
    %1179 = vmatpush1.msra.mxu0 0.0
    %1180 = vmatprep.subr.mxu0 0.0
    %1181 = vmatpush1.msra.mxu0 0.0
    %1182 = vmatprep.subr.mxu0 0.0
    %1183 = vmatpush1.msra.mxu0 0.0
    %1184 = vmatprep.subr.mxu0 0.0
    %1185 = vmatpush1.msra.mxu0 0.0
    %1186 = vmatprep.subr.mxu0 0.0
    %1187 = vmatpush1.msra.mxu0 0.0
    %1188 = vmatprep.subr.mxu0 0.0
    %1189 = vmatpush1.msra.mxu0 0.0
    %1190 = vmatprep.subr.mxu0 0.0
    %1191 = vmatpush1.msra.mxu0 0.0
    %1192 = vmatprep.subr.mxu0 0.0
    %1193 = vmatpush1.msra.mxu0 0.0
    %1194 = vmatprep.subr.mxu0 0.0
    %1195 = vmatpush1.msra.mxu0 0.0
    %1196 = vmatprep.mubr.f32.mxu0 0.0
    %1197 = vmatmul.mubr.f32.gmra.mrb[0].mxu0 %v1130
    %v1198 = vpop.f32.mrb[0].mxu0
    %v1199 = vadd.f32 0.0, %v1198
    %v1200 = vpop.f32.mrb[0].mxu0
    %1201 = vdwg.mxu0
    %1203 = vrot.lane.b32.xlu0 %v1199, 16
    %v1204 = vpop.permute.xlu0 %1203
    %vm1206 = vcmask 162944
    %1207 = vst.msk [vmem:[#allocation2] sm:$0xff] %vm1206, %v1204
    %1208 = vrot.lane.b32.xlu0 %v182, 108
    %v1209 = vpop.permute.xlu0 %1208
    %1210 = vrot.lane.b32.xlu0 %v270, 108
    %v1211 = vpop.permute.xlu0 %1210
    %v1212 = vsel %vm360, %v1209, 0
    %v1214 = vsel %vm360, %v1211, 0
    %1216 = vmatprep.subr.mxu0 0.0
    %1217 = vmatpush1.xpose.msra.mxu0 %v1214
    %1218 = vmatprep.subr.mxu0 0.0
    %1219 = vmatpush1.xpose.msra.mxu0 0.0
    %1220 = vmatprep.subr.mxu0 0.0
    %1221 = vmatpush1.xpose.msra.mxu0 0.0
    %1222 = vmatprep.subr.mxu0 0.0
    %1223 = vmatpush1.xpose.msra.mxu0 0.0
    %1224 = vmatprep.subr.mxu0 0.0
    %1225 = vmatpush1.xpose.msra.mxu0 0.0
    %1226 = vmatprep.subr.mxu0 0.0
    %1227 = vmatpush1.xpose.msra.mxu0 0.0
    %1228 = vmatprep.subr.mxu0 0.0
    %1229 = vmatpush1.xpose.msra.mxu0 0.0
    %1230 = vmatprep.subr.mxu0 0.0
    %1231 = vmatpush1.xpose.msra.mxu0 0.0
    %1232 = vmatprep.subr.mxu0 0.0
    %1233 = vmatpush1.xpose.msra.mxu0 0.0
    %1234 = vmatprep.subr.mxu0 0.0
    %1235 = vmatpush1.xpose.msra.mxu0 0.0
    %1236 = vmatprep.subr.mxu0 0.0
    %1237 = vmatpush1.xpose.msra.mxu0 0.0
    %1238 = vmatprep.subr.mxu0 0.0
    %1239 = vmatpush1.xpose.msra.mxu0 0.0
    %1240 = vmatprep.subr.mxu0 0.0
    %1241 = vmatpush1.xpose.msra.mxu0 0.0
    %1242 = vmatprep.subr.mxu0 0.0
    %1243 = vmatpush1.xpose.msra.mxu0 0.0
    %1244 = vmatprep.subr.mxu0 0.0
    %1245 = vmatpush1.xpose.msra.mxu0 0.0
    %1246 = vmatprep.subr.mxu0 0.0
    %1247 = vmatpush1.xpose.msra.mxu0 0.0
    %1248 = vmatprep.subr.mxu0 0.0
    %1249 = vmatpush1.xpose.msra.mxu0 0.0
    %1250 = vmatprep.subr.mxu0 0.0
    %1251 = vmatpush1.xpose.msra.mxu0 0.0
    %1252 = vmatprep.subr.mxu0 0.0
    %1253 = vmatpush1.xpose.msra.mxu0 0.0
    %1254 = vmatprep.subr.mxu0 0.0
    %1255 = vmatpush1.xpose.msra.mxu0 0.0
    %1256 = vmatprep.subr.mxu0 0.0
    %1257 = vmatpush1.xpose.msra.mxu0 0.0
    %1258 = vmatprep.subr.mxu0 0.0
    %1259 = vmatpush1.xpose.msra.mxu0 0.0
    %1260 = vmatprep.subr.mxu0 0.0
    %1261 = vmatpush1.xpose.msra.mxu0 0.0
    %1262 = vmatprep.subr.mxu0 0.0
    %1263 = vmatpush1.xpose.msra.mxu0 0.0
    %1264 = vmatprep.subr.mxu0 0.0
    %1265 = vmatpush1.xpose.msra.mxu0 0.0
    %1266 = vmatprep.subr.mxu0 0.0
    %1267 = vmatpush1.xpose.msra.mxu0 0.0
    %1268 = vmatprep.subr.mxu0 0.0
    %1269 = vmatpush1.xpose.msra.mxu0 0.0
    %1270 = vmatprep.subr.mxu0 0.0
    %1271 = vmatpush1.xpose.msra.mxu0 0.0
    %1272 = vmatprep.subr.mxu0 0.0
    %1273 = vmatpush1.xpose.msra.mxu0 0.0
    %1274 = vmatprep.subr.mxu0 0.0
    %1275 = vmatpush1.xpose.msra.mxu0 0.0
    %1276 = vmatprep.subr.mxu0 0.0
    %1277 = vmatpush1.xpose.msra.mxu0 0.0
    %1278 = vmatprep.subr.mxu0 0.0
    %1279 = vmatpush1.xpose.msra.mxu0 0.0
    %1280 = vmatprep.mubr.f32.mxu0 0.0
    %1281 = vmatmul.mubr.f32.gmra.mrb[0].mxu0 %v1212
    %v1282 = vpop.f32.mrb[0].mxu0
    %v1283 = vadd.f32 0.0, %v1282
    %v1284 = vpop.f32.mrb[0].mxu0
    %1285 = vdwg.mxu0
    %v1286 = vsel %vm437, %v1283, -inf
    %1287 = vmax.xlane.f32.xlu0 %v1286
    %v1288 = vpop.xlane.xlu0 %1287
    %v1289 = vsub.f32 %v1283, %v1288
    %v1290 = vmul.f32 %v1289, 1.442695
    %v1291 = vpow.pop %v1290
    %v1292 = vsel %vm437, %v1291, 0.0
    %1293 = vadd.xlane.f32.xlu0 %v1292
    %v1294 = vpop.xlane.xlu0 %1293
    %v1295 = vrcp.pop %v1294
    %v1296 = vmul.f32 %v1291, %v1295
    %1297 = vrot.lane.b32.xlu0 %v358, 108
    %v1298 = vpop.permute.xlu0 %1297
    %v1301 = vsel %vm437, %v1296, 0
    %1303 = vmatprep.subr.mxu0 0.0
    %1304 = vmatpush1.msra.mxu0 %v1298
    %1305 = vmatprep.subr.mxu0 0.0
    %1306 = vmatpush1.msra.mxu0 0.0
    %1307 = vmatprep.subr.mxu0 0.0
    %1308 = vmatpush1.msra.mxu0 0.0
    %1309 = vmatprep.subr.mxu0 0.0
    %1310 = vmatpush1.msra.mxu0 0.0
    %1311 = vmatprep.subr.mxu0 0.0
    %1312 = vmatpush1.msra.mxu0 0.0
    %1313 = vmatprep.subr.mxu0 0.0
    %1314 = vmatpush1.msra.mxu0 0.0
    %1315 = vmatprep.subr.mxu0 0.0
    %1316 = vmatpush1.msra.mxu0 0.0
    %1317 = vmatprep.subr.mxu0 0.0
    %1318 = vmatpush1.msra.mxu0 0.0
    %1319 = vmatprep.subr.mxu0 0.0
    %1320 = vmatpush1.msra.mxu0 0.0
    %1321 = vmatprep.subr.mxu0 0.0
    %1322 = vmatpush1.msra.mxu0 0.0
    %1323 = vmatprep.subr.mxu0 0.0
    %1324 = vmatpush1.msra.mxu0 0.0
    %1325 = vmatprep.subr.mxu0 0.0
    %1326 = vmatpush1.msra.mxu0 0.0
    %1327 = vmatprep.subr.mxu0 0.0
    %1328 = vmatpush1.msra.mxu0 0.0
    %1329 = vmatprep.subr.mxu0 0.0
    %1330 = vmatpush1.msra.mxu0 0.0
    %1331 = vmatprep.subr.mxu0 0.0
    %1332 = vmatpush1.msra.mxu0 0.0
    %1333 = vmatprep.subr.mxu0 0.0
    %1334 = vmatpush1.msra.mxu0 0.0
    %1335 = vmatprep.subr.mxu0 0.0
    %1336 = vmatpush1.msra.mxu0 0.0
    %1337 = vmatprep.subr.mxu0 0.0
    %1338 = vmatpush1.msra.mxu0 0.0
    %1339 = vmatprep.subr.mxu0 0.0
    %1340 = vmatpush1.msra.mxu0 0.0
    %1341 = vmatprep.subr.mxu0 0.0
    %1342 = vmatpush1.msra.mxu0 0.0
    %1343 = vmatprep.subr.mxu0 0.0
    %1344 = vmatpush1.msra.mxu0 0.0
    %1345 = vmatprep.subr.mxu0 0.0
    %1346 = vmatpush1.msra.mxu0 0.0
    %1347 = vmatprep.subr.mxu0 0.0
    %1348 = vmatpush1.msra.mxu0 0.0
    %1349 = vmatprep.subr.mxu0 0.0
    %1350 = vmatpush1.msra.mxu0 0.0
    %1351 = vmatprep.subr.mxu0 0.0
    %1352 = vmatpush1.msra.mxu0 0.0
    %1353 = vmatprep.subr.mxu0 0.0
    %1354 = vmatpush1.msra.mxu0 0.0
    %1355 = vmatprep.subr.mxu0 0.0
    %1356 = vmatpush1.msra.mxu0 0.0
    %1357 = vmatprep.subr.mxu0 0.0
    %1358 = vmatpush1.msra.mxu0 0.0
    %1359 = vmatprep.subr.mxu0 0.0
    %1360 = vmatpush1.msra.mxu0 0.0
    %1361 = vmatprep.subr.mxu0 0.0
    %1362 = vmatpush1.msra.mxu0 0.0
    %1363 = vmatprep.subr.mxu0 0.0
    %1364 = vmatpush1.msra.mxu0 0.0
    %1365 = vmatprep.subr.mxu0 0.0
    %1366 = vmatpush1.msra.mxu0 0.0
    %1367 = vmatprep.mubr.f32.mxu0 0.0
    %1368 = vmatmul.mubr.f32.gmra.mrb[0].mxu0 %v1301
    %v1369 = vpop.f32.mrb[0].mxu0
    %v1370 = vadd.f32 0.0, %v1369
    %v1371 = vpop.f32.mrb[0].mxu0
    %1372 = vdwg.mxu0
    %1374 = vrot.lane.b32.xlu0 %v1370, 20
    %v1375 = vpop.permute.xlu0 %1374
    %vm1377 = vcmask 195744
    %1378 = vst.msk [vmem:[#allocation2] sm:$0xff] %vm1377, %v1375
    %1379 = vrot.lane.b32.xlu0 %v182, 104
    %v1380 = vpop.permute.xlu0 %1379
    %1381 = vrot.lane.b32.xlu0 %v270, 104
    %v1382 = vpop.permute.xlu0 %1381
    %v1383 = vsel %vm360, %v1380, 0
    %v1385 = vsel %vm360, %v1382, 0
    %1387 = vmatprep.subr.mxu0 0.0
    %1388 = vmatpush1.xpose.msra.mxu0 %v1385
    %1389 = vmatprep.subr.mxu0 0.0
    %1390 = vmatpush1.xpose.msra.mxu0 0.0
    %1391 = vmatprep.subr.mxu0 0.0
    %1392 = vmatpush1.xpose.msra.mxu0 0.0
    %1393 = vmatprep.subr.mxu0 0.0
    %1394 = vmatpush1.xpose.msra.mxu0 0.0
    %1395 = vmatprep.subr.mxu0 0.0
    %1396 = vmatpush1.xpose.msra.mxu0 0.0
    %1397 = vmatprep.subr.mxu0 0.0
    %1398 = vmatpush1.xpose.msra.mxu0 0.0
    %1399 = vmatprep.subr.mxu0 0.0
    %1400 = vmatpush1.xpose.msra.mxu0 0.0
    %1401 = vmatprep.subr.mxu0 0.0
    %1402 = vmatpush1.xpose.msra.mxu0 0.0
    %1403 = vmatprep.subr.mxu0 0.0
    %1404 = vmatpush1.xpose.msra.mxu0 0.0
    %1405 = vmatprep.subr.mxu0 0.0
    %1406 = vmatpush1.xpose.msra.mxu0 0.0
    %1407 = vmatprep.subr.mxu0 0.0
    %1408 = vmatpush1.xpose.msra.mxu0 0.0
    %1409 = vmatprep.subr.mxu0 0.0
    %1410 = vmatpush1.xpose.msra.mxu0 0.0
    %1411 = vmatprep.subr.mxu0 0.0
    %1412 = vmatpush1.xpose.msra.mxu0 0.0
    %1413 = vmatprep.subr.mxu0 0.0
    %1414 = vmatpush1.xpose.msra.mxu0 0.0
    %1415 = vmatprep.subr.mxu0 0.0
    %1416 = vmatpush1.xpose.msra.mxu0 0.0
    %1417 = vmatprep.subr.mxu0 0.0
    %1418 = vmatpush1.xpose.msra.mxu0 0.0
    %1419 = vmatprep.subr.mxu0 0.0
    %1420 = vmatpush1.xpose.msra.mxu0 0.0
    %1421 = vmatprep.subr.mxu0 0.0
    %1422 = vmatpush1.xpose.msra.mxu0 0.0
    %1423 = vmatprep.subr.mxu0 0.0
    %1424 = vmatpush1.xpose.msra.mxu0 0.0
    %1425 = vmatprep.subr.mxu0 0.0
    %1426 = vmatpush1.xpose.msra.mxu0 0.0
    %1427 = vmatprep.subr.mxu0 0.0
    %1428 = vmatpush1.xpose.msra.mxu0 0.0
    %1429 = vmatprep.subr.mxu0 0.0
    %1430 = vmatpush1.xpose.msra.mxu0 0.0
    %1431 = vmatprep.subr.mxu0 0.0
    %1432 = vmatpush1.xpose.msra.mxu0 0.0
    %1433 = vmatprep.subr.mxu0 0.0
    %1434 = vmatpush1.xpose.msra.mxu0 0.0
    %1435 = vmatprep.subr.mxu0 0.0
    %1436 = vmatpush1.xpose.msra.mxu0 0.0
    %1437 = vmatprep.subr.mxu0 0.0
    %1438 = vmatpush1.xpose.msra.mxu0 0.0
    %1439 = vmatprep.subr.mxu0 0.0
    %1440 = vmatpush1.xpose.msra.mxu0 0.0
    %1441 = vmatprep.subr.mxu0 0.0
    %1442 = vmatpush1.xpose.msra.mxu0 0.0
    %1443 = vmatprep.subr.mxu0 0.0
    %1444 = vmatpush1.xpose.msra.mxu0 0.0
    %1445 = vmatprep.subr.mxu0 0.0
    %1446 = vmatpush1.xpose.msra.mxu0 0.0
    %1447 = vmatprep.subr.mxu0 0.0
    %1448 = vmatpush1.xpose.msra.mxu0 0.0
    %1449 = vmatprep.subr.mxu0 0.0
    %1450 = vmatpush1.xpose.msra.mxu0 0.0
    %1451 = vmatprep.mubr.f32.mxu0 0.0
    %1452 = vmatmul.mubr.f32.gmra.mrb[0].mxu0 %v1383
    %v1453 = vpop.f32.mrb[0].mxu0
    %v1454 = vadd.f32 0.0, %v1453
    %v1455 = vpop.f32.mrb[0].mxu0
    %1456 = vdwg.mxu0
    %v1457 = vsel %vm437, %v1454, -inf
    %1458 = vmax.xlane.f32.xlu0 %v1457
    %v1459 = vpop.xlane.xlu0 %1458
    %v1460 = vsub.f32 %v1454, %v1459
    %v1461 = vmul.f32 %v1460, 1.442695
    %v1462 = vpow.pop %v1461
    %v1463 = vsel %vm437, %v1462, 0.0
    %1464 = vadd.xlane.f32.xlu0 %v1463
    %v1465 = vpop.xlane.xlu0 %1464
    %v1466 = vrcp.pop %v1465
    %v1467 = vmul.f32 %v1462, %v1466
    %1468 = vrot.lane.b32.xlu0 %v358, 104
    %v1469 = vpop.permute.xlu0 %1468
    %v1472 = vsel %vm437, %v1467, 0
    %1474 = vmatprep.subr.mxu0 0.0
    %1475 = vmatpush1.msra.mxu0 %v1469
    %1476 = vmatprep.subr.mxu0 0.0
    %1477 = vmatpush1.msra.mxu0 0.0
    %1478 = vmatprep.subr.mxu0 0.0
    %1479 = vmatpush1.msra.mxu0 0.0
    %1480 = vmatprep.subr.mxu0 0.0
    %1481 = vmatpush1.msra.mxu0 0.0
    %1482 = vmatprep.subr.mxu0 0.0
    %1483 = vmatpush1.msra.mxu0 0.0
    %1484 = vmatprep.subr.mxu0 0.0
    %1485 = vmatpush1.msra.mxu0 0.0
    %1486 = vmatprep.subr.mxu0 0.0
    %1487 = vmatpush1.msra.mxu0 0.0
    %1488 = vmatprep.subr.mxu0 0.0
    %1489 = vmatpush1.msra.mxu0 0.0
    %1490 = vmatprep.subr.mxu0 0.0
    %1491 = vmatpush1.msra.mxu0 0.0
    %1492 = vmatprep.subr.mxu0 0.0
    %1493 = vmatpush1.msra.mxu0 0.0
    %1494 = vmatprep.subr.mxu0 0.0
    %1495 = vmatpush1.msra.mxu0 0.0
    %1496 = vmatprep.subr.mxu0 0.0
    %1497 = vmatpush1.msra.mxu0 0.0
    %1498 = vmatprep.subr.mxu0 0.0
    %1499 = vmatpush1.msra.mxu0 0.0
    %1500 = vmatprep.subr.mxu0 0.0
    %1501 = vmatpush1.msra.mxu0 0.0
    %1502 = vmatprep.subr.mxu0 0.0
    %1503 = vmatpush1.msra.mxu0 0.0
    %1504 = vmatprep.subr.mxu0 0.0
    %1505 = vmatpush1.msra.mxu0 0.0
    %1506 = vmatprep.subr.mxu0 0.0
    %1507 = vmatpush1.msra.mxu0 0.0
    %1508 = vmatprep.subr.mxu0 0.0
    %1509 = vmatpush1.msra.mxu0 0.0
    %1510 = vmatprep.subr.mxu0 0.0
    %1511 = vmatpush1.msra.mxu0 0.0
    %1512 = vmatprep.subr.mxu0 0.0
    %1513 = vmatpush1.msra.mxu0 0.0
    %1514 = vmatprep.subr.mxu0 0.0
    %1515 = vmatpush1.msra.mxu0 0.0
    %1516 = vmatprep.subr.mxu0 0.0
    %1517 = vmatpush1.msra.mxu0 0.0
    %1518 = vmatprep.subr.mxu0 0.0
    %1519 = vmatpush1.msra.mxu0 0.0
    %1520 = vmatprep.subr.mxu0 0.0
    %1521 = vmatpush1.msra.mxu0 0.0
    %1522 = vmatprep.subr.mxu0 0.0
    %1523 = vmatpush1.msra.mxu0 0.0
    %1524 = vmatprep.subr.mxu0 0.0
    %1525 = vmatpush1.msra.mxu0 0.0
    %1526 = vmatprep.subr.mxu0 0.0
    %1527 = vmatpush1.msra.mxu0 0.0
    %1528 = vmatprep.subr.mxu0 0.0
    %1529 = vmatpush1.msra.mxu0 0.0
    %1530 = vmatprep.subr.mxu0 0.0
    %1531 = vmatpush1.msra.mxu0 0.0
    %1532 = vmatprep.subr.mxu0 0.0
    %1533 = vmatpush1.msra.mxu0 0.0
    %1534 = vmatprep.subr.mxu0 0.0
    %1535 = vmatpush1.msra.mxu0 0.0
    %1536 = vmatprep.subr.mxu0 0.0
    %1537 = vmatpush1.msra.mxu0 0.0
    %1538 = vmatprep.mubr.f32.mxu0 0.0
    %1539 = vmatmul.mubr.f32.gmra.mrb[0].mxu0 %v1472
    %v1540 = vpop.f32.mrb[0].mxu0
    %v1541 = vadd.f32 0.0, %v1540
    %v1542 = vpop.f32.mrb[0].mxu0
    %1543 = vdwg.mxu0
    %1545 = vrot.lane.b32.xlu0 %v1541, 24
    %v1546 = vpop.permute.xlu0 %1545
    %vm1548 = vcmask 228544
    %1549 = vst.msk [vmem:[#allocation2] sm:$0xff] %vm1548, %v1546
    %1550 = vrot.lane.b32.xlu0 %v182, 100
    %v1551 = vpop.permute.xlu0 %1550
    %1552 = vrot.lane.b32.xlu0 %v270, 100
    %v1553 = vpop.permute.xlu0 %1552
    %v1554 = vsel %vm360, %v1551, 0
    %v1556 = vsel %vm360, %v1553, 0
    %1558 = vmatprep.subr.mxu0 0.0
    %1559 = vmatpush1.xpose.msra.mxu0 %v1556
    %1560 = vmatprep.subr.mxu0 0.0
    %1561 = vmatpush1.xpose.msra.mxu0 0.0
    %1562 = vmatprep.subr.mxu0 0.0
    %1563 = vmatpush1.xpose.msra.mxu0 0.0
    %1564 = vmatprep.subr.mxu0 0.0
    %1565 = vmatpush1.xpose.msra.mxu0 0.0
    %1566 = vmatprep.subr.mxu0 0.0
    %1567 = vmatpush1.xpose.msra.mxu0 0.0
    %1568 = vmatprep.subr.mxu0 0.0
    %1569 = vmatpush1.xpose.msra.mxu0 0.0
    %1570 = vmatprep.subr.mxu0 0.0
    %1571 = vmatpush1.xpose.msra.mxu0 0.0
    %1572 = vmatprep.subr.mxu0 0.0
    %1573 = vmatpush1.xpose.msra.mxu0 0.0
    %1574 = vmatprep.subr.mxu0 0.0
    %1575 = vmatpush1.xpose.msra.mxu0 0.0
    %1576 = vmatprep.subr.mxu0 0.0
    %1577 = vmatpush1.xpose.msra.mxu0 0.0
    %1578 = vmatprep.subr.mxu0 0.0
    %1579 = vmatpush1.xpose.msra.mxu0 0.0
    %1580 = vmatprep.subr.mxu0 0.0
    %1581 = vmatpush1.xpose.msra.mxu0 0.0
    %1582 = vmatprep.subr.mxu0 0.0
    %1583 = vmatpush1.xpose.msra.mxu0 0.0
    %1584 = vmatprep.subr.mxu0 0.0
    %1585 = vmatpush1.xpose.msra.mxu0 0.0
    %1586 = vmatprep.subr.mxu0 0.0
    %1587 = vmatpush1.xpose.msra.mxu0 0.0
    %1588 = vmatprep.subr.mxu0 0.0
    %1589 = vmatpush1.xpose.msra.mxu0 0.0
    %1590 = vmatprep.subr.mxu0 0.0
    %1591 = vmatpush1.xpose.msra.mxu0 0.0
    %1592 = vmatprep.subr.mxu0 0.0
    %1593 = vmatpush1.xpose.msra.mxu0 0.0
    %1594 = vmatprep.subr.mxu0 0.0
    %1595 = vmatpush1.xpose.msra.mxu0 0.0
    %1596 = vmatprep.subr.mxu0 0.0
    %1597 = vmatpush1.xpose.msra.mxu0 0.0
    %1598 = vmatprep.subr.mxu0 0.0
    %1599 = vmatpush1.xpose.msra.mxu0 0.0
    %1600 = vmatprep.subr.mxu0 0.0
    %1601 = vmatpush1.xpose.msra.mxu0 0.0
    %1602 = vmatprep.subr.mxu0 0.0
    %1603 = vmatpush1.xpose.msra.mxu0 0.0
    %1604 = vmatprep.subr.mxu0 0.0
    %1605 = vmatpush1.xpose.msra.mxu0 0.0
    %1606 = vmatprep.subr.mxu0 0.0
    %1607 = vmatpush1.xpose.msra.mxu0 0.0
    %1608 = vmatprep.subr.mxu0 0.0
    %1609 = vmatpush1.xpose.msra.mxu0 0.0
    %1610 = vmatprep.subr.mxu0 0.0
    %1611 = vmatpush1.xpose.msra.mxu0 0.0
    %1612 = vmatprep.subr.mxu0 0.0
    %1613 = vmatpush1.xpose.msra.mxu0 0.0
    %1614 = vmatprep.subr.mxu0 0.0
    %1615 = vmatpush1.xpose.msra.mxu0 0.0
    %1616 = vmatprep.subr.mxu0 0.0
    %1617 = vmatpush1.xpose.msra.mxu0 0.0
    %1618 = vmatprep.subr.mxu0 0.0
    %1619 = vmatpush1.xpose.msra.mxu0 0.0
    %1620 = vmatprep.subr.mxu0 0.0
    %1621 = vmatpush1.xpose.msra.mxu0 0.0
    %1622 = vmatprep.mubr.f32.mxu0 0.0
    %1623 = vmatmul.mubr.f32.gmra.mrb[0].mxu0 %v1554
    %v1624 = vpop.f32.mrb[0].mxu0
    %v1625 = vadd.f32 0.0, %v1624
    %v1626 = vpop.f32.mrb[0].mxu0
    %1627 = vdwg.mxu0
    %v1628 = vsel %vm437, %v1625, -inf
    %1629 = vmax.xlane.f32.xlu0 %v1628
    %v1630 = vpop.xlane.xlu0 %1629
    %v1631 = vsub.f32 %v1625, %v1630
    %v1632 = vmul.f32 %v1631, 1.442695
    %v1633 = vpow.pop %v1632
    %v1634 = vsel %vm437, %v1633, 0.0
    %1635 = vadd.xlane.f32.xlu0 %v1634
    %v1636 = vpop.xlane.xlu0 %1635
    %v1637 = vrcp.pop %v1636
    %v1638 = vmul.f32 %v1633, %v1637
    %1639 = vrot.lane.b32.xlu0 %v358, 100
    %v1640 = vpop.permute.xlu0 %1639
    %v1643 = vsel %vm437, %v1638, 0
    %1645 = vmatprep.subr.mxu0 0.0
    %1646 = vmatpush1.msra.mxu0 %v1640
    %1647 = vmatprep.subr.mxu0 0.0
    %1648 = vmatpush1.msra.mxu0 0.0
    %1649 = vmatprep.subr.mxu0 0.0
    %1650 = vmatpush1.msra.mxu0 0.0
    %1651 = vmatprep.subr.mxu0 0.0
    %1652 = vmatpush1.msra.mxu0 0.0
    %1653 = vmatprep.subr.mxu0 0.0
    %1654 = vmatpush1.msra.mxu0 0.0
    %1655 = vmatprep.subr.mxu0 0.0
    %1656 = vmatpush1.msra.mxu0 0.0
    %1657 = vmatprep.subr.mxu0 0.0
    %1658 = vmatpush1.msra.mxu0 0.0
    %1659 = vmatprep.subr.mxu0 0.0
    %1660 = vmatpush1.msra.mxu0 0.0
    %1661 = vmatprep.subr.mxu0 0.0
    %1662 = vmatpush1.msra.mxu0 0.0
    %1663 = vmatprep.subr.mxu0 0.0
    %1664 = vmatpush1.msra.mxu0 0.0
    %1665 = vmatprep.subr.mxu0 0.0
    %1666 = vmatpush1.msra.mxu0 0.0
    %1667 = vmatprep.subr.mxu0 0.0
    %1668 = vmatpush1.msra.mxu0 0.0
    %1669 = vmatprep.subr.mxu0 0.0
    %1670 = vmatpush1.msra.mxu0 0.0
    %1671 = vmatprep.subr.mxu0 0.0
    %1672 = vmatpush1.msra.mxu0 0.0
    %1673 = vmatprep.subr.mxu0 0.0
    %1674 = vmatpush1.msra.mxu0 0.0
    %1675 = vmatprep.subr.mxu0 0.0
    %1676 = vmatpush1.msra.mxu0 0.0
    %1677 = vmatprep.subr.mxu0 0.0
    %1678 = vmatpush1.msra.mxu0 0.0
    %1679 = vmatprep.subr.mxu0 0.0
    %1680 = vmatpush1.msra.mxu0 0.0
    %1681 = vmatprep.subr.mxu0 0.0
    %1682 = vmatpush1.msra.mxu0 0.0
    %1683 = vmatprep.subr.mxu0 0.0
    %1684 = vmatpush1.msra.mxu0 0.0
    %1685 = vmatprep.subr.mxu0 0.0
    %1686 = vmatpush1.msra.mxu0 0.0
    %1687 = vmatprep.subr.mxu0 0.0
    %1688 = vmatpush1.msra.mxu0 0.0
    %1689 = vmatprep.subr.mxu0 0.0
    %1690 = vmatpush1.msra.mxu0 0.0
    %1691 = vmatprep.subr.mxu0 0.0
    %1692 = vmatpush1.msra.mxu0 0.0
    %1693 = vmatprep.subr.mxu0 0.0
    %1694 = vmatpush1.msra.mxu0 0.0
    %1695 = vmatprep.subr.mxu0 0.0
    %1696 = vmatpush1.msra.mxu0 0.0
    %1697 = vmatprep.subr.mxu0 0.0
    %1698 = vmatpush1.msra.mxu0 0.0
    %1699 = vmatprep.subr.mxu0 0.0
    %1700 = vmatpush1.msra.mxu0 0.0
    %1701 = vmatprep.subr.mxu0 0.0
    %1702 = vmatpush1.msra.mxu0 0.0
    %1703 = vmatprep.subr.mxu0 0.0
    %1704 = vmatpush1.msra.mxu0 0.0
    %1705 = vmatprep.subr.mxu0 0.0
    %1706 = vmatpush1.msra.mxu0 0.0
    %1707 = vmatprep.subr.mxu0 0.0
    %1708 = vmatpush1.msra.mxu0 0.0
    %1709 = vmatprep.mubr.f32.mxu0 0.0
    %1710 = vmatmul.mubr.f32.gmra.mrb[0].mxu0 %v1643
    %v1711 = vpop.f32.mrb[0].mxu0
    %v1712 = vadd.f32 0.0, %v1711
    %v1713 = vpop.f32.mrb[0].mxu0
    %1714 = vdwg.mxu0
    %1716 = vrot.lane.b32.xlu0 %v1712, 28
    %v1717 = vpop.permute.xlu0 %1716
    %vm1719 = vcmask 261344
    %1720 = vst.msk [vmem:[#allocation2] sm:$0xff] %vm1719, %v1717
    %1721 = vst.msk [vmem:[#allocation12] sm:$0xff] %vm437, %v448
    %1722 = vst.msk [vmem:[#allocation12 + $0x8] sm:$0xff] %vm437, %v611
    %1723 = vst.msk [vmem:[#allocation12 + $0x10] sm:$0xff] %vm437, %v783
    %1724 = vst.msk [vmem:[#allocation12 + $0x18] sm:$0xff] %vm437, %v954
    %1725 = vst.msk [vmem:[#allocation12 + $0x20] sm:$0xff] %vm437, %v1125
    %1726 = vst.msk [vmem:[#allocation12 + $0x28] sm:$0xff] %vm437, %v1296
    %1727 = vst.msk [vmem:[#allocation12 + $0x30] sm:$0xff] %vm437, %v1467
    %1728 = vst.msk [vmem:[#allocation12 + $0x38] sm:$0xff] %vm437, %v1638
    %v1730 = vsel %vm360, %v183, 0
    %v1733 = vsel %vm360, %v271, 0
    %1735 = vmatprep.subr.mxu0 0.0
    %1736 = vmatpush1.xpose.msra.mxu0 %v1733
    %1737 = vmatprep.subr.mxu0 0.0
    %1738 = vmatpush1.xpose.msra.mxu0 0.0
    %1739 = vmatprep.subr.mxu0 0.0
    %1740 = vmatpush1.xpose.msra.mxu0 0.0
    %1741 = vmatprep.subr.mxu0 0.0
    %1742 = vmatpush1.xpose.msra.mxu0 0.0
    %1743 = vmatprep.subr.mxu0 0.0
    %1744 = vmatpush1.xpose.msra.mxu0 0.0
    %1745 = vmatprep.subr.mxu0 0.0
    %1746 = vmatpush1.xpose.msra.mxu0 0.0
    %1747 = vmatprep.subr.mxu0 0.0
    %1748 = vmatpush1.xpose.msra.mxu0 0.0
    %1749 = vmatprep.subr.mxu0 0.0
    %1750 = vmatpush1.xpose.msra.mxu0 0.0
    %1751 = vmatprep.subr.mxu0 0.0
    %1752 = vmatpush1.xpose.msra.mxu0 0.0
    %1753 = vmatprep.subr.mxu0 0.0
    %1754 = vmatpush1.xpose.msra.mxu0 0.0
    %1755 = vmatprep.subr.mxu0 0.0
    %1756 = vmatpush1.xpose.msra.mxu0 0.0
    %1757 = vmatprep.subr.mxu0 0.0
    %1758 = vmatpush1.xpose.msra.mxu0 0.0
    %1759 = vmatprep.subr.mxu0 0.0
    %1760 = vmatpush1.xpose.msra.mxu0 0.0
    %1761 = vmatprep.subr.mxu0 0.0
    %1762 = vmatpush1.xpose.msra.mxu0 0.0
    %1763 = vmatprep.subr.mxu0 0.0
    %1764 = vmatpush1.xpose.msra.mxu0 0.0
    %1765 = vmatprep.subr.mxu0 0.0
    %1766 = vmatpush1.xpose.msra.mxu0 0.0
    %1767 = vmatprep.subr.mxu0 0.0
    %1768 = vmatpush1.xpose.msra.mxu0 0.0
    %1769 = vmatprep.subr.mxu0 0.0
    %1770 = vmatpush1.xpose.msra.mxu0 0.0
    %1771 = vmatprep.subr.mxu0 0.0
    %1772 = vmatpush1.xpose.msra.mxu0 0.0
    %1773 = vmatprep.subr.mxu0 0.0
    %1774 = vmatpush1.xpose.msra.mxu0 0.0
    %1775 = vmatprep.subr.mxu0 0.0
    %1776 = vmatpush1.xpose.msra.mxu0 0.0
    %1777 = vmatprep.subr.mxu0 0.0
    %1778 = vmatpush1.xpose.msra.mxu0 0.0
    %1779 = vmatprep.subr.mxu0 0.0
    %1780 = vmatpush1.xpose.msra.mxu0 0.0
    %1781 = vmatprep.subr.mxu0 0.0
    %1782 = vmatpush1.xpose.msra.mxu0 0.0
    %1783 = vmatprep.subr.mxu0 0.0
    %1784 = vmatpush1.xpose.msra.mxu0 0.0
    %1785 = vmatprep.subr.mxu0 0.0
    %1786 = vmatpush1.xpose.msra.mxu0 0.0
    %1787 = vmatprep.subr.mxu0 0.0
    %1788 = vmatpush1.xpose.msra.mxu0 0.0
    %1789 = vmatprep.subr.mxu0 0.0
    %1790 = vmatpush1.xpose.msra.mxu0 0.0
    %1791 = vmatprep.subr.mxu0 0.0
    %1792 = vmatpush1.xpose.msra.mxu0 0.0
    %1793 = vmatprep.subr.mxu0 0.0
    %1794 = vmatpush1.xpose.msra.mxu0 0.0
    %1795 = vmatprep.subr.mxu0 0.0
    %1796 = vmatpush1.xpose.msra.mxu0 0.0
    %1797 = vmatprep.subr.mxu0 0.0
    %1798 = vmatpush1.xpose.msra.mxu0 0.0
    %1799 = vmatprep.mubr.f32.mxu0 0.0
    %1800 = vmatmul.mubr.f32.gmra.mrb[0].mxu0 %v1730
    %v1801 = vpop.f32.mrb[0].mxu0
    %v1802 = vadd.f32 0.0, %v1801
    %v1803 = vpop.f32.mrb[0].mxu0
    %1804 = vdwg.mxu0
    %v1805 = vsel %vm437, %v1802, -inf
    %1806 = vmax.xlane.f32.xlu0 %v1805
    %v1807 = vpop.xlane.xlu0 %1806
    %v1808 = vsub.f32 %v1802, %v1807
    %v1809 = vmul.f32 %v1808, 1.442695
    %v1810 = vpow.pop %v1809
    %v1811 = vsel %vm437, %v1810, 0.0
    %1812 = vadd.xlane.f32.xlu0 %v1811
    %v1813 = vpop.xlane.xlu0 %1812
    %v1814 = vrcp.pop %v1813
    %v1815 = vmul.f32 %v1810, %v1814
    %v1817 = vsel %vm437, %v1815, 0
    %1819 = vmatprep.subr.mxu0 0.0
    %1820 = vmatpush1.msra.mxu0 %v359
    %1821 = vmatprep.subr.mxu0 0.0
    %1822 = vmatpush1.msra.mxu0 0.0
    %1823 = vmatprep.subr.mxu0 0.0
    %1824 = vmatpush1.msra.mxu0 0.0
    %1825 = vmatprep.subr.mxu0 0.0
    %1826 = vmatpush1.msra.mxu0 0.0
    %1827 = vmatprep.subr.mxu0 0.0
    %1828 = vmatpush1.msra.mxu0 0.0
    %1829 = vmatprep.subr.mxu0 0.0
    %1830 = vmatpush1.msra.mxu0 0.0
    %1831 = vmatprep.subr.mxu0 0.0
    %1832 = vmatpush1.msra.mxu0 0.0
    %1833 = vmatprep.subr.mxu0 0.0
    %1834 = vmatpush1.msra.mxu0 0.0
    %1835 = vmatprep.subr.mxu0 0.0
    %1836 = vmatpush1.msra.mxu0 0.0
    %1837 = vmatprep.subr.mxu0 0.0
    %1838 = vmatpush1.msra.mxu0 0.0
    %1839 = vmatprep.subr.mxu0 0.0
    %1840 = vmatpush1.msra.mxu0 0.0
    %1841 = vmatprep.subr.mxu0 0.0
    %1842 = vmatpush1.msra.mxu0 0.0
    %1843 = vmatprep.subr.mxu0 0.0
    %1844 = vmatpush1.msra.mxu0 0.0
    %1845 = vmatprep.subr.mxu0 0.0
    %1846 = vmatpush1.msra.mxu0 0.0
    %1847 = vmatprep.subr.mxu0 0.0
    %1848 = vmatpush1.msra.mxu0 0.0
    %1849 = vmatprep.subr.mxu0 0.0
    %1850 = vmatpush1.msra.mxu0 0.0
    %1851 = vmatprep.subr.mxu0 0.0
    %1852 = vmatpush1.msra.mxu0 0.0
    %1853 = vmatprep.subr.mxu0 0.0
    %1854 = vmatpush1.msra.mxu0 0.0
    %1855 = vmatprep.subr.mxu0 0.0
    %1856 = vmatpush1.msra.mxu0 0.0
    %1857 = vmatprep.subr.mxu0 0.0
    %1858 = vmatpush1.msra.mxu0 0.0
    %1859 = vmatprep.subr.mxu0 0.0
    %1860 = vmatpush1.msra.mxu0 0.0
    %1861 = vmatprep.subr.mxu0 0.0
    %1862 = vmatpush1.msra.mxu0 0.0
    %1863 = vmatprep.subr.mxu0 0.0
    %1864 = vmatpush1.msra.mxu0 0.0
    %1865 = vmatprep.subr.mxu0 0.0
    %1866 = vmatpush1.msra.mxu0 0.0
    %1867 = vmatprep.subr.mxu0 0.0
    %1868 = vmatpush1.msra.mxu0 0.0
    %1869 = vmatprep.subr.mxu0 0.0
    %1870 = vmatpush1.msra.mxu0 0.0
    %1871 = vmatprep.subr.mxu0 0.0
    %1872 = vmatpush1.msra.mxu0 0.0
    %1873 = vmatprep.subr.mxu0 0.0
    %1874 = vmatpush1.msra.mxu0 0.0
    %1875 = vmatprep.subr.mxu0 0.0
    %1876 = vmatpush1.msra.mxu0 0.0
    %1877 = vmatprep.subr.mxu0 0.0
    %1878 = vmatpush1.msra.mxu0 0.0
    %1879 = vmatprep.subr.mxu0 0.0
    %1880 = vmatpush1.msra.mxu0 0.0
    %1881 = vmatprep.subr.mxu0 0.0
    %1882 = vmatpush1.msra.mxu0 0.0
    %1883 = vmatprep.mubr.f32.mxu0 0.0
    %1884 = vmatmul.mubr.f32.gmra.mrb[0].mxu0 %v1817
    %v1885 = vpop.f32.mrb[0].mxu0
    %v1886 = vadd.f32 0.0, %v1885
    %v1887 = vpop.f32.mrb[0].mxu0
    %1888 = vdwg.mxu0
    %s1889 = scalar_lea.vmem [#allocation2], 8
    %1890 = vst.msk [vmem:[%s1889] sm:$0xff] %vm360, %v1886
    %1891 = vrot.lane.b32.xlu0 %v183, 124
    %v1892 = vpop.permute.xlu0 %1891
    %1893 = vrot.lane.b32.xlu0 %v271, 124
    %v1894 = vpop.permute.xlu0 %1893
    %v1895 = vsel %vm360, %v1892, 0
    %v1897 = vsel %vm360, %v1894, 0
    %1899 = vmatprep.subr.mxu0 0.0
    %1900 = vmatpush1.xpose.msra.mxu0 %v1897
    %1901 = vmatprep.subr.mxu0 0.0
    %1902 = vmatpush1.xpose.msra.mxu0 0.0
    %1903 = vmatprep.subr.mxu0 0.0
    %1904 = vmatpush1.xpose.msra.mxu0 0.0
    %1905 = vmatprep.subr.mxu0 0.0
    %1906 = vmatpush1.xpose.msra.mxu0 0.0
    %1907 = vmatprep.subr.mxu0 0.0
    %1908 = vmatpush1.xpose.msra.mxu0 0.0
    %1909 = vmatprep.subr.mxu0 0.0
    %1910 = vmatpush1.xpose.msra.mxu0 0.0
    %1911 = vmatprep.subr.mxu0 0.0
    %1912 = vmatpush1.xpose.msra.mxu0 0.0
    %1913 = vmatprep.subr.mxu0 0.0
    %1914 = vmatpush1.xpose.msra.mxu0 0.0
    %1915 = vmatprep.subr.mxu0 0.0
    %1916 = vmatpush1.xpose.msra.mxu0 0.0
    %1917 = vmatprep.subr.mxu0 0.0
    %1918 = vmatpush1.xpose.msra.mxu0 0.0
    %1919 = vmatprep.subr.mxu0 0.0
    %1920 = vmatpush1.xpose.msra.mxu0 0.0
    %1921 = vmatprep.subr.mxu0 0.0
    %1922 = vmatpush1.xpose.msra.mxu0 0.0
    %1923 = vmatprep.subr.mxu0 0.0
    %1924 = vmatpush1.xpose.msra.mxu0 0.0
    %1925 = vmatprep.subr.mxu0 0.0
    %1926 = vmatpush1.xpose.msra.mxu0 0.0
    %1927 = vmatprep.subr.mxu0 0.0
    %1928 = vmatpush1.xpose.msra.mxu0 0.0
    %1929 = vmatprep.subr.mxu0 0.0
    %1930 = vmatpush1.xpose.msra.mxu0 0.0
    %1931 = vmatprep.subr.mxu0 0.0
    %1932 = vmatpush1.xpose.msra.mxu0 0.0
    %1933 = vmatprep.subr.mxu0 0.0
    %1934 = vmatpush1.xpose.msra.mxu0 0.0
    %1935 = vmatprep.subr.mxu0 0.0
    %1936 = vmatpush1.xpose.msra.mxu0 0.0
    %1937 = vmatprep.subr.mxu0 0.0
    %1938 = vmatpush1.xpose.msra.mxu0 0.0
    %1939 = vmatprep.subr.mxu0 0.0
    %1940 = vmatpush1.xpose.msra.mxu0 0.0
    %1941 = vmatprep.subr.mxu0 0.0
    %1942 = vmatpush1.xpose.msra.mxu0 0.0
    %1943 = vmatprep.subr.mxu0 0.0
    %1944 = vmatpush1.xpose.msra.mxu0 0.0
    %1945 = vmatprep.subr.mxu0 0.0
    %1946 = vmatpush1.xpose.msra.mxu0 0.0
    %1947 = vmatprep.subr.mxu0 0.0
    %1948 = vmatpush1.xpose.msra.mxu0 0.0
    %1949 = vmatprep.subr.mxu0 0.0
    %1950 = vmatpush1.xpose.msra.mxu0 0.0
    %1951 = vmatprep.subr.mxu0 0.0
    %1952 = vmatpush1.xpose.msra.mxu0 0.0
    %1953 = vmatprep.subr.mxu0 0.0
    %1954 = vmatpush1.xpose.msra.mxu0 0.0
    %1955 = vmatprep.subr.mxu0 0.0
    %1956 = vmatpush1.xpose.msra.mxu0 0.0
    %1957 = vmatprep.subr.mxu0 0.0
    %1958 = vmatpush1.xpose.msra.mxu0 0.0
    %1959 = vmatprep.subr.mxu0 0.0
    %1960 = vmatpush1.xpose.msra.mxu0 0.0
    %1961 = vmatprep.subr.mxu0 0.0
    %1962 = vmatpush1.xpose.msra.mxu0 0.0
    %1963 = vmatprep.mubr.f32.mxu0 0.0
    %1964 = vmatmul.mubr.f32.gmra.mrb[0].mxu0 %v1895
    %v1965 = vpop.f32.mrb[0].mxu0
    %v1966 = vadd.f32 0.0, %v1965
    %v1967 = vpop.f32.mrb[0].mxu0
    %1968 = vdwg.mxu0
    %v1969 = vsel %vm437, %v1966, -inf
    %1970 = vmax.xlane.f32.xlu0 %v1969
    %v1971 = vpop.xlane.xlu0 %1970
    %v1972 = vsub.f32 %v1966, %v1971
    %v1973 = vmul.f32 %v1972, 1.442695
    %v1974 = vpow.pop %v1973
    %v1975 = vsel %vm437, %v1974, 0.0
    %1976 = vadd.xlane.f32.xlu0 %v1975
    %v1977 = vpop.xlane.xlu0 %1976
    %v1978 = vrcp.pop %v1977
    %v1979 = vmul.f32 %v1974, %v1978
    %1981 = vrot.lane.b32.xlu0 %v359, 124
    %v1982 = vpop.permute.xlu0 %1981
    %v1985 = vsel %vm437, %v1979, 0
    %1987 = vmatprep.subr.mxu0 0.0
    %1988 = vmatpush1.msra.mxu0 %v1982
    %1989 = vmatprep.subr.mxu0 0.0
    %1990 = vmatpush1.msra.mxu0 0.0
    %1991 = vmatprep.subr.mxu0 0.0
    %1992 = vmatpush1.msra.mxu0 0.0
    %1993 = vmatprep.subr.mxu0 0.0
    %1994 = vmatpush1.msra.mxu0 0.0
    %1995 = vmatprep.subr.mxu0 0.0
    %1996 = vmatpush1.msra.mxu0 0.0
    %1997 = vmatprep.subr.mxu0 0.0
    %1998 = vmatpush1.msra.mxu0 0.0
    %1999 = vmatprep.subr.mxu0 0.0
    %2000 = vmatpush1.msra.mxu0 0.0
    %2001 = vmatprep.subr.mxu0 0.0
    %2002 = vmatpush1.msra.mxu0 0.0
    %2003 = vmatprep.subr.mxu0 0.0
    %2004 = vmatpush1.msra.mxu0 0.0
    %2005 = vmatprep.subr.mxu0 0.0
    %2006 = vmatpush1.msra.mxu0 0.0
    %2007 = vmatprep.subr.mxu0 0.0
    %2008 = vmatpush1.msra.mxu0 0.0
    %2009 = vmatprep.subr.mxu0 0.0
    %2010 = vmatpush1.msra.mxu0 0.0
    %2011 = vmatprep.subr.mxu0 0.0
    %2012 = vmatpush1.msra.mxu0 0.0
    %2013 = vmatprep.subr.mxu0 0.0
    %2014 = vmatpush1.msra.mxu0 0.0
    %2015 = vmatprep.subr.mxu0 0.0
    %2016 = vmatpush1.msra.mxu0 0.0
    %2017 = vmatprep.subr.mxu0 0.0
    %2018 = vmatpush1.msra.mxu0 0.0
    %2019 = vmatprep.subr.mxu0 0.0
    %2020 = vmatpush1.msra.mxu0 0.0
    %2021 = vmatprep.subr.mxu0 0.0
    %2022 = vmatpush1.msra.mxu0 0.0
    %2023 = vmatprep.subr.mxu0 0.0
    %2024 = vmatpush1.msra.mxu0 0.0
    %2025 = vmatprep.subr.mxu0 0.0
    %2026 = vmatpush1.msra.mxu0 0.0
    %2027 = vmatprep.subr.mxu0 0.0
    %2028 = vmatpush1.msra.mxu0 0.0
    %2029 = vmatprep.subr.mxu0 0.0
    %2030 = vmatpush1.msra.mxu0 0.0
    %2031 = vmatprep.subr.mxu0 0.0
    %2032 = vmatpush1.msra.mxu0 0.0
    %2033 = vmatprep.subr.mxu0 0.0
    %2034 = vmatpush1.msra.mxu0 0.0
    %2035 = vmatprep.subr.mxu0 0.0
    %2036 = vmatpush1.msra.mxu0 0.0
    %2037 = vmatprep.subr.mxu0 0.0
    %2038 = vmatpush1.msra.mxu0 0.0
    %2039 = vmatprep.subr.mxu0 0.0
    %2040 = vmatpush1.msra.mxu0 0.0
    %2041 = vmatprep.subr.mxu0 0.0
    %2042 = vmatpush1.msra.mxu0 0.0
    %2043 = vmatprep.subr.mxu0 0.0
    %2044 = vmatpush1.msra.mxu0 0.0
    %2045 = vmatprep.subr.mxu0 0.0
    %2046 = vmatpush1.msra.mxu0 0.0
    %2047 = vmatprep.subr.mxu0 0.0
    %2048 = vmatpush1.msra.mxu0 0.0
    %2049 = vmatprep.subr.mxu0 0.0
    %2050 = vmatpush1.msra.mxu0 0.0
    %2051 = vmatprep.mubr.f32.mxu0 0.0
    %2052 = vmatmul.mubr.f32.gmra.mrb[0].mxu0 %v1985
    %v2053 = vpop.f32.mrb[0].mxu0
    %v2054 = vadd.f32 0.0, %v2053
    %v2055 = vpop.f32.mrb[0].mxu0
    %2056 = vdwg.mxu0
    %2058 = vrot.lane.b32.xlu0 %v2054, 4
    %v2059 = vpop.permute.xlu0 %2058
    %2061 = vst.msk [vmem:[%s1889] sm:$0xff] %vm693, %v2059
    %2062 = vrot.lane.b32.xlu0 %v183, 120
    %v2063 = vpop.permute.xlu0 %2062
    %2064 = vrot.lane.b32.xlu0 %v271, 120
    %v2065 = vpop.permute.xlu0 %2064
    %v2066 = vsel %vm360, %v2063, 0
    %v2068 = vsel %vm360, %v2065, 0
    %2070 = vmatprep.subr.mxu0 0.0
    %2071 = vmatpush1.xpose.msra.mxu0 %v2068
    %2072 = vmatprep.subr.mxu0 0.0
    %2073 = vmatpush1.xpose.msra.mxu0 0.0
    %2074 = vmatprep.subr.mxu0 0.0
    %2075 = vmatpush1.xpose.msra.mxu0 0.0
    %2076 = vmatprep.subr.mxu0 0.0
    %2077 = vmatpush1.xpose.msra.mxu0 0.0
    %2078 = vmatprep.subr.mxu0 0.0
    %2079 = vmatpush1.xpose.msra.mxu0 0.0
    %2080 = vmatprep.subr.mxu0 0.0
    %2081 = vmatpush1.xpose.msra.mxu0 0.0
    %2082 = vmatprep.subr.mxu0 0.0
    %2083 = vmatpush1.xpose.msra.mxu0 0.0
    %2084 = vmatprep.subr.mxu0 0.0
    %2085 = vmatpush1.xpose.msra.mxu0 0.0
    %2086 = vmatprep.subr.mxu0 0.0
    %2087 = vmatpush1.xpose.msra.mxu0 0.0
    %2088 = vmatprep.subr.mxu0 0.0
    %2089 = vmatpush1.xpose.msra.mxu0 0.0
    %2090 = vmatprep.subr.mxu0 0.0
    %2091 = vmatpush1.xpose.msra.mxu0 0.0
    %2092 = vmatprep.subr.mxu0 0.0
    %2093 = vmatpush1.xpose.msra.mxu0 0.0
    %2094 = vmatprep.subr.mxu0 0.0
    %2095 = vmatpush1.xpose.msra.mxu0 0.0
    %2096 = vmatprep.subr.mxu0 0.0
    %2097 = vmatpush1.xpose.msra.mxu0 0.0
    %2098 = vmatprep.subr.mxu0 0.0
    %2099 = vmatpush1.xpose.msra.mxu0 0.0
    %2100 = vmatprep.subr.mxu0 0.0
    %2101 = vmatpush1.xpose.msra.mxu0 0.0
    %2102 = vmatprep.subr.mxu0 0.0
    %2103 = vmatpush1.xpose.msra.mxu0 0.0
    %2104 = vmatprep.subr.mxu0 0.0
    %2105 = vmatpush1.xpose.msra.mxu0 0.0
    %2106 = vmatprep.subr.mxu0 0.0
    %2107 = vmatpush1.xpose.msra.mxu0 0.0
    %2108 = vmatprep.subr.mxu0 0.0
    %2109 = vmatpush1.xpose.msra.mxu0 0.0
    %2110 = vmatprep.subr.mxu0 0.0
    %2111 = vmatpush1.xpose.msra.mxu0 0.0
    %2112 = vmatprep.subr.mxu0 0.0
    %2113 = vmatpush1.xpose.msra.mxu0 0.0
    %2114 = vmatprep.subr.mxu0 0.0
    %2115 = vmatpush1.xpose.msra.mxu0 0.0
    %2116 = vmatprep.subr.mxu0 0.0
    %2117 = vmatpush1.xpose.msra.mxu0 0.0
    %2118 = vmatprep.subr.mxu0 0.0
    %2119 = vmatpush1.xpose.msra.mxu0 0.0
    %2120 = vmatprep.subr.mxu0 0.0
    %2121 = vmatpush1.xpose.msra.mxu0 0.0
    %2122 = vmatprep.subr.mxu0 0.0
    %2123 = vmatpush1.xpose.msra.mxu0 0.0
    %2124 = vmatprep.subr.mxu0 0.0
    %2125 = vmatpush1.xpose.msra.mxu0 0.0
    %2126 = vmatprep.subr.mxu0 0.0
    %2127 = vmatpush1.xpose.msra.mxu0 0.0
    %2128 = vmatprep.subr.mxu0 0.0
    %2129 = vmatpush1.xpose.msra.mxu0 0.0
    %2130 = vmatprep.subr.mxu0 0.0
    %2131 = vmatpush1.xpose.msra.mxu0 0.0
    %2132 = vmatprep.subr.mxu0 0.0
    %2133 = vmatpush1.xpose.msra.mxu0 0.0
    %2134 = vmatprep.mubr.f32.mxu0 0.0
    %2135 = vmatmul.mubr.f32.gmra.mrb[0].mxu0 %v2066
    %v2136 = vpop.f32.mrb[0].mxu0
    %v2137 = vadd.f32 0.0, %v2136
    %v2138 = vpop.f32.mrb[0].mxu0
    %2139 = vdwg.mxu0
    %v2140 = vsel %vm437, %v2137, -inf
    %2141 = vmax.xlane.f32.xlu0 %v2140
    %v2142 = vpop.xlane.xlu0 %2141
    %v2143 = vsub.f32 %v2137, %v2142
    %v2144 = vmul.f32 %v2143, 1.442695
    %v2145 = vpow.pop %v2144
    %v2146 = vsel %vm437, %v2145, 0.0
    %2147 = vadd.xlane.f32.xlu0 %v2146
    %v2148 = vpop.xlane.xlu0 %2147
    %v2149 = vrcp.pop %v2148
    %v2150 = vmul.f32 %v2145, %v2149
    %2151 = vrot.lane.b32.xlu0 %v359, 120
    %v2152 = vpop.permute.xlu0 %2151
    %v2155 = vsel %vm437, %v2150, 0
    %2157 = vmatprep.subr.mxu0 0.0
    %2158 = vmatpush1.msra.mxu0 %v2152
    %2159 = vmatprep.subr.mxu0 0.0
    %2160 = vmatpush1.msra.mxu0 0.0
    %2161 = vmatprep.subr.mxu0 0.0
    %2162 = vmatpush1.msra.mxu0 0.0
    %2163 = vmatprep.subr.mxu0 0.0
    %2164 = vmatpush1.msra.mxu0 0.0
    %2165 = vmatprep.subr.mxu0 0.0
    %2166 = vmatpush1.msra.mxu0 0.0
    %2167 = vmatprep.subr.mxu0 0.0
    %2168 = vmatpush1.msra.mxu0 0.0
    %2169 = vmatprep.subr.mxu0 0.0
    %2170 = vmatpush1.msra.mxu0 0.0
    %2171 = vmatprep.subr.mxu0 0.0
    %2172 = vmatpush1.msra.mxu0 0.0
    %2173 = vmatprep.subr.mxu0 0.0
    %2174 = vmatpush1.msra.mxu0 0.0
    %2175 = vmatprep.subr.mxu0 0.0
    %2176 = vmatpush1.msra.mxu0 0.0
    %2177 = vmatprep.subr.mxu0 0.0
    %2178 = vmatpush1.msra.mxu0 0.0
    %2179 = vmatprep.subr.mxu0 0.0
    %2180 = vmatpush1.msra.mxu0 0.0
    %2181 = vmatprep.subr.mxu0 0.0
    %2182 = vmatpush1.msra.mxu0 0.0
    %2183 = vmatprep.subr.mxu0 0.0
    %2184 = vmatpush1.msra.mxu0 0.0
    %2185 = vmatprep.subr.mxu0 0.0
    %2186 = vmatpush1.msra.mxu0 0.0
    %2187 = vmatprep.subr.mxu0 0.0
    %2188 = vmatpush1.msra.mxu0 0.0
    %2189 = vmatprep.subr.mxu0 0.0
    %2190 = vmatpush1.msra.mxu0 0.0
    %2191 = vmatprep.subr.mxu0 0.0
    %2192 = vmatpush1.msra.mxu0 0.0
    %2193 = vmatprep.subr.mxu0 0.0
    %2194 = vmatpush1.msra.mxu0 0.0
    %2195 = vmatprep.subr.mxu0 0.0
    %2196 = vmatpush1.msra.mxu0 0.0
    %2197 = vmatprep.subr.mxu0 0.0
    %2198 = vmatpush1.msra.mxu0 0.0
    %2199 = vmatprep.subr.mxu0 0.0
    %2200 = vmatpush1.msra.mxu0 0.0
    %2201 = vmatprep.subr.mxu0 0.0
    %2202 = vmatpush1.msra.mxu0 0.0
    %2203 = vmatprep.subr.mxu0 0.0
    %2204 = vmatpush1.msra.mxu0 0.0
    %2205 = vmatprep.subr.mxu0 0.0
    %2206 = vmatpush1.msra.mxu0 0.0
    %2207 = vmatprep.subr.mxu0 0.0
    %2208 = vmatpush1.msra.mxu0 0.0
    %2209 = vmatprep.subr.mxu0 0.0
    %2210 = vmatpush1.msra.mxu0 0.0
    %2211 = vmatprep.subr.mxu0 0.0
    %2212 = vmatpush1.msra.mxu0 0.0
    %2213 = vmatprep.subr.mxu0 0.0
    %2214 = vmatpush1.msra.mxu0 0.0
    %2215 = vmatprep.subr.mxu0 0.0
    %2216 = vmatpush1.msra.mxu0 0.0
    %2217 = vmatprep.subr.mxu0 0.0
    %2218 = vmatpush1.msra.mxu0 0.0
    %2219 = vmatprep.subr.mxu0 0.0
    %2220 = vmatpush1.msra.mxu0 0.0
    %2221 = vmatprep.mubr.f32.mxu0 0.0
    %2222 = vmatmul.mubr.f32.gmra.mrb[0].mxu0 %v2155
    %v2223 = vpop.f32.mrb[0].mxu0
    %v2224 = vadd.f32 0.0, %v2223
    %v2225 = vpop.f32.mrb[0].mxu0
    %2226 = vdwg.mxu0
    %2228 = vrot.lane.b32.xlu0 %v2224, 8
    %v2229 = vpop.permute.xlu0 %2228
    %2231 = vst.msk [vmem:[%s1889] sm:$0xff] %vm864, %v2229
    %2232 = vrot.lane.b32.xlu0 %v183, 116
    %v2233 = vpop.permute.xlu0 %2232
    %2234 = vrot.lane.b32.xlu0 %v271, 116
    %v2235 = vpop.permute.xlu0 %2234
    %v2236 = vsel %vm360, %v2233, 0
    %v2238 = vsel %vm360, %v2235, 0
    %2240 = vmatprep.subr.mxu0 0.0
    %2241 = vmatpush1.xpose.msra.mxu0 %v2238
    %2242 = vmatprep.subr.mxu0 0.0
    %2243 = vmatpush1.xpose.msra.mxu0 0.0
    %2244 = vmatprep.subr.mxu0 0.0
    %2245 = vmatpush1.xpose.msra.mxu0 0.0
    %2246 = vmatprep.subr.mxu0 0.0
    %2247 = vmatpush1.xpose.msra.mxu0 0.0
    %2248 = vmatprep.subr.mxu0 0.0
    %2249 = vmatpush1.xpose.msra.mxu0 0.0
    %2250 = vmatprep.subr.mxu0 0.0
    %2251 = vmatpush1.xpose.msra.mxu0 0.0
    %2252 = vmatprep.subr.mxu0 0.0
    %2253 = vmatpush1.xpose.msra.mxu0 0.0
    %2254 = vmatprep.subr.mxu0 0.0
    %2255 = vmatpush1.xpose.msra.mxu0 0.0
    %2256 = vmatprep.subr.mxu0 0.0
    %2257 = vmatpush1.xpose.msra.mxu0 0.0
    %2258 = vmatprep.subr.mxu0 0.0
    %2259 = vmatpush1.xpose.msra.mxu0 0.0
    %2260 = vmatprep.subr.mxu0 0.0
    %2261 = vmatpush1.xpose.msra.mxu0 0.0
    %2262 = vmatprep.subr.mxu0 0.0
    %2263 = vmatpush1.xpose.msra.mxu0 0.0
    %2264 = vmatprep.subr.mxu0 0.0
    %2265 = vmatpush1.xpose.msra.mxu0 0.0
    %2266 = vmatprep.subr.mxu0 0.0
    %2267 = vmatpush1.xpose.msra.mxu0 0.0
    %2268 = vmatprep.subr.mxu0 0.0
    %2269 = vmatpush1.xpose.msra.mxu0 0.0
    %2270 = vmatprep.subr.mxu0 0.0
    %2271 = vmatpush1.xpose.msra.mxu0 0.0
    %2272 = vmatprep.subr.mxu0 0.0
    %2273 = vmatpush1.xpose.msra.mxu0 0.0
    %2274 = vmatprep.subr.mxu0 0.0
    %2275 = vmatpush1.xpose.msra.mxu0 0.0
    %2276 = vmatprep.subr.mxu0 0.0
    %2277 = vmatpush1.xpose.msra.mxu0 0.0
    %2278 = vmatprep.subr.mxu0 0.0
    %2279 = vmatpush1.xpose.msra.mxu0 0.0
    %2280 = vmatprep.subr.mxu0 0.0
    %2281 = vmatpush1.xpose.msra.mxu0 0.0
    %2282 = vmatprep.subr.mxu0 0.0
    %2283 = vmatpush1.xpose.msra.mxu0 0.0
    %2284 = vmatprep.subr.mxu0 0.0
    %2285 = vmatpush1.xpose.msra.mxu0 0.0
    %2286 = vmatprep.subr.mxu0 0.0
    %2287 = vmatpush1.xpose.msra.mxu0 0.0
    %2288 = vmatprep.subr.mxu0 0.0
    %2289 = vmatpush1.xpose.msra.mxu0 0.0
    %2290 = vmatprep.subr.mxu0 0.0
    %2291 = vmatpush1.xpose.msra.mxu0 0.0
    %2292 = vmatprep.subr.mxu0 0.0
    %2293 = vmatpush1.xpose.msra.mxu0 0.0
    %2294 = vmatprep.subr.mxu0 0.0
    %2295 = vmatpush1.xpose.msra.mxu0 0.0
    %2296 = vmatprep.subr.mxu0 0.0
    %2297 = vmatpush1.xpose.msra.mxu0 0.0
    %2298 = vmatprep.subr.mxu0 0.0
    %2299 = vmatpush1.xpose.msra.mxu0 0.0
    %2300 = vmatprep.subr.mxu0 0.0
    %2301 = vmatpush1.xpose.msra.mxu0 0.0
    %2302 = vmatprep.subr.mxu0 0.0
    %2303 = vmatpush1.xpose.msra.mxu0 0.0
    %2304 = vmatprep.mubr.f32.mxu0 0.0
    %2305 = vmatmul.mubr.f32.gmra.mrb[0].mxu0 %v2236
    %v2306 = vpop.f32.mrb[0].mxu0
    %v2307 = vadd.f32 0.0, %v2306
    %v2308 = vpop.f32.mrb[0].mxu0
    %2309 = vdwg.mxu0
    %v2310 = vsel %vm437, %v2307, -inf
    %2311 = vmax.xlane.f32.xlu0 %v2310
    %v2312 = vpop.xlane.xlu0 %2311
    %v2313 = vsub.f32 %v2307, %v2312
    %v2314 = vmul.f32 %v2313, 1.442695
    %v2315 = vpow.pop %v2314
    %v2316 = vsel %vm437, %v2315, 0.0
    %2317 = vadd.xlane.f32.xlu0 %v2316
    %v2318 = vpop.xlane.xlu0 %2317
    %v2319 = vrcp.pop %v2318
    %v2320 = vmul.f32 %v2315, %v2319
    %2321 = vrot.lane.b32.xlu0 %v359, 116
    %v2322 = vpop.permute.xlu0 %2321
    %v2325 = vsel %vm437, %v2320, 0
    %2327 = vmatprep.subr.mxu0 0.0
    %2328 = vmatpush1.msra.mxu0 %v2322
    %2329 = vmatprep.subr.mxu0 0.0
    %2330 = vmatpush1.msra.mxu0 0.0
    %2331 = vmatprep.subr.mxu0 0.0
    %2332 = vmatpush1.msra.mxu0 0.0
    %2333 = vmatprep.subr.mxu0 0.0
    %2334 = vmatpush1.msra.mxu0 0.0
    %2335 = vmatprep.subr.mxu0 0.0
    %2336 = vmatpush1.msra.mxu0 0.0
    %2337 = vmatprep.subr.mxu0 0.0
    %2338 = vmatpush1.msra.mxu0 0.0
    %2339 = vmatprep.subr.mxu0 0.0
    %2340 = vmatpush1.msra.mxu0 0.0
    %2341 = vmatprep.subr.mxu0 0.0
    %2342 = vmatpush1.msra.mxu0 0.0
    %2343 = vmatprep.subr.mxu0 0.0
    %2344 = vmatpush1.msra.mxu0 0.0
    %2345 = vmatprep.subr.mxu0 0.0
    %2346 = vmatpush1.msra.mxu0 0.0
    %2347 = vmatprep.subr.mxu0 0.0
    %2348 = vmatpush1.msra.mxu0 0.0
    %2349 = vmatprep.subr.mxu0 0.0
    %2350 = vmatpush1.msra.mxu0 0.0
    %2351 = vmatprep.subr.mxu0 0.0
    %2352 = vmatpush1.msra.mxu0 0.0
    %2353 = vmatprep.subr.mxu0 0.0
    %2354 = vmatpush1.msra.mxu0 0.0
    %2355 = vmatprep.subr.mxu0 0.0
    %2356 = vmatpush1.msra.mxu0 0.0
    %2357 = vmatprep.subr.mxu0 0.0
    %2358 = vmatpush1.msra.mxu0 0.0
    %2359 = vmatprep.subr.mxu0 0.0
    %2360 = vmatpush1.msra.mxu0 0.0
    %2361 = vmatprep.subr.mxu0 0.0
    %2362 = vmatpush1.msra.mxu0 0.0
    %2363 = vmatprep.subr.mxu0 0.0
    %2364 = vmatpush1.msra.mxu0 0.0
    %2365 = vmatprep.subr.mxu0 0.0
    %2366 = vmatpush1.msra.mxu0 0.0
    %2367 = vmatprep.subr.mxu0 0.0
    %2368 = vmatpush1.msra.mxu0 0.0
    %2369 = vmatprep.subr.mxu0 0.0
    %2370 = vmatpush1.msra.mxu0 0.0
    %2371 = vmatprep.subr.mxu0 0.0
    %2372 = vmatpush1.msra.mxu0 0.0
    %2373 = vmatprep.subr.mxu0 0.0
    %2374 = vmatpush1.msra.mxu0 0.0
    %2375 = vmatprep.subr.mxu0 0.0
    %2376 = vmatpush1.msra.mxu0 0.0
    %2377 = vmatprep.subr.mxu0 0.0
    %2378 = vmatpush1.msra.mxu0 0.0
    %2379 = vmatprep.subr.mxu0 0.0
    %2380 = vmatpush1.msra.mxu0 0.0
    %2381 = vmatprep.subr.mxu0 0.0
    %2382 = vmatpush1.msra.mxu0 0.0
    %2383 = vmatprep.subr.mxu0 0.0
    %2384 = vmatpush1.msra.mxu0 0.0
    %2385 = vmatprep.subr.mxu0 0.0
    %2386 = vmatpush1.msra.mxu0 0.0
    %2387 = vmatprep.subr.mxu0 0.0
    %2388 = vmatpush1.msra.mxu0 0.0
    %2389 = vmatprep.subr.mxu0 0.0
    %2390 = vmatpush1.msra.mxu0 0.0
    %2391 = vmatprep.mubr.f32.mxu0 0.0
    %2392 = vmatmul.mubr.f32.gmra.mrb[0].mxu0 %v2325
    %v2393 = vpop.f32.mrb[0].mxu0
    %v2394 = vadd.f32 0.0, %v2393
    %v2395 = vpop.f32.mrb[0].mxu0
    %2396 = vdwg.mxu0
    %2398 = vrot.lane.b32.xlu0 %v2394, 12
    %v2399 = vpop.permute.xlu0 %2398
    %2401 = vst.msk [vmem:[%s1889] sm:$0xff] %vm1035, %v2399
    %2402 = vrot.lane.b32.xlu0 %v183, 112
    %v2403 = vpop.permute.xlu0 %2402
    %2404 = vrot.lane.b32.xlu0 %v271, 112
    %v2405 = vpop.permute.xlu0 %2404
    %v2406 = vsel %vm360, %v2403, 0
    %v2408 = vsel %vm360, %v2405, 0
    %2410 = vmatprep.subr.mxu0 0.0
    %2411 = vmatpush1.xpose.msra.mxu0 %v2408
    %2412 = vmatprep.subr.mxu0 0.0
    %2413 = vmatpush1.xpose.msra.mxu0 0.0
    %2414 = vmatprep.subr.mxu0 0.0
    %2415 = vmatpush1.xpose.msra.mxu0 0.0
    %2416 = vmatprep.subr.mxu0 0.0
    %2417 = vmatpush1.xpose.msra.mxu0 0.0
    %2418 = vmatprep.subr.mxu0 0.0
    %2419 = vmatpush1.xpose.msra.mxu0 0.0
    %2420 = vmatprep.subr.mxu0 0.0
    %2421 = vmatpush1.xpose.msra.mxu0 0.0
    %2422 = vmatprep.subr.mxu0 0.0
    %2423 = vmatpush1.xpose.msra.mxu0 0.0
    %2424 = vmatprep.subr.mxu0 0.0
    %2425 = vmatpush1.xpose.msra.mxu0 0.0
    %2426 = vmatprep.subr.mxu0 0.0
    %2427 = vmatpush1.xpose.msra.mxu0 0.0
    %2428 = vmatprep.subr.mxu0 0.0
    %2429 = vmatpush1.xpose.msra.mxu0 0.0
    %2430 = vmatprep.subr.mxu0 0.0
    %2431 = vmatpush1.xpose.msra.mxu0 0.0
    %2432 = vmatprep.subr.mxu0 0.0
    %2433 = vmatpush1.xpose.msra.mxu0 0.0
    %2434 = vmatprep.subr.mxu0 0.0
    %2435 = vmatpush1.xpose.msra.mxu0 0.0
    %2436 = vmatprep.subr.mxu0 0.0
    %2437 = vmatpush1.xpose.msra.mxu0 0.0
    %2438 = vmatprep.subr.mxu0 0.0
    %2439 = vmatpush1.xpose.msra.mxu0 0.0
    %2440 = vmatprep.subr.mxu0 0.0
    %2441 = vmatpush1.xpose.msra.mxu0 0.0
    %2442 = vmatprep.subr.mxu0 0.0
    %2443 = vmatpush1.xpose.msra.mxu0 0.0
    %2444 = vmatprep.subr.mxu0 0.0
    %2445 = vmatpush1.xpose.msra.mxu0 0.0
    %2446 = vmatprep.subr.mxu0 0.0
    %2447 = vmatpush1.xpose.msra.mxu0 0.0
    %2448 = vmatprep.subr.mxu0 0.0
    %2449 = vmatpush1.xpose.msra.mxu0 0.0
    %2450 = vmatprep.subr.mxu0 0.0
    %2451 = vmatpush1.xpose.msra.mxu0 0.0
    %2452 = vmatprep.subr.mxu0 0.0
    %2453 = vmatpush1.xpose.msra.mxu0 0.0
    %2454 = vmatprep.subr.mxu0 0.0
    %2455 = vmatpush1.xpose.msra.mxu0 0.0
    %2456 = vmatprep.subr.mxu0 0.0
    %2457 = vmatpush1.xpose.msra.mxu0 0.0
    %2458 = vmatprep.subr.mxu0 0.0
    %2459 = vmatpush1.xpose.msra.mxu0 0.0
    %2460 = vmatprep.subr.mxu0 0.0
    %2461 = vmatpush1.xpose.msra.mxu0 0.0
    %2462 = vmatprep.subr.mxu0 0.0
    %2463 = vmatpush1.xpose.msra.mxu0 0.0
    %2464 = vmatprep.subr.mxu0 0.0
    %2465 = vmatpush1.xpose.msra.mxu0 0.0
    %2466 = vmatprep.subr.mxu0 0.0
    %2467 = vmatpush1.xpose.msra.mxu0 0.0
    %2468 = vmatprep.subr.mxu0 0.0
    %2469 = vmatpush1.xpose.msra.mxu0 0.0
    %2470 = vmatprep.subr.mxu0 0.0
    %2471 = vmatpush1.xpose.msra.mxu0 0.0
    %2472 = vmatprep.subr.mxu0 0.0
    %2473 = vmatpush1.xpose.msra.mxu0 0.0
    %2474 = vmatprep.mubr.f32.mxu0 0.0
    %2475 = vmatmul.mubr.f32.gmra.mrb[0].mxu0 %v2406
    %v2476 = vpop.f32.mrb[0].mxu0
    %v2477 = vadd.f32 0.0, %v2476
    %v2478 = vpop.f32.mrb[0].mxu0
    %2479 = vdwg.mxu0
    %v2480 = vsel %vm437, %v2477, -inf
    %2481 = vmax.xlane.f32.xlu0 %v2480
    %v2482 = vpop.xlane.xlu0 %2481
    %v2483 = vsub.f32 %v2477, %v2482
    %v2484 = vmul.f32 %v2483, 1.442695
    %v2485 = vpow.pop %v2484
    %v2486 = vsel %vm437, %v2485, 0.0
    %2487 = vadd.xlane.f32.xlu0 %v2486
    %v2488 = vpop.xlane.xlu0 %2487
    %v2489 = vrcp.pop %v2488
    %v2490 = vmul.f32 %v2485, %v2489
    %2491 = vrot.lane.b32.xlu0 %v359, 112
    %v2492 = vpop.permute.xlu0 %2491
    %v2495 = vsel %vm437, %v2490, 0
    %2497 = vmatprep.subr.mxu0 0.0
    %2498 = vmatpush1.msra.mxu0 %v2492
    %2499 = vmatprep.subr.mxu0 0.0
    %2500 = vmatpush1.msra.mxu0 0.0
    %2501 = vmatprep.subr.mxu0 0.0
    %2502 = vmatpush1.msra.mxu0 0.0
    %2503 = vmatprep.subr.mxu0 0.0
    %2504 = vmatpush1.msra.mxu0 0.0
    %2505 = vmatprep.subr.mxu0 0.0
    %2506 = vmatpush1.msra.mxu0 0.0
    %2507 = vmatprep.subr.mxu0 0.0
    %2508 = vmatpush1.msra.mxu0 0.0
    %2509 = vmatprep.subr.mxu0 0.0
    %2510 = vmatpush1.msra.mxu0 0.0
    %2511 = vmatprep.subr.mxu0 0.0
    %2512 = vmatpush1.msra.mxu0 0.0
    %2513 = vmatprep.subr.mxu0 0.0
    %2514 = vmatpush1.msra.mxu0 0.0
    %2515 = vmatprep.subr.mxu0 0.0
    %2516 = vmatpush1.msra.mxu0 0.0
    %2517 = vmatprep.subr.mxu0 0.0
    %2518 = vmatpush1.msra.mxu0 0.0
    %2519 = vmatprep.subr.mxu0 0.0
    %2520 = vmatpush1.msra.mxu0 0.0
    %2521 = vmatprep.subr.mxu0 0.0
    %2522 = vmatpush1.msra.mxu0 0.0
    %2523 = vmatprep.subr.mxu0 0.0
    %2524 = vmatpush1.msra.mxu0 0.0
    %2525 = vmatprep.subr.mxu0 0.0
    %2526 = vmatpush1.msra.mxu0 0.0
    %2527 = vmatprep.subr.mxu0 0.0
    %2528 = vmatpush1.msra.mxu0 0.0
    %2529 = vmatprep.subr.mxu0 0.0
    %2530 = vmatpush1.msra.mxu0 0.0
    %2531 = vmatprep.subr.mxu0 0.0
    %2532 = vmatpush1.msra.mxu0 0.0
    %2533 = vmatprep.subr.mxu0 0.0
    %2534 = vmatpush1.msra.mxu0 0.0
    %2535 = vmatprep.subr.mxu0 0.0
    %2536 = vmatpush1.msra.mxu0 0.0
    %2537 = vmatprep.subr.mxu0 0.0
    %2538 = vmatpush1.msra.mxu0 0.0
    %2539 = vmatprep.subr.mxu0 0.0
    %2540 = vmatpush1.msra.mxu0 0.0
    %2541 = vmatprep.subr.mxu0 0.0
    %2542 = vmatpush1.msra.mxu0 0.0
    %2543 = vmatprep.subr.mxu0 0.0
    %2544 = vmatpush1.msra.mxu0 0.0
    %2545 = vmatprep.subr.mxu0 0.0
    %2546 = vmatpush1.msra.mxu0 0.0
    %2547 = vmatprep.subr.mxu0 0.0
    %2548 = vmatpush1.msra.mxu0 0.0
    %2549 = vmatprep.subr.mxu0 0.0
    %2550 = vmatpush1.msra.mxu0 0.0
    %2551 = vmatprep.subr.mxu0 0.0
    %2552 = vmatpush1.msra.mxu0 0.0
    %2553 = vmatprep.subr.mxu0 0.0
    %2554 = vmatpush1.msra.mxu0 0.0
    %2555 = vmatprep.subr.mxu0 0.0
    %2556 = vmatpush1.msra.mxu0 0.0
    %2557 = vmatprep.subr.mxu0 0.0
    %2558 = vmatpush1.msra.mxu0 0.0
    %2559 = vmatprep.subr.mxu0 0.0
    %2560 = vmatpush1.msra.mxu0 0.0
    %2561 = vmatprep.mubr.f32.mxu0 0.0
    %2562 = vmatmul.mubr.f32.gmra.mrb[0].mxu0 %v2495
    %v2563 = vpop.f32.mrb[0].mxu0
    %v2564 = vadd.f32 0.0, %v2563
    %v2565 = vpop.f32.mrb[0].mxu0
    %2566 = vdwg.mxu0
    %2568 = vrot.lane.b32.xlu0 %v2564, 16
    %v2569 = vpop.permute.xlu0 %2568
    %2571 = vst.msk [vmem:[%s1889] sm:$0xff] %vm1206, %v2569
    %2572 = vrot.lane.b32.xlu0 %v183, 108
    %v2573 = vpop.permute.xlu0 %2572
    %2574 = vrot.lane.b32.xlu0 %v271, 108
    %v2575 = vpop.permute.xlu0 %2574
    %v2576 = vsel %vm360, %v2573, 0
    %v2578 = vsel %vm360, %v2575, 0
    %2580 = vmatprep.subr.mxu0 0.0
    %2581 = vmatpush1.xpose.msra.mxu0 %v2578
    %2582 = vmatprep.subr.mxu0 0.0
    %2583 = vmatpush1.xpose.msra.mxu0 0.0
    %2584 = vmatprep.subr.mxu0 0.0
    %2585 = vmatpush1.xpose.msra.mxu0 0.0
    %2586 = vmatprep.subr.mxu0 0.0
    %2587 = vmatpush1.xpose.msra.mxu0 0.0
    %2588 = vmatprep.subr.mxu0 0.0
    %2589 = vmatpush1.xpose.msra.mxu0 0.0
    %2590 = vmatprep.subr.mxu0 0.0
    %2591 = vmatpush1.xpose.msra.mxu0 0.0
    %2592 = vmatprep.subr.mxu0 0.0
    %2593 = vmatpush1.xpose.msra.mxu0 0.0
    %2594 = vmatprep.subr.mxu0 0.0
    %2595 = vmatpush1.xpose.msra.mxu0 0.0
    %2596 = vmatprep.subr.mxu0 0.0
    %2597 = vmatpush1.xpose.msra.mxu0 0.0
    %2598 = vmatprep.subr.mxu0 0.0
    %2599 = vmatpush1.xpose.msra.mxu0 0.0
    %2600 = vmatprep.subr.mxu0 0.0
    %2601 = vmatpush1.xpose.msra.mxu0 0.0
    %2602 = vmatprep.subr.mxu0 0.0
    %2603 = vmatpush1.xpose.msra.mxu0 0.0
    %2604 = vmatprep.subr.mxu0 0.0
    %2605 = vmatpush1.xpose.msra.mxu0 0.0
    %2606 = vmatprep.subr.mxu0 0.0
    %2607 = vmatpush1.xpose.msra.mxu0 0.0
    %2608 = vmatprep.subr.mxu0 0.0
    %2609 = vmatpush1.xpose.msra.mxu0 0.0
    %2610 = vmatprep.subr.mxu0 0.0
    %2611 = vmatpush1.xpose.msra.mxu0 0.0
    %2612 = vmatprep.subr.mxu0 0.0
    %2613 = vmatpush1.xpose.msra.mxu0 0.0
    %2614 = vmatprep.subr.mxu0 0.0
    %2615 = vmatpush1.xpose.msra.mxu0 0.0
    %2616 = vmatprep.subr.mxu0 0.0
    %2617 = vmatpush1.xpose.msra.mxu0 0.0
    %2618 = vmatprep.subr.mxu0 0.0
    %2619 = vmatpush1.xpose.msra.mxu0 0.0
    %2620 = vmatprep.subr.mxu0 0.0
    %2621 = vmatpush1.xpose.msra.mxu0 0.0
    %2622 = vmatprep.subr.mxu0 0.0
    %2623 = vmatpush1.xpose.msra.mxu0 0.0
    %2624 = vmatprep.subr.mxu0 0.0
    %2625 = vmatpush1.xpose.msra.mxu0 0.0
    %2626 = vmatprep.subr.mxu0 0.0
    %2627 = vmatpush1.xpose.msra.mxu0 0.0
    %2628 = vmatprep.subr.mxu0 0.0
    %2629 = vmatpush1.xpose.msra.mxu0 0.0
    %2630 = vmatprep.subr.mxu0 0.0
    %2631 = vmatpush1.xpose.msra.mxu0 0.0
    %2632 = vmatprep.subr.mxu0 0.0
    %2633 = vmatpush1.xpose.msra.mxu0 0.0
    %2634 = vmatprep.subr.mxu0 0.0
    %2635 = vmatpush1.xpose.msra.mxu0 0.0
    %2636 = vmatprep.subr.mxu0 0.0
    %2637 = vmatpush1.xpose.msra.mxu0 0.0
    %2638 = vmatprep.subr.mxu0 0.0
    %2639 = vmatpush1.xpose.msra.mxu0 0.0
    %2640 = vmatprep.subr.mxu0 0.0
    %2641 = vmatpush1.xpose.msra.mxu0 0.0
    %2642 = vmatprep.subr.mxu0 0.0
    %2643 = vmatpush1.xpose.msra.mxu0 0.0
    %2644 = vmatprep.mubr.f32.mxu0 0.0
    %2645 = vmatmul.mubr.f32.gmra.mrb[0].mxu0 %v2576
    %v2646 = vpop.f32.mrb[0].mxu0
    %v2647 = vadd.f32 0.0, %v2646
    %v2648 = vpop.f32.mrb[0].mxu0
    %2649 = vdwg.mxu0
    %v2650 = vsel %vm437, %v2647, -inf
    %2651 = vmax.xlane.f32.xlu0 %v2650
    %v2652 = vpop.xlane.xlu0 %2651
    %v2653 = vsub.f32 %v2647, %v2652
    %v2654 = vmul.f32 %v2653, 1.442695
    %v2655 = vpow.pop %v2654
    %v2656 = vsel %vm437, %v2655, 0.0
    %2657 = vadd.xlane.f32.xlu0 %v2656
    %v2658 = vpop.xlane.xlu0 %2657
    %v2659 = vrcp.pop %v2658
    %v2660 = vmul.f32 %v2655, %v2659
    %2661 = vrot.lane.b32.xlu0 %v359, 108
    %v2662 = vpop.permute.xlu0 %2661
    %v2665 = vsel %vm437, %v2660, 0
    %2667 = vmatprep.subr.mxu0 0.0
    %2668 = vmatpush1.msra.mxu0 %v2662
    %2669 = vmatprep.subr.mxu0 0.0
    %2670 = vmatpush1.msra.mxu0 0.0
    %2671 = vmatprep.subr.mxu0 0.0
    %2672 = vmatpush1.msra.mxu0 0.0
    %2673 = vmatprep.subr.mxu0 0.0
    %2674 = vmatpush1.msra.mxu0 0.0
    %2675 = vmatprep.subr.mxu0 0.0
    %2676 = vmatpush1.msra.mxu0 0.0
    %2677 = vmatprep.subr.mxu0 0.0
    %2678 = vmatpush1.msra.mxu0 0.0
    %2679 = vmatprep.subr.mxu0 0.0
    %2680 = vmatpush1.msra.mxu0 0.0
    %2681 = vmatprep.subr.mxu0 0.0
    %2682 = vmatpush1.msra.mxu0 0.0
    %2683 = vmatprep.subr.mxu0 0.0
    %2684 = vmatpush1.msra.mxu0 0.0
    %2685 = vmatprep.subr.mxu0 0.0
    %2686 = vmatpush1.msra.mxu0 0.0
    %2687 = vmatprep.subr.mxu0 0.0
    %2688 = vmatpush1.msra.mxu0 0.0
    %2689 = vmatprep.subr.mxu0 0.0
    %2690 = vmatpush1.msra.mxu0 0.0
    %2691 = vmatprep.subr.mxu0 0.0
    %2692 = vmatpush1.msra.mxu0 0.0
    %2693 = vmatprep.subr.mxu0 0.0
    %2694 = vmatpush1.msra.mxu0 0.0
    %2695 = vmatprep.subr.mxu0 0.0
    %2696 = vmatpush1.msra.mxu0 0.0
    %2697 = vmatprep.subr.mxu0 0.0
    %2698 = vmatpush1.msra.mxu0 0.0
    %2699 = vmatprep.subr.mxu0 0.0
    %2700 = vmatpush1.msra.mxu0 0.0
    %2701 = vmatprep.subr.mxu0 0.0
    %2702 = vmatpush1.msra.mxu0 0.0
    %2703 = vmatprep.subr.mxu0 0.0
    %2704 = vmatpush1.msra.mxu0 0.0
    %2705 = vmatprep.subr.mxu0 0.0
    %2706 = vmatpush1.msra.mxu0 0.0
    %2707 = vmatprep.subr.mxu0 0.0
    %2708 = vmatpush1.msra.mxu0 0.0
    %2709 = vmatprep.subr.mxu0 0.0
    %2710 = vmatpush1.msra.mxu0 0.0
    %2711 = vmatprep.subr.mxu0 0.0
    %2712 = vmatpush1.msra.mxu0 0.0
    %2713 = vmatprep.subr.mxu0 0.0
    %2714 = vmatpush1.msra.mxu0 0.0
    %2715 = vmatprep.subr.mxu0 0.0
    %2716 = vmatpush1.msra.mxu0 0.0
    %2717 = vmatprep.subr.mxu0 0.0
    %2718 = vmatpush1.msra.mxu0 0.0
    %2719 = vmatprep.subr.mxu0 0.0
    %2720 = vmatpush1.msra.mxu0 0.0
    %2721 = vmatprep.subr.mxu0 0.0
    %2722 = vmatpush1.msra.mxu0 0.0
    %2723 = vmatprep.subr.mxu0 0.0
    %2724 = vmatpush1.msra.mxu0 0.0
    %2725 = vmatprep.subr.mxu0 0.0
    %2726 = vmatpush1.msra.mxu0 0.0
    %2727 = vmatprep.subr.mxu0 0.0
    %2728 = vmatpush1.msra.mxu0 0.0
    %2729 = vmatprep.subr.mxu0 0.0
    %2730 = vmatpush1.msra.mxu0 0.0
    %2731 = vmatprep.mubr.f32.mxu0 0.0
    %2732 = vmatmul.mubr.f32.gmra.mrb[0].mxu0 %v2665
    %v2733 = vpop.f32.mrb[0].mxu0
    %v2734 = vadd.f32 0.0, %v2733
    %v2735 = vpop.f32.mrb[0].mxu0
    %2736 = vdwg.mxu0
    %2738 = vrot.lane.b32.xlu0 %v2734, 20
    %v2739 = vpop.permute.xlu0 %2738
    %2741 = vst.msk [vmem:[%s1889] sm:$0xff] %vm1377, %v2739
    %2742 = vrot.lane.b32.xlu0 %v183, 104
    %v2743 = vpop.permute.xlu0 %2742
    %2744 = vrot.lane.b32.xlu0 %v271, 104
    %v2745 = vpop.permute.xlu0 %2744
    %v2746 = vsel %vm360, %v2743, 0
    %v2748 = vsel %vm360, %v2745, 0
    %2750 = vmatprep.subr.mxu0 0.0
    %2751 = vmatpush1.xpose.msra.mxu0 %v2748
    %2752 = vmatprep.subr.mxu0 0.0
    %2753 = vmatpush1.xpose.msra.mxu0 0.0
    %2754 = vmatprep.subr.mxu0 0.0
    %2755 = vmatpush1.xpose.msra.mxu0 0.0
    %2756 = vmatprep.subr.mxu0 0.0
    %2757 = vmatpush1.xpose.msra.mxu0 0.0
    %2758 = vmatprep.subr.mxu0 0.0
    %2759 = vmatpush1.xpose.msra.mxu0 0.0
    %2760 = vmatprep.subr.mxu0 0.0
    %2761 = vmatpush1.xpose.msra.mxu0 0.0
    %2762 = vmatprep.subr.mxu0 0.0
    %2763 = vmatpush1.xpose.msra.mxu0 0.0
    %2764 = vmatprep.subr.mxu0 0.0
    %2765 = vmatpush1.xpose.msra.mxu0 0.0
    %2766 = vmatprep.subr.mxu0 0.0
    %2767 = vmatpush1.xpose.msra.mxu0 0.0
    %2768 = vmatprep.subr.mxu0 0.0
    %2769 = vmatpush1.xpose.msra.mxu0 0.0
    %2770 = vmatprep.subr.mxu0 0.0
    %2771 = vmatpush1.xpose.msra.mxu0 0.0
    %2772 = vmatprep.subr.mxu0 0.0
    %2773 = vmatpush1.xpose.msra.mxu0 0.0
    %2774 = vmatprep.subr.mxu0 0.0
    %2775 = vmatpush1.xpose.msra.mxu0 0.0
    %2776 = vmatprep.subr.mxu0 0.0
    %2777 = vmatpush1.xpose.msra.mxu0 0.0
    %2778 = vmatprep.subr.mxu0 0.0
    %2779 = vmatpush1.xpose.msra.mxu0 0.0
    %2780 = vmatprep.subr.mxu0 0.0
    %2781 = vmatpush1.xpose.msra.mxu0 0.0
    %2782 = vmatprep.subr.mxu0 0.0
    %2783 = vmatpush1.xpose.msra.mxu0 0.0
    %2784 = vmatprep.subr.mxu0 0.0
    %2785 = vmatpush1.xpose.msra.mxu0 0.0
    %2786 = vmatprep.subr.mxu0 0.0
    %2787 = vmatpush1.xpose.msra.mxu0 0.0
    %2788 = vmatprep.subr.mxu0 0.0
    %2789 = vmatpush1.xpose.msra.mxu0 0.0
    %2790 = vmatprep.subr.mxu0 0.0
    %2791 = vmatpush1.xpose.msra.mxu0 0.0
    %2792 = vmatprep.subr.mxu0 0.0
    %2793 = vmatpush1.xpose.msra.mxu0 0.0
    %2794 = vmatprep.subr.mxu0 0.0
    %2795 = vmatpush1.xpose.msra.mxu0 0.0
    %2796 = vmatprep.subr.mxu0 0.0
    %2797 = vmatpush1.xpose.msra.mxu0 0.0
    %2798 = vmatprep.subr.mxu0 0.0
    %2799 = vmatpush1.xpose.msra.mxu0 0.0
    %2800 = vmatprep.subr.mxu0 0.0
    %2801 = vmatpush1.xpose.msra.mxu0 0.0
    %2802 = vmatprep.subr.mxu0 0.0
    %2803 = vmatpush1.xpose.msra.mxu0 0.0
    %2804 = vmatprep.subr.mxu0 0.0
    %2805 = vmatpush1.xpose.msra.mxu0 0.0
    %2806 = vmatprep.subr.mxu0 0.0
    %2807 = vmatpush1.xpose.msra.mxu0 0.0
    %2808 = vmatprep.subr.mxu0 0.0
    %2809 = vmatpush1.xpose.msra.mxu0 0.0
    %2810 = vmatprep.subr.mxu0 0.0
    %2811 = vmatpush1.xpose.msra.mxu0 0.0
    %2812 = vmatprep.subr.mxu0 0.0
    %2813 = vmatpush1.xpose.msra.mxu0 0.0
    %2814 = vmatprep.mubr.f32.mxu0 0.0
    %2815 = vmatmul.mubr.f32.gmra.mrb[0].mxu0 %v2746
    %v2816 = vpop.f32.mrb[0].mxu0
    %v2817 = vadd.f32 0.0, %v2816
    %v2818 = vpop.f32.mrb[0].mxu0
    %2819 = vdwg.mxu0
    %v2820 = vsel %vm437, %v2817, -inf
    %2821 = vmax.xlane.f32.xlu0 %v2820
    %v2822 = vpop.xlane.xlu0 %2821
    %v2823 = vsub.f32 %v2817, %v2822
    %v2824 = vmul.f32 %v2823, 1.442695
    %v2825 = vpow.pop %v2824
    %v2826 = vsel %vm437, %v2825, 0.0
    %2827 = vadd.xlane.f32.xlu0 %v2826
    %v2828 = vpop.xlane.xlu0 %2827
    %v2829 = vrcp.pop %v2828
    %v2830 = vmul.f32 %v2825, %v2829
    %2831 = vrot.lane.b32.xlu0 %v359, 104
    %v2832 = vpop.permute.xlu0 %2831
    %v2835 = vsel %vm437, %v2830, 0
    %2837 = vmatprep.subr.mxu0 0.0
    %2838 = vmatpush1.msra.mxu0 %v2832
    %2839 = vmatprep.subr.mxu0 0.0
    %2840 = vmatpush1.msra.mxu0 0.0
    %2841 = vmatprep.subr.mxu0 0.0
    %2842 = vmatpush1.msra.mxu0 0.0
    %2843 = vmatprep.subr.mxu0 0.0
    %2844 = vmatpush1.msra.mxu0 0.0
    %2845 = vmatprep.subr.mxu0 0.0
    %2846 = vmatpush1.msra.mxu0 0.0
    %2847 = vmatprep.subr.mxu0 0.0
    %2848 = vmatpush1.msra.mxu0 0.0
    %2849 = vmatprep.subr.mxu0 0.0
    %2850 = vmatpush1.msra.mxu0 0.0
    %2851 = vmatprep.subr.mxu0 0.0
    %2852 = vmatpush1.msra.mxu0 0.0
    %2853 = vmatprep.subr.mxu0 0.0
    %2854 = vmatpush1.msra.mxu0 0.0
    %2855 = vmatprep.subr.mxu0 0.0
    %2856 = vmatpush1.msra.mxu0 0.0
    %2857 = vmatprep.subr.mxu0 0.0
    %2858 = vmatpush1.msra.mxu0 0.0
    %2859 = vmatprep.subr.mxu0 0.0
    %2860 = vmatpush1.msra.mxu0 0.0
    %2861 = vmatprep.subr.mxu0 0.0
    %2862 = vmatpush1.msra.mxu0 0.0
    %2863 = vmatprep.subr.mxu0 0.0
    %2864 = vmatpush1.msra.mxu0 0.0
    %2865 = vmatprep.subr.mxu0 0.0
    %2866 = vmatpush1.msra.mxu0 0.0
    %2867 = vmatprep.subr.mxu0 0.0
    %2868 = vmatpush1.msra.mxu0 0.0
    %2869 = vmatprep.subr.mxu0 0.0
    %2870 = vmatpush1.msra.mxu0 0.0
    %2871 = vmatprep.subr.mxu0 0.0
    %2872 = vmatpush1.msra.mxu0 0.0
    %2873 = vmatprep.subr.mxu0 0.0
    %2874 = vmatpush1.msra.mxu0 0.0
    %2875 = vmatprep.subr.mxu0 0.0
    %2876 = vmatpush1.msra.mxu0 0.0
    %2877 = vmatprep.subr.mxu0 0.0
    %2878 = vmatpush1.msra.mxu0 0.0
    %2879 = vmatprep.subr.mxu0 0.0
    %2880 = vmatpush1.msra.mxu0 0.0
    %2881 = vmatprep.subr.mxu0 0.0
    %2882 = vmatpush1.msra.mxu0 0.0
    %2883 = vmatprep.subr.mxu0 0.0
    %2884 = vmatpush1.msra.mxu0 0.0
    %2885 = vmatprep.subr.mxu0 0.0
    %2886 = vmatpush1.msra.mxu0 0.0
    %2887 = vmatprep.subr.mxu0 0.0
    %2888 = vmatpush1.msra.mxu0 0.0
    %2889 = vmatprep.subr.mxu0 0.0
    %2890 = vmatpush1.msra.mxu0 0.0
    %2891 = vmatprep.subr.mxu0 0.0
    %2892 = vmatpush1.msra.mxu0 0.0
    %2893 = vmatprep.subr.mxu0 0.0
    %2894 = vmatpush1.msra.mxu0 0.0
    %2895 = vmatprep.subr.mxu0 0.0
    %2896 = vmatpush1.msra.mxu0 0.0
    %2897 = vmatprep.subr.mxu0 0.0
    %2898 = vmatpush1.msra.mxu0 0.0
    %2899 = vmatprep.subr.mxu0 0.0
    %2900 = vmatpush1.msra.mxu0 0.0
    %2901 = vmatprep.mubr.f32.mxu0 0.0
    %2902 = vmatmul.mubr.f32.gmra.mrb[0].mxu0 %v2835
    %v2903 = vpop.f32.mrb[0].mxu0
    %v2904 = vadd.f32 0.0, %v2903
    %v2905 = vpop.f32.mrb[0].mxu0
    %2906 = vdwg.mxu0
    %2908 = vrot.lane.b32.xlu0 %v2904, 24
    %v2909 = vpop.permute.xlu0 %2908
    %2911 = vst.msk [vmem:[%s1889] sm:$0xff] %vm1548, %v2909
    %2912 = vrot.lane.b32.xlu0 %v183, 100
    %v2913 = vpop.permute.xlu0 %2912
    %2914 = vrot.lane.b32.xlu0 %v271, 100
    %v2915 = vpop.permute.xlu0 %2914
    %v2916 = vsel %vm360, %v2913, 0
    %v2918 = vsel %vm360, %v2915, 0
    %2920 = vmatprep.subr.mxu0 0.0
    %2921 = vmatpush1.xpose.msra.mxu0 %v2918
    %2922 = vmatprep.subr.mxu0 0.0
    %2923 = vmatpush1.xpose.msra.mxu0 0.0
    %2924 = vmatprep.subr.mxu0 0.0
    %2925 = vmatpush1.xpose.msra.mxu0 0.0
    %2926 = vmatprep.subr.mxu0 0.0
    %2927 = vmatpush1.xpose.msra.mxu0 0.0
    %2928 = vmatprep.subr.mxu0 0.0
    %2929 = vmatpush1.xpose.msra.mxu0 0.0
    %2930 = vmatprep.subr.mxu0 0.0
    %2931 = vmatpush1.xpose.msra.mxu0 0.0
    %2932 = vmatprep.subr.mxu0 0.0
    %2933 = vmatpush1.xpose.msra.mxu0 0.0
    %2934 = vmatprep.subr.mxu0 0.0
    %2935 = vmatpush1.xpose.msra.mxu0 0.0
    %2936 = vmatprep.subr.mxu0 0.0
    %2937 = vmatpush1.xpose.msra.mxu0 0.0
    %2938 = vmatprep.subr.mxu0 0.0
    %2939 = vmatpush1.xpose.msra.mxu0 0.0
    %2940 = vmatprep.subr.mxu0 0.0
    %2941 = vmatpush1.xpose.msra.mxu0 0.0
    %2942 = vmatprep.subr.mxu0 0.0
    %2943 = vmatpush1.xpose.msra.mxu0 0.0
    %2944 = vmatprep.subr.mxu0 0.0
    %2945 = vmatpush1.xpose.msra.mxu0 0.0
    %2946 = vmatprep.subr.mxu0 0.0
    %2947 = vmatpush1.xpose.msra.mxu0 0.0
    %2948 = vmatprep.subr.mxu0 0.0
    %2949 = vmatpush1.xpose.msra.mxu0 0.0
    %2950 = vmatprep.subr.mxu0 0.0
    %2951 = vmatpush1.xpose.msra.mxu0 0.0
    %2952 = vmatprep.subr.mxu0 0.0
    %2953 = vmatpush1.xpose.msra.mxu0 0.0
    %2954 = vmatprep.subr.mxu0 0.0
    %2955 = vmatpush1.xpose.msra.mxu0 0.0
    %2956 = vmatprep.subr.mxu0 0.0
    %2957 = vmatpush1.xpose.msra.mxu0 0.0
    %2958 = vmatprep.subr.mxu0 0.0
    %2959 = vmatpush1.xpose.msra.mxu0 0.0
    %2960 = vmatprep.subr.mxu0 0.0
    %2961 = vmatpush1.xpose.msra.mxu0 0.0
    %2962 = vmatprep.subr.mxu0 0.0
    %2963 = vmatpush1.xpose.msra.mxu0 0.0
    %2964 = vmatprep.subr.mxu0 0.0
    %2965 = vmatpush1.xpose.msra.mxu0 0.0
    %2966 = vmatprep.subr.mxu0 0.0
    %2967 = vmatpush1.xpose.msra.mxu0 0.0
    %2968 = vmatprep.subr.mxu0 0.0
    %2969 = vmatpush1.xpose.msra.mxu0 0.0
    %2970 = vmatprep.subr.mxu0 0.0
    %2971 = vmatpush1.xpose.msra.mxu0 0.0
    %2972 = vmatprep.subr.mxu0 0.0
    %2973 = vmatpush1.xpose.msra.mxu0 0.0
    %2974 = vmatprep.subr.mxu0 0.0
    %2975 = vmatpush1.xpose.msra.mxu0 0.0
    %2976 = vmatprep.subr.mxu0 0.0
    %2977 = vmatpush1.xpose.msra.mxu0 0.0
    %2978 = vmatprep.subr.mxu0 0.0
    %2979 = vmatpush1.xpose.msra.mxu0 0.0
    %2980 = vmatprep.subr.mxu0 0.0
    %2981 = vmatpush1.xpose.msra.mxu0 0.0
    %2982 = vmatprep.subr.mxu0 0.0
    %2983 = vmatpush1.xpose.msra.mxu0 0.0
    %2984 = vmatprep.mubr.f32.mxu0 0.0
    %2985 = vmatmul.mubr.f32.gmra.mrb[0].mxu0 %v2916
    %v2986 = vpop.f32.mrb[0].mxu0
    %v2987 = vadd.f32 0.0, %v2986
    %v2988 = vpop.f32.mrb[0].mxu0
    %2989 = vdwg.mxu0
    %v2990 = vsel %vm437, %v2987, -inf
    %2991 = vmax.xlane.f32.xlu0 %v2990
    %v2992 = vpop.xlane.xlu0 %2991
    %v2993 = vsub.f32 %v2987, %v2992
    %v2994 = vmul.f32 %v2993, 1.442695
    %v2995 = vpow.pop %v2994
    %v2996 = vsel %vm437, %v2995, 0.0
    %2997 = vadd.xlane.f32.xlu0 %v2996
    %v2998 = vpop.xlane.xlu0 %2997
    %v2999 = vrcp.pop %v2998
    %v3000 = vmul.f32 %v2995, %v2999
    %3001 = vrot.lane.b32.xlu0 %v359, 100
    %v3002 = vpop.permute.xlu0 %3001
    %v3005 = vsel %vm437, %v3000, 0
    %3007 = vmatprep.subr.mxu0 0.0
    %3008 = vmatpush1.msra.mxu0 %v3002
    %3009 = vmatprep.subr.mxu0 0.0
    %3010 = vmatpush1.msra.mxu0 0.0
    %3011 = vmatprep.subr.mxu0 0.0
    %3012 = vmatpush1.msra.mxu0 0.0
    %3013 = vmatprep.subr.mxu0 0.0
    %3014 = vmatpush1.msra.mxu0 0.0
    %3015 = vmatprep.subr.mxu0 0.0
    %3016 = vmatpush1.msra.mxu0 0.0
    %3017 = vmatprep.subr.mxu0 0.0
    %3018 = vmatpush1.msra.mxu0 0.0
    %3019 = vmatprep.subr.mxu0 0.0
    %3020 = vmatpush1.msra.mxu0 0.0
    %3021 = vmatprep.subr.mxu0 0.0
    %3022 = vmatpush1.msra.mxu0 0.0
    %3023 = vmatprep.subr.mxu0 0.0
    %3024 = vmatpush1.msra.mxu0 0.0
    %3025 = vmatprep.subr.mxu0 0.0
    %3026 = vmatpush1.msra.mxu0 0.0
    %3027 = vmatprep.subr.mxu0 0.0
    %3028 = vmatpush1.msra.mxu0 0.0
    %3029 = vmatprep.subr.mxu0 0.0
    %3030 = vmatpush1.msra.mxu0 0.0
    %3031 = vmatprep.subr.mxu0 0.0
    %3032 = vmatpush1.msra.mxu0 0.0
    %3033 = vmatprep.subr.mxu0 0.0
    %3034 = vmatpush1.msra.mxu0 0.0
    %3035 = vmatprep.subr.mxu0 0.0
    %3036 = vmatpush1.msra.mxu0 0.0
    %3037 = vmatprep.subr.mxu0 0.0
    %3038 = vmatpush1.msra.mxu0 0.0
    %3039 = vmatprep.subr.mxu0 0.0
    %3040 = vmatpush1.msra.mxu0 0.0
    %3041 = vmatprep.subr.mxu0 0.0
    %3042 = vmatpush1.msra.mxu0 0.0
    %3043 = vmatprep.subr.mxu0 0.0
    %3044 = vmatpush1.msra.mxu0 0.0
    %3045 = vmatprep.subr.mxu0 0.0
    %3046 = vmatpush1.msra.mxu0 0.0
    %3047 = vmatprep.subr.mxu0 0.0
    %3048 = vmatpush1.msra.mxu0 0.0
    %3049 = vmatprep.subr.mxu0 0.0
    %3050 = vmatpush1.msra.mxu0 0.0
    %3051 = vmatprep.subr.mxu0 0.0
    %3052 = vmatpush1.msra.mxu0 0.0
    %3053 = vmatprep.subr.mxu0 0.0
    %3054 = vmatpush1.msra.mxu0 0.0
    %3055 = vmatprep.subr.mxu0 0.0
    %3056 = vmatpush1.msra.mxu0 0.0
    %3057 = vmatprep.subr.mxu0 0.0
    %3058 = vmatpush1.msra.mxu0 0.0
    %3059 = vmatprep.subr.mxu0 0.0
    %3060 = vmatpush1.msra.mxu0 0.0
    %3061 = vmatprep.subr.mxu0 0.0
    %3062 = vmatpush1.msra.mxu0 0.0
    %3063 = vmatprep.subr.mxu0 0.0
    %3064 = vmatpush1.msra.mxu0 0.0
    %3065 = vmatprep.subr.mxu0 0.0
    %3066 = vmatpush1.msra.mxu0 0.0
    %3067 = vmatprep.subr.mxu0 0.0
    %3068 = vmatpush1.msra.mxu0 0.0
    %3069 = vmatprep.subr.mxu0 0.0
    %3070 = vmatpush1.msra.mxu0 0.0
    %3071 = vmatprep.mubr.f32.mxu0 0.0
    %3072 = vmatmul.mubr.f32.gmra.mrb[0].mxu0 %v3005
    %v3073 = vpop.f32.mrb[0].mxu0
    %v3074 = vadd.f32 0.0, %v3073
    %v3075 = vpop.f32.mrb[0].mxu0
    %3076 = vdwg.mxu0
    %3078 = vrot.lane.b32.xlu0 %v3074, 28
    %v3079 = vpop.permute.xlu0 %3078
    %3081 = vst.msk [vmem:[%s1889] sm:$0xff] %vm1719, %v3079
    %s3082 = scalar_lea.vmem [#allocation12], 64
    %3083 = vst.msk [vmem:[%s3082] sm:$0xff] %vm437, %v1815
    %3084 = vst.msk [vmem:[%s3082 + $0x8] sm:$0xff] %vm437, %v1979
    %3085 = vst.msk [vmem:[%s3082 + $0x10] sm:$0xff] %vm437, %v2150
    %3086 = vst.msk [vmem:[%s3082 + $0x18] sm:$0xff] %vm437, %v2320
    %3087 = vst.msk [vmem:[%s3082 + $0x20] sm:$0xff] %vm437, %v2490
    %3088 = vst.msk [vmem:[%s3082 + $0x28] sm:$0xff] %vm437, %v2660
    %3089 = vst.msk [vmem:[%s3082 + $0x30] sm:$0xff] %vm437, %v2830
    %3090 = vst.msk [vmem:[%s3082 + $0x38] sm:$0xff] %vm437, %v3000
    %v3091 = vld [vmem:[#allocation2] sm:$0xff]
    %v3092 = vld [vmem:[#allocation2 + $0x8] sm:$0xff]
    %3093 = vst.msk [vmem:[#allocation11] sm:$0xff] %vm98, %v3091
    %3094 = vst.msk [vmem:[#allocation11 + $0x8] sm:$0xff] %vm98, %v3092
    // Predicated region
    $region46: #{tpu_custom_call.1} parent=1 // pred_check
      _
    $region47: #{tpu_custom_call.1} parent=1 // pred_check_branch
      %3096 = sbr.rel (0) target = $region49
    $region48: #{tpu_custom_call.1} parent=1 // pred_region
      %s3098 = ssub.s32 256, 256
      %3099 = vsyncadd [#allocation5], %s3098
      %s3100 = sshll.u32 [#allocation11], 4
      %s3101 = int_to_ptr.vmem [resolvable:$true] %s3100
      %3106 = dma.vmem_to_hbm [thread:$0]  %s3101, 256, %s7, [#allocation5], 128, 128, 8
    $region49: #{tpu_custom_call.1} parent=1 // pred_fallthru
      _
    // Predicated region
    $region50: #{tpu_custom_call.1} parent=1 // pred_check
      _
    $region51: #{tpu_custom_call.1} parent=1 // pred_check_branch
      %3108 = sbr.rel (0) target = $region53
    $region52: #{tpu_custom_call.1} parent=1 // pred_region
      %s3110 = ssub.s32 2048, 2048
      %3111 = vsyncadd [#allocation13], %s3110
      %s3112 = sshll.u32 [#allocation12], 4
      %s3113 = int_to_ptr.vmem [resolvable:$true] %s3112
      %3118 = dma.vmem_to_hbm [thread:$0]  %s3113, 2048, %s8, [#allocation13], 128, 128, 8
    $region53: #{tpu_custom_call.1} parent=1 // pred_fallthru
      _
    // Predicated region
    $region54: #{tpu_custom_call.1} parent=1 // pred_check
      _
    $region55: #{tpu_custom_call.1} parent=1 // pred_check_branch
      %3120 = sbr.rel (0) target = $region57
    $region56: #{tpu_custom_call.1} parent=1 // pred_region
      %3121 = dma.done [#allocation5], 256
    $region57: #{tpu_custom_call.1} parent=1 // pred_fallthru
      _
    // Predicated region
    $region58: #{tpu_custom_call.1} parent=1 // pred_check
      _
    $region59: #{tpu_custom_call.1} parent=1 // pred_check_branch
      %3123 = sbr.rel (0) target = $region61
    $region60: #{tpu_custom_call.1} parent=1 // pred_region
      %3124 = dma.done [#allocation13], 2048
    $region61: #{tpu_custom_call.1} parent=1 // pred_fallthru
      _
    %3125 = vsyncpa [#allocation4], 1
    %3126 = vsyncpa [#allocation7], 1
    %3127 = vsyncpa [#allocation10], 1
    %3128 = vsyncpa [#allocation5], 1
    %3129 = vsyncpa [#allocation13], 1

</llo_original>
